<compile_context>
chip_gen: v7x
topology: tpu7x:2x2x1
jax: 0.10.0
libtpu: 0.0.40
codegen_flags: <defaults>
</compile_context>

<pallas_src>
import math

import jax
import jax.numpy as jnp
from jax.experimental import pallas as pl
from jax.experimental.pallas import tpu as pltpu

# ----------------------------- configuration --------------------------------
BATCH = 2
NUM_PATCHES = 8
PATCH_DIM = 16                     # scRNA = (BATCH, NUM_PATCHES * PATCH_DIM)
ENC_DIM = 32
ENC_DEPTH = 1
ENC_HEADS = 4
ENC_DIM_HEAD = 8
ENC_MLP = 64
DEC_DIM = 48
DEC_DEPTH = 1
DEC_HEADS = 4
DEC_DIM_HEAD = 16
DEC_MLP = DEC_DIM * 4
OUTPUT_SIZE = 24
LN_EPS = 1e-5


# --------------------------- in-kernel helpers -------------------------------
def _layernorm(x, g, b):
    mean = jnp.mean(x, axis=-1, keepdims=True)
    var = jnp.mean(jnp.square(x - mean), axis=-1, keepdims=True)
    return (x - mean) * jax.lax.rsqrt(var + LN_EPS) * g + b


def _gelu_tanh(y):
    # TODO(synk): nn.GELU default is exact erf-GELU; tanh approximation used
    # (erf lowering is not guaranteed in Mosaic).  ~1e-3 relative deviation.
    c = math.sqrt(2.0 / math.pi)
    return 0.5 * y * (1.0 + jnp.tanh(c * (y + 0.044715 * y * y * y)))


# ----------------------------- fused kernel ----------------------------------
def _make_fused_kernel(layout, batch, n_tok):
    """layout: {name: (row_offset, rows, cols)} static offsets into the slab."""

    def kernel(x_ref, w_ref, o_ref):
        def g(name):
            off, r, c = layout[name]
            return w_ref[off:off + r, 0:c]

        def layer(x, pre, heads, dim_head):
            inner = heads * dim_head
            scale = dim_head ** -0.5
            # ---- pre-norm multi-head self-attention (packed QKV) ----
            xn = _layernorm(x, g(pre + "ln1_g"), g(pre + "ln1_b"))
            qkv = jnp.dot(xn, g(pre + "wqkv"),
                          preferred_element_type=jnp.float32)      # (B*N, 3*inner)

            def heads_leading(base):
                # column block (B*N, inner) -> (H*B, N, Dh): heads stacked on
                # the leading batched-matmul axis (leading-dim concat + safe
                # leading-split reshape only).
                stacked = jnp.concatenate(
                    [qkv[:, base + h * dim_head: base + (h + 1) * dim_head]
                     for h in range(heads)], axis=0)               # (H*B*N, Dh)
                return stacked.reshape(heads * batch, n_tok, dim_head)

            q = heads_leading(0)
            k = heads_leading(inner)
            v = heads_leading(2 * inner)
            s = jnp.einsum("zqd,zkd->zqk", q, k,
                           preferred_element_type=jnp.float32) * scale
            s = s - jnp.max(s, axis=-1, keepdims=True)
            e = jnp.exp(s)
            p = e / jnp.sum(e, axis=-1, keepdims=True)             # ONE softmax
            o = jnp.einsum("zqk,zkd->zqd", p, v,
                           preferred_element_type=jnp.float32)     # (H*B, N, Dh)
            o2 = o.reshape(heads * batch * n_tok, dim_head)
            heads_out = jnp.concatenate(
                [o2[h * batch * n_tok:(h + 1) * batch * n_tok]
                 for h in range(heads)], axis=-1)                  # (B*N, inner)
            x = x + jnp.dot(heads_out, g(pre + "wo"),
                            preferred_element_type=jnp.float32) + g(pre + "bo")
            # ---- pre-norm feed-forward ----
            xn = _layernorm(x, g(pre + "ln2_g"), g(pre + "ln2_b"))
            h1 = _gelu_tanh(jnp.dot(xn, g(pre + "w1"),
                                    preferred_element_type=jnp.float32)
                            + g(pre + "b1"))
            return x + jnp.dot(h1, g(pre + "w2"),
                               preferred_element_type=jnp.float32) + g(pre + "b2")

        # patch_to_emb (Linear) + encoder.pos_embedding[:, 1:n+1] (pre-tiled)
        tok = (jnp.dot(x_ref[...], g("patch_w"),
                       preferred_element_type=jnp.float32)
               + g("patch_b") + g("enc_pos"))                      # (B*N, ENC_DIM)
        for li in range(ENC_DEPTH):
            tok = layer(tok, f"enc{li}_", ENC_HEADS, ENC_DIM_HEAD)
        tok = _layernorm(tok, g("enc_norm_g"), g("enc_norm_b"))
        # enc_to_dec + decoder_pos_emb(arange(num_patches)) (pre-tiled)
        dec = (jnp.dot(tok, g("e2d_w"), preferred_element_type=jnp.float32)
               + g("e2d_b") + g("dec_pos"))                        # (B*N, DEC_DIM)
        for li in range(DEC_DEPTH):
            dec = layer(dec, f"dec{li}_", DEC_HEADS, DEC_DIM_HEAD)
        dec = _layernorm(dec, g("dec_norm_g"), g("dec_norm_b"))
        # mean over tokens, then to_pixels
        pooled = jnp.mean(dec.reshape(batch, n_tok, DEC_DIM), axis=1)  # (B, DEC_DIM)
        o_ref[...] = (jnp.dot(pooled, g("pix_w"),
                              preferred_element_type=jnp.float32) + g("pix_b"))

    return kernel


# ------------------------------ parameters ------------------------------------
def _keygen(key):
    while True:
        key, sub = jax.random.split(key)
        yield sub


def make_transformer_params(kg, dim, depth, heads, dim_head, mlp_dim):
    inner = heads * dim_head
    layers = []
    for _ in range(depth):
        layers.append(dict(
            ln1_g=jnp.ones((1, dim), jnp.float32),
            ln1_b=jnp.zeros((1, dim), jnp.float32),
            # packed QKV: columns = [Q_h0..Q_h{H-1} | K... | V...]
            wqkv=0.02 * jax.random.normal(next(kg), (dim, 3 * inner), jnp.float32),
            wo=0.02 * jax.random.normal(next(kg), (inner, dim), jnp.float32),
            bo=jnp.zeros((1, dim), jnp.float32),
            ln2_g=jnp.ones((1, dim), jnp.float32),
            ln2_b=jnp.zeros((1, dim), jnp.float32),
            w1=0.02 * jax.random.normal(next(kg), (dim, mlp_dim), jnp.float32),
            b1=jnp.zeros((1, mlp_dim), jnp.float32),
            w2=0.02 * jax.random.normal(next(kg), (mlp_dim, dim), jnp.float32),
            b2=jnp.zeros((1, dim), jnp.float32),
        ))
    return dict(layers=layers,
                norm_g=jnp.ones((1, dim), jnp.float32),
                norm_b=jnp.zeros((1, dim), jnp.float32))


def make_params(key):
    kg = _keygen(key)
    return dict(
        # encoder.to_patch_embedding[1] assumed Linear(patch_dim, encoder_dim)
        patch_w=0.02 * jax.random.normal(next(kg), (PATCH_DIM, ENC_DIM), jnp.float32),
        patch_b=jnp.zeros((1, ENC_DIM), jnp.float32),
        enc_pos_emb=0.02 * jax.random.normal(
            next(kg), (1, NUM_PATCHES + 1, ENC_DIM), jnp.float32),
        enc_tf=make_transformer_params(kg, ENC_DIM, ENC_DEPTH, ENC_HEADS,
                                       ENC_DIM_HEAD, ENC_MLP),
        e2d_w=0.02 * jax.random.normal(next(kg), (ENC_DIM, DEC_DIM), jnp.float32),
        e2d_b=jnp.zeros((1, DEC_DIM), jnp.float32),
        # mask_token declared in NET.__init__ but unused in forward
        mask_token=jax.random.normal(next(kg), (DEC_DIM,), jnp.float32),
        dec_tf=make_transformer_params(kg, DEC_DIM, DEC_DEPTH, DEC_HEADS,
                                       DEC_DIM_HEAD, DEC_MLP),
        dec_pos_emb=0.02 * jax.random.normal(
            next(kg), (NUM_PATCHES, DEC_DIM), jnp.float32),
        pix_w=0.02 * jax.random.normal(next(kg), (DEC_DIM, OUTPUT_SIZE), jnp.float32),
        pix_b=jnp.zeros((1, OUTPUT_SIZE), jnp.float32),
    )


# -------------------------- parameter slab packing ----------------------------
def _flatten_entries(params, batch):
    n = NUM_PATCHES
    ents = [
        ("patch_w", params["patch_w"]),
        ("patch_b", params["patch_b"]),
        # pre-tile pos embeddings to (B*N, D) so the kernel does a plain add
        ("enc_pos", jnp.tile(params["enc_pos_emb"][0, 1:n + 1, :], (batch, 1))),
    ]
    for li, lp in enumerate(params["enc_tf"]["layers"]):
        ents += [(f"enc{li}_{k}", v) for k, v in lp.items()]
    ents += [("enc_norm_g", params["enc_tf"]["norm_g"]),
             ("enc_norm_b", params["enc_tf"]["norm_b"]),
             ("e2d_w", params["e2d_w"]),
             ("e2d_b", params["e2d_b"]),
             ("dec_pos", jnp.tile(params["dec_pos_emb"], (batch, 1)))]
    for li, lp in enumerate(params["dec_tf"]["layers"]):
        ents += [(f"dec{li}_{k}", v) for k, v in lp.items()]
    ents += [("dec_norm_g", params["dec_tf"]["norm_g"]),
             ("dec_norm_b", params["dec_tf"]["norm_b"]),
             ("pix_w", params["pix_w"]),
             ("pix_b", params["pix_b"])]
    return ents


def prepare_packed_params(params, batch):
    """Pack every parameter into one (rows, width) f32 slab; 8-row-aligned."""
    entries = _flatten_entries(params, batch)
    width = max(int(a.shape[1]) for _, a in entries)
    layout, off = {}, 0
    for name, a in entries:
        r, c = int(a.shape[0]), int(a.shape[1])
        layout[name] = (off, r, c)
        off += -(-r // 8) * 8                      # keep every start 8-aligned
    rows = max(off, 8)
    slab = jnp.zeros((rows, width), jnp.float32)
    for name, a in entries:
        o, r, c = layout[name]
        slab = slab.at[o:o + r, 0:c].set(a.astype(jnp.float32))
    return slab, layout


# ------------------------------ NET forward -----------------------------------
def build_net_forward(layout, batch):
    kernel = _make_fused_kernel(layout, batch, NUM_PATCHES)
    vmem = pl.BlockSpec(memory_space=pltpu.MemorySpace.VMEM)

    @jax.jit
    def net_forward(scRNA, slab):
        # Rearrange 'b (n p) -> b n p' flattened to (B*N, P) — host-side glue.
        x2d = scRNA.reshape(batch * NUM_PATCHES, PATCH_DIM)
        pred = pl.pallas_call(
            kernel,
            out_shape=jax.ShapeDtypeStruct((batch, OUTPUT_SIZE), jnp.float32),
            in_specs=[vmem, vmem],
            out_specs=vmem,
        )(x2d, slab)
        return pred[:, None, :]                    # repeat 'b d -> b 1 d'

    return net_forward


# --------------------------------- main ----------------------------------------
if __name__ == "__main__":
    key = jax.random.PRNGKey(0)
    k_in, k_par = jax.random.split(key)
    scRNA = jax.random.normal(k_in, (BATCH, NUM_PATCHES * PATCH_DIM), jnp.float32)
    params = make_params(k_par)

    slab, layout = prepare_packed_params(params, BATCH)   # one-time packing
    net_forward = build_net_forward(layout, BATCH)

    out = net_forward(scRNA, slab)
    out = jax.block_until_ready(out)
    assert out.shape == (BATCH, 1, OUTPUT_SIZE), out.shape
    assert out.dtype == jnp.float32
    print("KERNEL_OK")
</pallas_src>

<mosaic_0001>
module attributes {stable_mosaic.version = 11 : i64} {
  func.func @kernel(%arg0: memref<16x16xf32, #tpu.memory_space<vmem>>, %arg1: memref<808x192xf32, #tpu.memory_space<vmem>>, %arg2: memref<2x24xf32, #tpu.memory_space<vmem>>) attributes {dimension_semantics = [], scalar_prefetch = 0 : i64, scratch_operands = 0 : i64, tpu.core_type = #tpu.core_type<tc>} {
    %c0 = arith.constant 0 : index
    %c0_0 = arith.constant 0 : index
    %0 = vector.load %arg0[%c0, %c0_0] : memref<16x16xf32, #tpu.memory_space<vmem>>, vector<16x16xf32>
    %c0_1 = arith.constant 0 : index
    %c0_2 = arith.constant 0 : index
    %1 = vector.load %arg1[%c0_1, %c0_2] : memref<808x192xf32, #tpu.memory_space<vmem>>, vector<16x32xf32>
    %cst = arith.constant dense<0.000000e+00> : vector<16x32xf32>
    %2 = tpu.matmul %0, %1, %cst {dimension_numbers = #tpu.dot_dimension_numbers<[1], [0], [0], [1], [0, 0, 1, 1], [], []>} : vector<16x16xf32>, vector<16x32xf32>, vector<16x32xf32> -> vector<16x32xf32>
    %c16 = arith.constant 16 : index
    %c0_3 = arith.constant 0 : index
    %3 = vector.load %arg1[%c16, %c0_3] : memref<808x192xf32, #tpu.memory_space<vmem>>, vector<1x32xf32>
    %4 = vector.broadcast %3 : vector<1x32xf32> to vector<16x32xf32>
    %5 = arith.addf %2, %4 : vector<16x32xf32>
    %c24 = arith.constant 24 : index
    %c0_4 = arith.constant 0 : index
    %6 = vector.load %arg1[%c24, %c0_4] : memref<808x192xf32, #tpu.memory_space<vmem>>, vector<16x32xf32>
    %7 = arith.addf %5, %6 : vector<16x32xf32>
    %c40 = arith.constant 40 : index
    %c0_5 = arith.constant 0 : index
    %8 = vector.load %arg1[%c40, %c0_5] : memref<808x192xf32, #tpu.memory_space<vmem>>, vector<1x32xf32>
    %c48 = arith.constant 48 : index
    %c0_6 = arith.constant 0 : index
    %9 = vector.load %arg1[%c48, %c0_6] : memref<808x192xf32, #tpu.memory_space<vmem>>, vector<1x32xf32>
    %cst_7 = arith.constant dense<0.000000e+00> : vector<16xf32>
    %10 = vector.multi_reduction <add>, %7, %cst_7 [1] : vector<16x32xf32> to vector<16xf32>
    %11 = vector.shape_cast %10 : vector<16xf32> to vector<16x1xf32>
    %cst_8 = arith.constant 3.200000e+01 : f32
    %12 = vector.broadcast %cst_8 : f32 to vector<16x1xf32>
    %13 = arith.divf %11, %12 : vector<16x1xf32>
    %14 = vector.broadcast %13 : vector<16x1xf32> to vector<16x32xf32>
    %15 = arith.subf %7, %14 : vector<16x32xf32>
    %16 = arith.mulf %15, %15 : vector<16x32xf32>
    %cst_9 = arith.constant dense<0.000000e+00> : vector<16xf32>
    %17 = vector.multi_reduction <add>, %16, %cst_9 [1] : vector<16x32xf32> to vector<16xf32>
    %18 = vector.shape_cast %17 : vector<16xf32> to vector<16x1xf32>
    %cst_10 = arith.constant 3.200000e+01 : f32
    %19 = vector.broadcast %cst_10 : f32 to vector<16x1xf32>
    %20 = arith.divf %18, %19 : vector<16x1xf32>
    %21 = vector.broadcast %13 : vector<16x1xf32> to vector<16x32xf32>
    %22 = arith.subf %7, %21 : vector<16x32xf32>
    %cst_11 = arith.constant 9.99999974E-6 : f32
    %23 = vector.broadcast %cst_11 : f32 to vector<16x1xf32>
    %24 = arith.addf %20, %23 : vector<16x1xf32>
    %25 = math.rsqrt %24 : vector<16x1xf32>
    %26 = vector.broadcast %25 : vector<16x1xf32> to vector<16x32xf32>
    %27 = arith.mulf %22, %26 : vector<16x32xf32>
    %28 = vector.broadcast %8 : vector<1x32xf32> to vector<16x32xf32>
    %29 = arith.mulf %27, %28 : vector<16x32xf32>
    %30 = vector.broadcast %9 : vector<1x32xf32> to vector<16x32xf32>
    %31 = arith.addf %29, %30 : vector<16x32xf32>
    %c56 = arith.constant 56 : index
    %c0_12 = arith.constant 0 : index
    %32 = vector.load %arg1[%c56, %c0_12] : memref<808x192xf32, #tpu.memory_space<vmem>>, vector<32x96xf32>
    %cst_13 = arith.constant dense<0.000000e+00> : vector<16x96xf32>
    %33 = tpu.matmul %31, %32, %cst_13 {dimension_numbers = #tpu.dot_dimension_numbers<[1], [0], [0], [1], [0, 0, 1, 1], [], []>} : vector<16x32xf32>, vector<32x96xf32>, vector<16x96xf32> -> vector<16x96xf32>
    %34 = vector.extract_strided_slice %33 {offsets = [0, 0], sizes = [16, 8], strides = [1, 1]} : vector<16x96xf32> to vector<16x8xf32>
    %35 = vector.extract_strided_slice %33 {offsets = [0, 8], sizes = [16, 8], strides = [1, 1]} : vector<16x96xf32> to vector<16x8xf32>
    %36 = vector.extract_strided_slice %33 {offsets = [0, 16], sizes = [16, 8], strides = [1, 1]} : vector<16x96xf32> to vector<16x8xf32>
    %37 = vector.extract_strided_slice %33 {offsets = [0, 24], sizes = [16, 8], strides = [1, 1]} : vector<16x96xf32> to vector<16x8xf32>
    %38 = tpu.concatenate %34, %35, %36, %37 in 0 : vector<16x8xf32>, vector<16x8xf32>, vector<16x8xf32>, vector<16x8xf32> -> vector<64x8xf32>
    %39 = vector.shape_cast %38 : vector<64x8xf32> to vector<8x8x8xf32>
    %40 = vector.extract_strided_slice %33 {offsets = [0, 32], sizes = [16, 8], strides = [1, 1]} : vector<16x96xf32> to vector<16x8xf32>
    %41 = vector.extract_strided_slice %33 {offsets = [0, 40], sizes = [16, 8], strides = [1, 1]} : vector<16x96xf32> to vector<16x8xf32>
    %42 = vector.extract_strided_slice %33 {offsets = [0, 48], sizes = [16, 8], strides = [1, 1]} : vector<16x96xf32> to vector<16x8xf32>
    %43 = vector.extract_strided_slice %33 {offsets = [0, 56], sizes = [16, 8], strides = [1, 1]} : vector<16x96xf32> to vector<16x8xf32>
    %44 = tpu.concatenate %40, %41, %42, %43 in 0 : vector<16x8xf32>, vector<16x8xf32>, vector<16x8xf32>, vector<16x8xf32> -> vector<64x8xf32>
    %45 = vector.shape_cast %44 : vector<64x8xf32> to vector<8x8x8xf32>
    %46 = vector.extract_strided_slice %33 {offsets = [0, 64], sizes = [16, 8], strides = [1, 1]} : vector<16x96xf32> to vector<16x8xf32>
    %47 = vector.extract_strided_slice %33 {offsets = [0, 72], sizes = [16, 8], strides = [1, 1]} : vector<16x96xf32> to vector<16x8xf32>
    %48 = vector.extract_strided_slice %33 {offsets = [0, 80], sizes = [16, 8], strides = [1, 1]} : vector<16x96xf32> to vector<16x8xf32>
    %49 = vector.extract_strided_slice %33 {offsets = [0, 88], sizes = [16, 8], strides = [1, 1]} : vector<16x96xf32> to vector<16x8xf32>
    %50 = tpu.concatenate %46, %47, %48, %49 in 0 : vector<16x8xf32>, vector<16x8xf32>, vector<16x8xf32>, vector<16x8xf32> -> vector<64x8xf32>
    %51 = vector.shape_cast %50 : vector<64x8xf32> to vector<8x8x8xf32>
    "tpu.trace_start"() <{level = 10 : i32, message = "zqd,zkd->zqk"}> : () -> ()
    %cst_14 = arith.constant dense<0.000000e+00> : vector<8x8x8xf32>
    %52 = tpu.matmul %39, %45, %cst_14 {dimension_numbers = #tpu.dot_dimension_numbers<[2], [2], [1], [1], [0, 0, 0, 1, 1, 1], [0], [0]>} : vector<8x8x8xf32>, vector<8x8x8xf32>, vector<8x8x8xf32> -> vector<8x8x8xf32>
    "tpu.trace_stop"() : () -> ()
    %cst_15 = arith.constant 0.353553385 : f32
    %53 = vector.broadcast %cst_15 : f32 to vector<8x8x8xf32>
    %54 = arith.mulf %52, %53 : vector<8x8x8xf32>
    %cst_16 = arith.constant dense<0xFF800000> : vector<8x8xf32>
    %55 = vector.multi_reduction <maximumf>, %54, %cst_16 [2] : vector<8x8x8xf32> to vector<8x8xf32>
    %56 = vector.shape_cast %55 : vector<8x8xf32> to vector<8x8x1xf32>
    %57 = vector.broadcast %56 : vector<8x8x1xf32> to vector<8x8x8xf32>
    %58 = arith.subf %54, %57 : vector<8x8x8xf32>
    %59 = math.exp %58 : vector<8x8x8xf32>
    %cst_17 = arith.constant dense<0.000000e+00> : vector<8x8xf32>
    %60 = vector.multi_reduction <add>, %59, %cst_17 [2] : vector<8x8x8xf32> to vector<8x8xf32>
    %61 = vector.shape_cast %60 : vector<8x8xf32> to vector<8x8x1xf32>
    %62 = vector.broadcast %61 : vector<8x8x1xf32> to vector<8x8x8xf32>
    %63 = arith.divf %59, %62 : vector<8x8x8xf32>
    "tpu.trace_start"() <{level = 10 : i32, message = "zqk,zkd->zqd"}> : () -> ()
    %cst_18 = arith.constant dense<0.000000e+00> : vector<8x8x8xf32>
    %64 = tpu.matmul %63, %51, %cst_18 {dimension_numbers = #tpu.dot_dimension_numbers<[2], [1], [1], [2], [0, 0, 0, 1, 1, 2], [0], [0]>} : vector<8x8x8xf32>, vector<8x8x8xf32>, vector<8x8x8xf32> -> vector<8x8x8xf32>
    "tpu.trace_stop"() : () -> ()
    %65 = vector.shape_cast %64 : vector<8x8x8xf32> to vector<64x8xf32>
    %66 = vector.extract_strided_slice %65 {offsets = [0, 0], sizes = [16, 8], strides = [1, 1]} : vector<64x8xf32> to vector<16x8xf32>
    %67 = vector.extract_strided_slice %65 {offsets = [16, 0], sizes = [16, 8], strides = [1, 1]} : vector<64x8xf32> to vector<16x8xf32>
    %68 = vector.extract_strided_slice %65 {offsets = [32, 0], sizes = [16, 8], strides = [1, 1]} : vector<64x8xf32> to vector<16x8xf32>
    %69 = vector.extract_strided_slice %65 {offsets = [48, 0], sizes = [16, 8], strides = [1, 1]} : vector<64x8xf32> to vector<16x8xf32>
    %70 = tpu.concatenate %66, %67, %68, %69 in 1 : vector<16x8xf32>, vector<16x8xf32>, vector<16x8xf32>, vector<16x8xf32> -> vector<16x32xf32>
    %c88 = arith.constant 88 : index
    %c0_19 = arith.constant 0 : index
    %71 = vector.load %arg1[%c88, %c0_19] : memref<808x192xf32, #tpu.memory_space<vmem>>, vector<32x32xf32>
    %cst_20 = arith.constant dense<0.000000e+00> : vector<16x32xf32>
    %72 = tpu.matmul %70, %71, %cst_20 {dimension_numbers = #tpu.dot_dimension_numbers<[1], [0], [0], [1], [0, 0, 1, 1], [], []>} : vector<16x32xf32>, vector<32x32xf32>, vector<16x32xf32> -> vector<16x32xf32>
    %73 = arith.addf %7, %72 : vector<16x32xf32>
    %c120 = arith.constant 120 : index
    %c0_21 = arith.constant 0 : index
    %74 = vector.load %arg1[%c120, %c0_21] : memref<808x192xf32, #tpu.memory_space<vmem>>, vector<1x32xf32>
    %75 = vector.broadcast %74 : vector<1x32xf32> to vector<16x32xf32>
    %76 = arith.addf %73, %75 : vector<16x32xf32>
    %c128 = arith.constant 128 : index
    %c0_22 = arith.constant 0 : index
    %77 = vector.load %arg1[%c128, %c0_22] : memref<808x192xf32, #tpu.memory_space<vmem>>, vector<1x32xf32>
    %c136 = arith.constant 136 : index
    %c0_23 = arith.constant 0 : index
    %78 = vector.load %arg1[%c136, %c0_23] : memref<808x192xf32, #tpu.memory_space<vmem>>, vector<1x32xf32>
    %cst_24 = arith.constant dense<0.000000e+00> : vector<16xf32>
    %79 = vector.multi_reduction <add>, %76, %cst_24 [1] : vector<16x32xf32> to vector<16xf32>
    %80 = vector.shape_cast %79 : vector<16xf32> to vector<16x1xf32>
    %cst_25 = arith.constant 3.200000e+01 : f32
    %81 = vector.broadcast %cst_25 : f32 to vector<16x1xf32>
    %82 = arith.divf %80, %81 : vector<16x1xf32>
    %83 = vector.broadcast %82 : vector<16x1xf32> to vector<16x32xf32>
    %84 = arith.subf %76, %83 : vector<16x32xf32>
    %85 = arith.mulf %84, %84 : vector<16x32xf32>
    %cst_26 = arith.constant dense<0.000000e+00> : vector<16xf32>
    %86 = vector.multi_reduction <add>, %85, %cst_26 [1] : vector<16x32xf32> to vector<16xf32>
    %87 = vector.shape_cast %86 : vector<16xf32> to vector<16x1xf32>
    %cst_27 = arith.constant 3.200000e+01 : f32
    %88 = vector.broadcast %cst_27 : f32 to vector<16x1xf32>
    %89 = arith.divf %87, %88 : vector<16x1xf32>
    %90 = vector.broadcast %82 : vector<16x1xf32> to vector<16x32xf32>
    %91 = arith.subf %76, %90 : vector<16x32xf32>
    %cst_28 = arith.constant 9.99999974E-6 : f32
    %92 = vector.broadcast %cst_28 : f32 to vector<16x1xf32>
    %93 = arith.addf %89, %92 : vector<16x1xf32>
    %94 = math.rsqrt %93 : vector<16x1xf32>
    %95 = vector.broadcast %94 : vector<16x1xf32> to vector<16x32xf32>
    %96 = arith.mulf %91, %95 : vector<16x32xf32>
    %97 = vector.broadcast %77 : vector<1x32xf32> to vector<16x32xf32>
    %98 = arith.mulf %96, %97 : vector<16x32xf32>
    %99 = vector.broadcast %78 : vector<1x32xf32> to vector<16x32xf32>
    %100 = arith.addf %98, %99 : vector<16x32xf32>
    %c144 = arith.constant 144 : index
    %c0_29 = arith.constant 0 : index
    %101 = vector.load %arg1[%c144, %c0_29] : memref<808x192xf32, #tpu.memory_space<vmem>>, vector<32x64xf32>
    %cst_30 = arith.constant dense<0.000000e+00> : vector<16x64xf32>
    %102 = tpu.matmul %100, %101, %cst_30 {dimension_numbers = #tpu.dot_dimension_numbers<[1], [0], [0], [1], [0, 0, 1, 1], [], []>} : vector<16x32xf32>, vector<32x64xf32>, vector<16x64xf32> -> vector<16x64xf32>
    %c176 = arith.constant 176 : index
    %c0_31 = arith.constant 0 : index
    %103 = vector.load %arg1[%c176, %c0_31] : memref<808x192xf32, #tpu.memory_space<vmem>>, vector<1x64xf32>
    %104 = vector.broadcast %103 : vector<1x64xf32> to vector<16x64xf32>
    %105 = arith.addf %102, %104 : vector<16x64xf32>
    %cst_32 = arith.constant 5.000000e-01 : f32
    %106 = vector.broadcast %cst_32 : f32 to vector<16x64xf32>
    %107 = arith.mulf %106, %105 : vector<16x64xf32>
    %cst_33 = arith.constant 4.471500e-02 : f32
    %108 = vector.broadcast %cst_33 : f32 to vector<16x64xf32>
    %109 = arith.mulf %108, %105 : vector<16x64xf32>
    %110 = arith.mulf %109, %105 : vector<16x64xf32>
    %111 = arith.mulf %110, %105 : vector<16x64xf32>
    %112 = arith.addf %105, %111 : vector<16x64xf32>
    %cst_34 = arith.constant 0.797884583 : f32
    %113 = vector.broadcast %cst_34 : f32 to vector<16x64xf32>
    %114 = arith.mulf %113, %112 : vector<16x64xf32>
    %115 = math.tanh %114 : vector<16x64xf32>
    %cst_35 = arith.constant 1.000000e+00 : f32
    %116 = vector.broadcast %cst_35 : f32 to vector<16x64xf32>
    %117 = arith.addf %116, %115 : vector<16x64xf32>
    %118 = arith.mulf %107, %117 : vector<16x64xf32>
    %c184 = arith.constant 184 : index
    %c0_36 = arith.constant 0 : index
    %119 = vector.load %arg1[%c184, %c0_36] : memref<808x192xf32, #tpu.memory_space<vmem>>, vector<64x32xf32>
    %cst_37 = arith.constant dense<0.000000e+00> : vector<16x32xf32>
    %120 = tpu.matmul %118, %119, %cst_37 {dimension_numbers = #tpu.dot_dimension_numbers<[1], [0], [0], [1], [0, 0, 1, 1], [], []>} : vector<16x64xf32>, vector<64x32xf32>, vector<16x32xf32> -> vector<16x32xf32>
    %121 = arith.addf %76, %120 : vector<16x32xf32>
    %c248 = arith.constant 248 : index
    %c0_38 = arith.constant 0 : index
    %122 = vector.load %arg1[%c248, %c0_38] : memref<808x192xf32, #tpu.memory_space<vmem>>, vector<1x32xf32>
    %123 = vector.broadcast %122 : vector<1x32xf32> to vector<16x32xf32>
    %124 = arith.addf %121, %123 : vector<16x32xf32>
    %c256 = arith.constant 256 : index
    %c0_39 = arith.constant 0 : index
    %125 = vector.load %arg1[%c256, %c0_39] : memref<808x192xf32, #tpu.memory_space<vmem>>, vector<1x32xf32>
    %c264 = arith.constant 264 : index
    %c0_40 = arith.constant 0 : index
    %126 = vector.load %arg1[%c264, %c0_40] : memref<808x192xf32, #tpu.memory_space<vmem>>, vector<1x32xf32>
    %cst_41 = arith.constant dense<0.000000e+00> : vector<16xf32>
    %127 = vector.multi_reduction <add>, %124, %cst_41 [1] : vector<16x32xf32> to vector<16xf32>
    %128 = vector.shape_cast %127 : vector<16xf32> to vector<16x1xf32>
    %cst_42 = arith.constant 3.200000e+01 : f32
    %129 = vector.broadcast %cst_42 : f32 to vector<16x1xf32>
    %130 = arith.divf %128, %129 : vector<16x1xf32>
    %131 = vector.broadcast %130 : vector<16x1xf32> to vector<16x32xf32>
    %132 = arith.subf %124, %131 : vector<16x32xf32>
    %133 = arith.mulf %132, %132 : vector<16x32xf32>
    %cst_43 = arith.constant dense<0.000000e+00> : vector<16xf32>
    %134 = vector.multi_reduction <add>, %133, %cst_43 [1] : vector<16x32xf32> to vector<16xf32>
    %135 = vector.shape_cast %134 : vector<16xf32> to vector<16x1xf32>
    %cst_44 = arith.constant 3.200000e+01 : f32
    %136 = vector.broadcast %cst_44 : f32 to vector<16x1xf32>
    %137 = arith.divf %135, %136 : vector<16x1xf32>
    %138 = vector.broadcast %130 : vector<16x1xf32> to vector<16x32xf32>
    %139 = arith.subf %124, %138 : vector<16x32xf32>
    %cst_45 = arith.constant 9.99999974E-6 : f32
    %140 = vector.broadcast %cst_45 : f32 to vector<16x1xf32>
    %141 = arith.addf %137, %140 : vector<16x1xf32>
    %142 = math.rsqrt %141 : vector<16x1xf32>
    %143 = vector.broadcast %142 : vector<16x1xf32> to vector<16x32xf32>
    %144 = arith.mulf %139, %143 : vector<16x32xf32>
    %145 = vector.broadcast %125 : vector<1x32xf32> to vector<16x32xf32>
    %146 = arith.mulf %144, %145 : vector<16x32xf32>
    %147 = vector.broadcast %126 : vector<1x32xf32> to vector<16x32xf32>
    %148 = arith.addf %146, %147 : vector<16x32xf32>
    %c272 = arith.constant 272 : index
    %c0_46 = arith.constant 0 : index
    %149 = vector.load %arg1[%c272, %c0_46] : memref<808x192xf32, #tpu.memory_space<vmem>>, vector<32x48xf32>
    %cst_47 = arith.constant dense<0.000000e+00> : vector<16x48xf32>
    %150 = tpu.matmul %148, %149, %cst_47 {dimension_numbers = #tpu.dot_dimension_numbers<[1], [0], [0], [1], [0, 0, 1, 1], [], []>} : vector<16x32xf32>, vector<32x48xf32>, vector<16x48xf32> -> vector<16x48xf32>
    %c304 = arith.constant 304 : index
    %c0_48 = arith.constant 0 : index
    %151 = vector.load %arg1[%c304, %c0_48] : memref<808x192xf32, #tpu.memory_space<vmem>>, vector<1x48xf32>
    %152 = vector.broadcast %151 : vector<1x48xf32> to vector<16x48xf32>
    %153 = arith.addf %150, %152 : vector<16x48xf32>
    %c312 = arith.constant 312 : index
    %c0_49 = arith.constant 0 : index
    %154 = vector.load %arg1[%c312, %c0_49] : memref<808x192xf32, #tpu.memory_space<vmem>>, vector<16x48xf32>
    %155 = arith.addf %153, %154 : vector<16x48xf32>
    %c328 = arith.constant 328 : index
    %c0_50 = arith.constant 0 : index
    %156 = vector.load %arg1[%c328, %c0_50] : memref<808x192xf32, #tpu.memory_space<vmem>>, vector<1x48xf32>
    %c336 = arith.constant 336 : index
    %c0_51 = arith.constant 0 : index
    %157 = vector.load %arg1[%c336, %c0_51] : memref<808x192xf32, #tpu.memory_space<vmem>>, vector<1x48xf32>
    %cst_52 = arith.constant dense<0.000000e+00> : vector<16xf32>
    %158 = vector.multi_reduction <add>, %155, %cst_52 [1] : vector<16x48xf32> to vector<16xf32>
    %159 = vector.shape_cast %158 : vector<16xf32> to vector<16x1xf32>
    %cst_53 = arith.constant 4.800000e+01 : f32
    %160 = vector.broadcast %cst_53 : f32 to vector<16x1xf32>
    %161 = arith.divf %159, %160 : vector<16x1xf32>
    %162 = vector.broadcast %161 : vector<16x1xf32> to vector<16x48xf32>
    %163 = arith.subf %155, %162 : vector<16x48xf32>
    %164 = arith.mulf %163, %163 : vector<16x48xf32>
    %cst_54 = arith.constant dense<0.000000e+00> : vector<16xf32>
    %165 = vector.multi_reduction <add>, %164, %cst_54 [1] : vector<16x48xf32> to vector<16xf32>
    %166 = vector.shape_cast %165 : vector<16xf32> to vector<16x1xf32>
    %cst_55 = arith.constant 4.800000e+01 : f32
    %167 = vector.broadcast %cst_55 : f32 to vector<16x1xf32>
    %168 = arith.divf %166, %167 : vector<16x1xf32>
    %169 = vector.broadcast %161 : vector<16x1xf32> to vector<16x48xf32>
    %170 = arith.subf %155, %169 : vector<16x48xf32>
    %cst_56 = arith.constant 9.99999974E-6 : f32
    %171 = vector.broadcast %cst_56 : f32 to vector<16x1xf32>
    %172 = arith.addf %168, %171 : vector<16x1xf32>
    %173 = math.rsqrt %172 : vector<16x1xf32>
    %174 = vector.broadcast %173 : vector<16x1xf32> to vector<16x48xf32>
    %175 = arith.mulf %170, %174 : vector<16x48xf32>
    %176 = vector.broadcast %156 : vector<1x48xf32> to vector<16x48xf32>
    %177 = arith.mulf %175, %176 : vector<16x48xf32>
    %178 = vector.broadcast %157 : vector<1x48xf32> to vector<16x48xf32>
    %179 = arith.addf %177, %178 : vector<16x48xf32>
    %c344 = arith.constant 344 : index
    %c0_57 = arith.constant 0 : index
    %180 = vector.load %arg1[%c344, %c0_57] : memref<808x192xf32, #tpu.memory_space<vmem>>, vector<48x192xf32>
    %cst_58 = arith.constant dense<0.000000e+00> : vector<16x192xf32>
    %181 = tpu.matmul %179, %180, %cst_58 {dimension_numbers = #tpu.dot_dimension_numbers<[1], [0], [0], [1], [0, 0, 1, 1], [], []>} : vector<16x48xf32>, vector<48x192xf32>, vector<16x192xf32> -> vector<16x192xf32>
    %182 = vector.extract_strided_slice %181 {offsets = [0, 0], sizes = [16, 16], strides = [1, 1]} : vector<16x192xf32> to vector<16x16xf32>
    %183 = vector.extract_strided_slice %181 {offsets = [0, 16], sizes = [16, 16], strides = [1, 1]} : vector<16x192xf32> to vector<16x16xf32>
    %184 = vector.extract_strided_slice %181 {offsets = [0, 32], sizes = [16, 16], strides = [1, 1]} : vector<16x192xf32> to vector<16x16xf32>
    %185 = vector.extract_strided_slice %181 {offsets = [0, 48], sizes = [16, 16], strides = [1, 1]} : vector<16x192xf32> to vector<16x16xf32>
    %186 = tpu.concatenate %182, %183, %184, %185 in 0 : vector<16x16xf32>, vector<16x16xf32>, vector<16x16xf32>, vector<16x16xf32> -> vector<64x16xf32>
    %187 = vector.shape_cast %186 : vector<64x16xf32> to vector<8x8x16xf32>
    %188 = vector.extract_strided_slice %181 {offsets = [0, 64], sizes = [16, 16], strides = [1, 1]} : vector<16x192xf32> to vector<16x16xf32>
    %189 = vector.extract_strided_slice %181 {offsets = [0, 80], sizes = [16, 16], strides = [1, 1]} : vector<16x192xf32> to vector<16x16xf32>
    %190 = vector.extract_strided_slice %181 {offsets = [0, 96], sizes = [16, 16], strides = [1, 1]} : vector<16x192xf32> to vector<16x16xf32>
    %191 = vector.extract_strided_slice %181 {offsets = [0, 112], sizes = [16, 16], strides = [1, 1]} : vector<16x192xf32> to vector<16x16xf32>
    %192 = tpu.concatenate %188, %189, %190, %191 in 0 : vector<16x16xf32>, vector<16x16xf32>, vector<16x16xf32>, vector<16x16xf32> -> vector<64x16xf32>
    %193 = vector.shape_cast %192 : vector<64x16xf32> to vector<8x8x16xf32>
    %194 = vector.extract_strided_slice %181 {offsets = [0, 128], sizes = [16, 16], strides = [1, 1]} : vector<16x192xf32> to vector<16x16xf32>
    %195 = vector.extract_strided_slice %181 {offsets = [0, 144], sizes = [16, 16], strides = [1, 1]} : vector<16x192xf32> to vector<16x16xf32>
    %196 = vector.extract_strided_slice %181 {offsets = [0, 160], sizes = [16, 16], strides = [1, 1]} : vector<16x192xf32> to vector<16x16xf32>
    %197 = vector.extract_strided_slice %181 {offsets = [0, 176], sizes = [16, 16], strides = [1, 1]} : vector<16x192xf32> to vector<16x16xf32>
    %198 = tpu.concatenate %194, %195, %196, %197 in 0 : vector<16x16xf32>, vector<16x16xf32>, vector<16x16xf32>, vector<16x16xf32> -> vector<64x16xf32>
    %199 = vector.shape_cast %198 : vector<64x16xf32> to vector<8x8x16xf32>
    "tpu.trace_start"() <{level = 10 : i32, message = "zqd,zkd->zqk"}> : () -> ()
    %cst_59 = arith.constant dense<0.000000e+00> : vector<8x8x8xf32>
    %200 = tpu.matmul %187, %193, %cst_59 {dimension_numbers = #tpu.dot_dimension_numbers<[2], [2], [1], [1], [0, 0, 0, 1, 1, 1], [0], [0]>} : vector<8x8x16xf32>, vector<8x8x16xf32>, vector<8x8x8xf32> -> vector<8x8x8xf32>
    "tpu.trace_stop"() : () -> ()
    %cst_60 = arith.constant 2.500000e-01 : f32
    %201 = vector.broadcast %cst_60 : f32 to vector<8x8x8xf32>
    %202 = arith.mulf %200, %201 : vector<8x8x8xf32>
    %cst_61 = arith.constant dense<0xFF800000> : vector<8x8xf32>
    %203 = vector.multi_reduction <maximumf>, %202, %cst_61 [2] : vector<8x8x8xf32> to vector<8x8xf32>
    %204 = vector.shape_cast %203 : vector<8x8xf32> to vector<8x8x1xf32>
    %205 = vector.broadcast %204 : vector<8x8x1xf32> to vector<8x8x8xf32>
    %206 = arith.subf %202, %205 : vector<8x8x8xf32>
    %207 = math.exp %206 : vector<8x8x8xf32>
    %cst_62 = arith.constant dense<0.000000e+00> : vector<8x8xf32>
    %208 = vector.multi_reduction <add>, %207, %cst_62 [2] : vector<8x8x8xf32> to vector<8x8xf32>
    %209 = vector.shape_cast %208 : vector<8x8xf32> to vector<8x8x1xf32>
    %210 = vector.broadcast %209 : vector<8x8x1xf32> to vector<8x8x8xf32>
    %211 = arith.divf %207, %210 : vector<8x8x8xf32>
    "tpu.trace_start"() <{level = 10 : i32, message = "zqk,zkd->zqd"}> : () -> ()
    %cst_63 = arith.constant dense<0.000000e+00> : vector<8x8x16xf32>
    %212 = tpu.matmul %211, %199, %cst_63 {dimension_numbers = #tpu.dot_dimension_numbers<[2], [1], [1], [2], [0, 0, 0, 1, 1, 2], [0], [0]>} : vector<8x8x8xf32>, vector<8x8x16xf32>, vector<8x8x16xf32> -> vector<8x8x16xf32>
    "tpu.trace_stop"() : () -> ()
    %213 = vector.shape_cast %212 : vector<8x8x16xf32> to vector<64x16xf32>
    %214 = vector.extract_strided_slice %213 {offsets = [0, 0], sizes = [16, 16], strides = [1, 1]} : vector<64x16xf32> to vector<16x16xf32>
    %215 = vector.extract_strided_slice %213 {offsets = [16, 0], sizes = [16, 16], strides = [1, 1]} : vector<64x16xf32> to vector<16x16xf32>
    %216 = vector.extract_strided_slice %213 {offsets = [32, 0], sizes = [16, 16], strides = [1, 1]} : vector<64x16xf32> to vector<16x16xf32>
    %217 = vector.extract_strided_slice %213 {offsets = [48, 0], sizes = [16, 16], strides = [1, 1]} : vector<64x16xf32> to vector<16x16xf32>
    %218 = tpu.concatenate %214, %215, %216, %217 in 1 : vector<16x16xf32>, vector<16x16xf32>, vector<16x16xf32>, vector<16x16xf32> -> vector<16x64xf32>
    %c392 = arith.constant 392 : index
    %c0_64 = arith.constant 0 : index
    %219 = vector.load %arg1[%c392, %c0_64] : memref<808x192xf32, #tpu.memory_space<vmem>>, vector<64x48xf32>
    %cst_65 = arith.constant dense<0.000000e+00> : vector<16x48xf32>
    %220 = tpu.matmul %218, %219, %cst_65 {dimension_numbers = #tpu.dot_dimension_numbers<[1], [0], [0], [1], [0, 0, 1, 1], [], []>} : vector<16x64xf32>, vector<64x48xf32>, vector<16x48xf32> -> vector<16x48xf32>
    %221 = arith.addf %155, %220 : vector<16x48xf32>
    %c456 = arith.constant 456 : index
    %c0_66 = arith.constant 0 : index
    %222 = vector.load %arg1[%c456, %c0_66] : memref<808x192xf32, #tpu.memory_space<vmem>>, vector<1x48xf32>
    %223 = vector.broadcast %222 : vector<1x48xf32> to vector<16x48xf32>
    %224 = arith.addf %221, %223 : vector<16x48xf32>
    %c464 = arith.constant 464 : index
    %c0_67 = arith.constant 0 : index
    %225 = vector.load %arg1[%c464, %c0_67] : memref<808x192xf32, #tpu.memory_space<vmem>>, vector<1x48xf32>
    %c472 = arith.constant 472 : index
    %c0_68 = arith.constant 0 : index
    %226 = vector.load %arg1[%c472, %c0_68] : memref<808x192xf32, #tpu.memory_space<vmem>>, vector<1x48xf32>
    %cst_69 = arith.constant dense<0.000000e+00> : vector<16xf32>
    %227 = vector.multi_reduction <add>, %224, %cst_69 [1] : vector<16x48xf32> to vector<16xf32>
    %228 = vector.shape_cast %227 : vector<16xf32> to vector<16x1xf32>
    %cst_70 = arith.constant 4.800000e+01 : f32
    %229 = vector.broadcast %cst_70 : f32 to vector<16x1xf32>
    %230 = arith.divf %228, %229 : vector<16x1xf32>
    %231 = vector.broadcast %230 : vector<16x1xf32> to vector<16x48xf32>
    %232 = arith.subf %224, %231 : vector<16x48xf32>
    %233 = arith.mulf %232, %232 : vector<16x48xf32>
    %cst_71 = arith.constant dense<0.000000e+00> : vector<16xf32>
    %234 = vector.multi_reduction <add>, %233, %cst_71 [1] : vector<16x48xf32> to vector<16xf32>
    %235 = vector.shape_cast %234 : vector<16xf32> to vector<16x1xf32>
    %cst_72 = arith.constant 4.800000e+01 : f32
    %236 = vector.broadcast %cst_72 : f32 to vector<16x1xf32>
    %237 = arith.divf %235, %236 : vector<16x1xf32>
    %238 = vector.broadcast %230 : vector<16x1xf32> to vector<16x48xf32>
    %239 = arith.subf %224, %238 : vector<16x48xf32>
    %cst_73 = arith.constant 9.99999974E-6 : f32
    %240 = vector.broadcast %cst_73 : f32 to vector<16x1xf32>
    %241 = arith.addf %237, %240 : vector<16x1xf32>
    %242 = math.rsqrt %241 : vector<16x1xf32>
    %243 = vector.broadcast %242 : vector<16x1xf32> to vector<16x48xf32>
    %244 = arith.mulf %239, %243 : vector<16x48xf32>
    %245 = vector.broadcast %225 : vector<1x48xf32> to vector<16x48xf32>
    %246 = arith.mulf %244, %245 : vector<16x48xf32>
    %247 = vector.broadcast %226 : vector<1x48xf32> to vector<16x48xf32>
    %248 = arith.addf %246, %247 : vector<16x48xf32>
    %c480 = arith.constant 480 : index
    %c0_74 = arith.constant 0 : index
    %249 = vector.load %arg1[%c480, %c0_74] : memref<808x192xf32, #tpu.memory_space<vmem>>, vector<48x192xf32>
    %cst_75 = arith.constant dense<0.000000e+00> : vector<16x192xf32>
    %250 = tpu.matmul %248, %249, %cst_75 {dimension_numbers = #tpu.dot_dimension_numbers<[1], [0], [0], [1], [0, 0, 1, 1], [], []>} : vector<16x48xf32>, vector<48x192xf32>, vector<16x192xf32> -> vector<16x192xf32>
    %c528 = arith.constant 528 : index
    %c0_76 = arith.constant 0 : index
    %251 = vector.load %arg1[%c528, %c0_76] : memref<808x192xf32, #tpu.memory_space<vmem>>, vector<1x192xf32>
    %252 = vector.broadcast %251 : vector<1x192xf32> to vector<16x192xf32>
    %253 = arith.addf %250, %252 : vector<16x192xf32>
    %cst_77 = arith.constant 5.000000e-01 : f32
    %254 = vector.broadcast %cst_77 : f32 to vector<16x192xf32>
    %255 = arith.mulf %254, %253 : vector<16x192xf32>
    %cst_78 = arith.constant 4.471500e-02 : f32
    %256 = vector.broadcast %cst_78 : f32 to vector<16x192xf32>
    %257 = arith.mulf %256, %253 : vector<16x192xf32>
    %258 = arith.mulf %257, %253 : vector<16x192xf32>
    %259 = arith.mulf %258, %253 : vector<16x192xf32>
    %260 = arith.addf %253, %259 : vector<16x192xf32>
    %cst_79 = arith.constant 0.797884583 : f32
    %261 = vector.broadcast %cst_79 : f32 to vector<16x192xf32>
    %262 = arith.mulf %261, %260 : vector<16x192xf32>
    %263 = math.tanh %262 : vector<16x192xf32>
    %cst_80 = arith.constant 1.000000e+00 : f32
    %264 = vector.broadcast %cst_80 : f32 to vector<16x192xf32>
    %265 = arith.addf %264, %263 : vector<16x192xf32>
    %266 = arith.mulf %255, %265 : vector<16x192xf32>
    %c536 = arith.constant 536 : index
    %c0_81 = arith.constant 0 : index
    %267 = vector.load %arg1[%c536, %c0_81] : memref<808x192xf32, #tpu.memory_space<vmem>>, vector<192x48xf32>
    %cst_82 = arith.constant dense<0.000000e+00> : vector<16x48xf32>
    %268 = tpu.matmul %266, %267, %cst_82 {dimension_numbers = #tpu.dot_dimension_numbers<[1], [0], [0], [1], [0, 0, 1, 1], [], []>} : vector<16x192xf32>, vector<192x48xf32>, vector<16x48xf32> -> vector<16x48xf32>
    %269 = arith.addf %224, %268 : vector<16x48xf32>
    %c728 = arith.constant 728 : index
    %c0_83 = arith.constant 0 : index
    %270 = vector.load %arg1[%c728, %c0_83] : memref<808x192xf32, #tpu.memory_space<vmem>>, vector<1x48xf32>
    %271 = vector.broadcast %270 : vector<1x48xf32> to vector<16x48xf32>
    %272 = arith.addf %269, %271 : vector<16x48xf32>
    %c736 = arith.constant 736 : index
    %c0_84 = arith.constant 0 : index
    %273 = vector.load %arg1[%c736, %c0_84] : memref<808x192xf32, #tpu.memory_space<vmem>>, vector<1x48xf32>
    %c744 = arith.constant 744 : index
    %c0_85 = arith.constant 0 : index
    %274 = vector.load %arg1[%c744, %c0_85] : memref<808x192xf32, #tpu.memory_space<vmem>>, vector<1x48xf32>
    %cst_86 = arith.constant dense<0.000000e+00> : vector<16xf32>
    %275 = vector.multi_reduction <add>, %272, %cst_86 [1] : vector<16x48xf32> to vector<16xf32>
    %276 = vector.shape_cast %275 : vector<16xf32> to vector<16x1xf32>
    %cst_87 = arith.constant 4.800000e+01 : f32
    %277 = vector.broadcast %cst_87 : f32 to vector<16x1xf32>
    %278 = arith.divf %276, %277 : vector<16x1xf32>
    %279 = vector.broadcast %278 : vector<16x1xf32> to vector<16x48xf32>
    %280 = arith.subf %272, %279 : vector<16x48xf32>
    %281 = arith.mulf %280, %280 : vector<16x48xf32>
    %cst_88 = arith.constant dense<0.000000e+00> : vector<16xf32>
    %282 = vector.multi_reduction <add>, %281, %cst_88 [1] : vector<16x48xf32> to vector<16xf32>
    %283 = vector.shape_cast %282 : vector<16xf32> to vector<16x1xf32>
    %cst_89 = arith.constant 4.800000e+01 : f32
    %284 = vector.broadcast %cst_89 : f32 to vector<16x1xf32>
    %285 = arith.divf %283, %284 : vector<16x1xf32>
    %286 = vector.broadcast %278 : vector<16x1xf32> to vector<16x48xf32>
    %287 = arith.subf %272, %286 : vector<16x48xf32>
    %cst_90 = arith.constant 9.99999974E-6 : f32
    %288 = vector.broadcast %cst_90 : f32 to vector<16x1xf32>
    %289 = arith.addf %285, %288 : vector<16x1xf32>
    %290 = math.rsqrt %289 : vector<16x1xf32>
    %291 = vector.broadcast %290 : vector<16x1xf32> to vector<16x48xf32>
    %292 = arith.mulf %287, %291 : vector<16x48xf32>
    %293 = vector.broadcast %273 : vector<1x48xf32> to vector<16x48xf32>
    %294 = arith.mulf %292, %293 : vector<16x48xf32>
    %295 = vector.broadcast %274 : vector<1x48xf32> to vector<16x48xf32>
    %296 = arith.addf %294, %295 : vector<16x48xf32>
    %297 = vector.shape_cast %296 : vector<16x48xf32> to vector<2x8x48xf32>
    %cst_91 = arith.constant dense<0.000000e+00> : vector<2x48xf32>
    %298 = vector.multi_reduction <add>, %297, %cst_91 [1] : vector<2x8x48xf32> to vector<2x48xf32>
    %cst_92 = arith.constant 8.000000e+00 : f32
    %299 = vector.broadcast %cst_92 : f32 to vector<2x48xf32>
    %300 = arith.divf %298, %299 : vector<2x48xf32>
    %c752 = arith.constant 752 : index
    %c0_93 = arith.constant 0 : index
    %301 = vector.load %arg1[%c752, %c0_93] : memref<808x192xf32, #tpu.memory_space<vmem>>, vector<48x24xf32>
    %cst_94 = arith.constant dense<0.000000e+00> : vector<2x24xf32>
    %302 = tpu.matmul %300, %301, %cst_94 {dimension_numbers = #tpu.dot_dimension_numbers<[1], [0], [0], [1], [0, 0, 1, 1], [], []>} : vector<2x48xf32>, vector<48x24xf32>, vector<2x24xf32> -> vector<2x24xf32>
    %c800 = arith.constant 800 : index
    %c0_95 = arith.constant 0 : index
    %303 = vector.load %arg1[%c800, %c0_95] : memref<808x192xf32, #tpu.memory_space<vmem>>, vector<1x24xf32>
    %304 = vector.broadcast %303 : vector<1x24xf32> to vector<2x24xf32>
    %305 = arith.addf %302, %304 : vector<2x24xf32>
    %c0_96 = arith.constant 0 : index
    %c0_97 = arith.constant 0 : index
    %306 = vector.load %arg2[%c0_96, %c0_97] : memref<2x24xf32, #tpu.memory_space<vmem>>, vector<2x24xf32>
    tpu.vector_store %arg2[%c0_96, %c0_97], %305 {strides = array<i32>} : memref<2x24xf32, #tpu.memory_space<vmem>>, vector<2x24xf32>,
    return
  }
}

</mosaic_0001>

<llo_original>
// kernel: net_forward.1
$region0: #{net_forward.1}
  #allocation0 [shape = 'u32[]', space=smem, size = 0x4, offset = 0x4, fixed_abs, tag = 'smem constant byte address 0x4 - core index']
  #allocation1 [shape = 'u32[144,128]{1,0:T(1,128)}', space=vmem, size = 0x12000, scoped, tag = 'internal scratch']
  %s0 = inlined_call_operand.vmem [shape: f32[16,16], index: 0, kind: input, shape index: {}]
  %s1 = inlined_call_operand.vmem [shape: f32[808,192], index: 1, kind: input, shape index: {}]
  %s2 = inlined_call_operand.hbm [shape: f32[2,24], index: 2, kind: output, shape index: {}]
  %s3 = sld [smem:[#allocation0]]
  $region18: #{net_forward.1} parent=0
    _
  %s5 = ssub.s32 1, %s3
  %s6 = scalar_select 0, %s5, %s3
  $region1: #{net_forward.1} parent=0
    #allocation2 [shape = 'u8[1024]{0}', space=vmem, size = 0x400, scoped, tag = 'output window, operand 0, single buffered']
    #allocation3 [shape = 's32[1]{0}', space=sflag, size = 0x4, scoped, tag = 'scoped memory for net_forward.1']
    %7 = vsyncpa [#allocation3], 0
    // Predicated region
    $region2: #{net_forward.1} parent=1 // pred_check
      _
    $region3: #{net_forward.1} parent=1 // pred_check_branch
      %9 = sbr.rel (0) target = $region5
    $region4: #{net_forward.1} parent=1 // pred_region
      _
    $region5: #{net_forward.1} parent=1 // pred_fallthru
      _
    // Predicated region
    $region6: #{net_forward.1} parent=1 // pred_check
      _
    $region7: #{net_forward.1} parent=1 // pred_check_branch
      %11 = sbr.rel (0) target = $region9
    $region8: #{net_forward.1} parent=1 // pred_region
      _
    $region9: #{net_forward.1} parent=1 // pred_fallthru
      _
    %v12 = vld [vmem:[%s0] sm:$0xff]
    %v13 = vld [vmem:[%s0 + $0x8] sm:$0xff]
    %v14 = vld [vmem:[%s1] sm:$0xff]
    %v15 = vld [vmem:[%s1 + $0x10] sm:$0xff]
    %v16 = vld [vmem:[%s1 + $0x20] ss:$0 sm:$0xff]
    %vm17 = vcmask 130048
    %v19 = vsel %vm17, %v12, 0
    %v22 = vsel %vm17, %v13, 0
    %24 = vmatprep.subr.mxu0 0.0
    %25 = vmatpush1.msra.mxu0 %v14
    %26 = vmatprep.subr.mxu0 0.0
    %27 = vmatpush1.msra.mxu0 %v15
    %28 = vmatprep.subr.mxu0 0.0
    %29 = vmatpush1.msra.mxu0 0.0
    %30 = vmatprep.subr.mxu0 0.0
    %31 = vmatpush1.msra.mxu0 0.0
    %32 = vmatprep.subr.mxu0 0.0
    %33 = vmatpush1.msra.mxu0 0.0
    %34 = vmatprep.subr.mxu0 0.0
    %35 = vmatpush1.msra.mxu0 0.0
    %36 = vmatprep.subr.mxu0 0.0
    %37 = vmatpush1.msra.mxu0 0.0
    %38 = vmatprep.subr.mxu0 0.0
    %39 = vmatpush1.msra.mxu0 0.0
    %40 = vmatprep.subr.mxu0 0.0
    %41 = vmatpush1.msra.mxu0 0.0
    %42 = vmatprep.subr.mxu0 0.0
    %43 = vmatpush1.msra.mxu0 0.0
    %44 = vmatprep.subr.mxu0 0.0
    %45 = vmatpush1.msra.mxu0 0.0
    %46 = vmatprep.subr.mxu0 0.0
    %47 = vmatpush1.msra.mxu0 0.0
    %48 = vmatprep.subr.mxu0 0.0
    %49 = vmatpush1.msra.mxu0 0.0
    %50 = vmatprep.subr.mxu0 0.0
    %51 = vmatpush1.msra.mxu0 0.0
    %52 = vmatprep.subr.mxu0 0.0
    %53 = vmatpush1.msra.mxu0 0.0
    %54 = vmatprep.subr.mxu0 0.0
    %55 = vmatpush1.msra.mxu0 0.0
    %56 = vmatprep.subr.mxu0 0.0
    %57 = vmatpush1.msra.mxu0 0.0
    %58 = vmatprep.subr.mxu0 0.0
    %59 = vmatpush1.msra.mxu0 0.0
    %60 = vmatprep.subr.mxu0 0.0
    %61 = vmatpush1.msra.mxu0 0.0
    %62 = vmatprep.subr.mxu0 0.0
    %63 = vmatpush1.msra.mxu0 0.0
    %64 = vmatprep.subr.mxu0 0.0
    %65 = vmatpush1.msra.mxu0 0.0
    %66 = vmatprep.subr.mxu0 0.0
    %67 = vmatpush1.msra.mxu0 0.0
    %68 = vmatprep.subr.mxu0 0.0
    %69 = vmatpush1.msra.mxu0 0.0
    %70 = vmatprep.subr.mxu0 0.0
    %71 = vmatpush1.msra.mxu0 0.0
    %72 = vmatprep.subr.mxu0 0.0
    %73 = vmatpush1.msra.mxu0 0.0
    %74 = vmatprep.subr.mxu0 0.0
    %75 = vmatpush1.msra.mxu0 0.0
    %76 = vmatprep.subr.mxu0 0.0
    %77 = vmatpush1.msra.mxu0 0.0
    %78 = vmatprep.subr.mxu0 0.0
    %79 = vmatpush1.msra.mxu0 0.0
    %80 = vmatprep.subr.mxu0 0.0
    %81 = vmatpush1.msra.mxu0 0.0
    %82 = vmatprep.subr.mxu0 0.0
    %83 = vmatpush1.msra.mxu0 0.0
    %84 = vmatprep.subr.mxu0 0.0
    %85 = vmatpush1.msra.mxu0 0.0
    %86 = vmatprep.subr.mxu0 0.0
    %87 = vmatpush1.msra.mxu0 0.0
    %88 = vmatprep.mubr.f32.mxu0 0.0
    %89 = vmatmul.mubr.f32.gmra.mrb[0].mxu0 %v19
    %v90 = vpop.f32.mrb[0].mxu0
    %v91 = vadd.f32 %v16, %v90
    %v92 = vpop.f32.mrb[0].mxu0
    %93 = vmatprep.mubr.f32.mxu0 0.0
    %94 = vmatmul.mubr.f32.gmra.mrb[0].mxu0 %v22
    %v95 = vpop.f32.mrb[0].mxu0
    %v96 = vadd.f32 %v16, %v95
    %v97 = vpop.f32.mrb[0].mxu0
    %98 = vdwg.mxu0
    %v99 = vld [vmem:[%s1 + $0x30] sm:$0xff]
    %v100 = vld [vmem:[%s1 + $0x40] sm:$0xff]
    %v101 = vadd.f32 %v91, %v99
    %v102 = vadd.f32 %v96, %v100
    %v103 = vld [vmem:[%s1 + $0x50] ss:$0 sm:$0xff]
    %v104 = vld [vmem:[%s1 + $0x60] ss:$0 sm:$0xff]
    %vm105 = vcmask 261120
    %v106 = vsel %vm105, %v101, 0.0
    %107 = vadd.xlane.f32.xlu0 %v106
    %v108 = vpop.xlane.xlu0 %107
    %v109 = vsel %vm105, %v102, 0.0
    %110 = vadd.xlane.f32.xlu0 %v109
    %v111 = vpop.xlane.xlu0 %110
    %v112 = vrcp.pop 32.0
    %v113 = vmul.f32 %v108, %v112
    %v114 = vmul.f32 %v111, %v112
    %v115 = vsub.f32 %v101, %v113
    %v116 = vsub.f32 %v102, %v114
    %v117 = vmul.f32 %v115, %v115
    %v118 = vmul.f32 %v116, %v116
    %v119 = vsel %vm105, %v117, 0.0
    %120 = vadd.xlane.f32.xlu0 %v119
    %v121 = vpop.xlane.xlu0 %120
    %v122 = vsel %vm105, %v118, 0.0
    %123 = vadd.xlane.f32.xlu0 %v122
    %v124 = vpop.xlane.xlu0 %123
    %v125 = vmul.f32 %v121, %v112
    %v126 = vmul.f32 %v124, %v112
    %v127 = vadd.f32 %v125, 1e-05
    %v128 = vadd.f32 %v126, 1e-05
    %v129 = vrsqrt.pop %v127
    %v130 = vrsqrt.pop %v128
    %v131 = vmul.f32 %v115, %v129
    %v132 = vmul.f32 %v116, %v130
    %v133 = vmul.f32 %v131, %v103
    %v134 = vmul.f32 %v132, %v103
    %v135 = vadd.f32 %v133, %v104
    %v136 = vadd.f32 %v134, %v104
    %v137 = vld [vmem:[%s1 + $0x70] sm:$0xff]
    %v138 = vld [vmem:[%s1 + $0x80] sm:$0xff]
    %v139 = vld [vmem:[%s1 + $0x90] sm:$0xff]
    %v140 = vld [vmem:[%s1 + $0xa0] sm:$0xff]
    %v142 = vsel %vm105, %v135, 0
    %v145 = vsel %vm105, %v136, 0
    %147 = vmatprep.subr.mxu0 0.0
    %148 = vmatpush1.msra.mxu0 %v137
    %149 = vmatprep.subr.mxu0 0.0
    %150 = vmatpush1.msra.mxu0 %v138
    %151 = vmatprep.subr.mxu0 0.0
    %152 = vmatpush1.msra.mxu0 %v139
    %153 = vmatprep.subr.mxu0 0.0
    %154 = vmatpush1.msra.mxu0 %v140
    %155 = vmatprep.subr.mxu0 0.0
    %156 = vmatpush1.msra.mxu0 0.0
    %157 = vmatprep.subr.mxu0 0.0
    %158 = vmatpush1.msra.mxu0 0.0
    %159 = vmatprep.subr.mxu0 0.0
    %160 = vmatpush1.msra.mxu0 0.0
    %161 = vmatprep.subr.mxu0 0.0
    %162 = vmatpush1.msra.mxu0 0.0
    %163 = vmatprep.subr.mxu0 0.0
    %164 = vmatpush1.msra.mxu0 0.0
    %165 = vmatprep.subr.mxu0 0.0
    %166 = vmatpush1.msra.mxu0 0.0
    %167 = vmatprep.subr.mxu0 0.0
    %168 = vmatpush1.msra.mxu0 0.0
    %169 = vmatprep.subr.mxu0 0.0
    %170 = vmatpush1.msra.mxu0 0.0
    %171 = vmatprep.subr.mxu0 0.0
    %172 = vmatpush1.msra.mxu0 0.0
    %173 = vmatprep.subr.mxu0 0.0
    %174 = vmatpush1.msra.mxu0 0.0
    %175 = vmatprep.subr.mxu0 0.0
    %176 = vmatpush1.msra.mxu0 0.0
    %177 = vmatprep.subr.mxu0 0.0
    %178 = vmatpush1.msra.mxu0 0.0
    %179 = vmatprep.subr.mxu0 0.0
    %180 = vmatpush1.msra.mxu0 0.0
    %181 = vmatprep.subr.mxu0 0.0
    %182 = vmatpush1.msra.mxu0 0.0
    %183 = vmatprep.subr.mxu0 0.0
    %184 = vmatpush1.msra.mxu0 0.0
    %185 = vmatprep.subr.mxu0 0.0
    %186 = vmatpush1.msra.mxu0 0.0
    %187 = vmatprep.subr.mxu0 0.0
    %188 = vmatpush1.msra.mxu0 0.0
    %189 = vmatprep.subr.mxu0 0.0
    %190 = vmatpush1.msra.mxu0 0.0
    %191 = vmatprep.subr.mxu0 0.0
    %192 = vmatpush1.msra.mxu0 0.0
    %193 = vmatprep.subr.mxu0 0.0
    %194 = vmatpush1.msra.mxu0 0.0
    %195 = vmatprep.subr.mxu0 0.0
    %196 = vmatpush1.msra.mxu0 0.0
    %197 = vmatprep.subr.mxu0 0.0
    %198 = vmatpush1.msra.mxu0 0.0
    %199 = vmatprep.subr.mxu0 0.0
    %200 = vmatpush1.msra.mxu0 0.0
    %201 = vmatprep.subr.mxu0 0.0
    %202 = vmatpush1.msra.mxu0 0.0
    %203 = vmatprep.subr.mxu0 0.0
    %204 = vmatpush1.msra.mxu0 0.0
    %205 = vmatprep.subr.mxu0 0.0
    %206 = vmatpush1.msra.mxu0 0.0
    %207 = vmatprep.subr.mxu0 0.0
    %208 = vmatpush1.msra.mxu0 0.0
    %209 = vmatprep.subr.mxu0 0.0
    %210 = vmatpush1.msra.mxu0 0.0
    %211 = vmatprep.mubr.f32.mxu0 0.0
    %212 = vmatmul.mubr.f32.gmra.mrb[0].mxu0 %v142
    %v213 = vpop.f32.mrb[0].mxu0
    %v214 = vadd.f32 0.0, %v213
    %v215 = vpop.f32.mrb[0].mxu0
    %216 = vmatprep.mubr.f32.mxu0 0.0
    %217 = vmatmul.mubr.f32.gmra.mrb[0].mxu0 %v145
    %v218 = vpop.f32.mrb[0].mxu0
    %v219 = vadd.f32 0.0, %v218
    %v220 = vpop.f32.mrb[0].mxu0
    %221 = vdwg.mxu0
    %224 = vrot.lane.b32.xlu0 %v214, 120
    %v225 = vpop.permute.xlu0 %224
    %226 = vrot.lane.b32.xlu0 %v219, 120
    %v227 = vpop.permute.xlu0 %226
    %228 = vrot.lane.b32.xlu0 %v214, 112
    %v229 = vpop.permute.xlu0 %228
    %230 = vrot.lane.b32.xlu0 %v219, 112
    %v231 = vpop.permute.xlu0 %230
    %232 = vrot.lane.b32.xlu0 %v214, 104
    %v233 = vpop.permute.xlu0 %232
    %234 = vrot.lane.b32.xlu0 %v219, 104
    %v235 = vpop.permute.xlu0 %234
    %236 = vrot.lane.b32.xlu0 %v214, 96
    %v237 = vpop.permute.xlu0 %236
    %vm238 = vcmask 64512
    %v239 = vsel %vm238, %v214, 0
    %v241 = vsel %vm238, %v237, 0
    %243 = vmatprep.subr.mxu0 0.0
    %244 = vmatpush1.xpose.msra.mxu0 %v241
    %245 = vmatprep.subr.mxu0 0.0
    %246 = vmatpush1.xpose.msra.mxu0 0.0
    %247 = vmatprep.subr.mxu0 0.0
    %248 = vmatpush1.xpose.msra.mxu0 0.0
    %249 = vmatprep.subr.mxu0 0.0
    %250 = vmatpush1.xpose.msra.mxu0 0.0
    %251 = vmatprep.subr.mxu0 0.0
    %252 = vmatpush1.xpose.msra.mxu0 0.0
    %253 = vmatprep.subr.mxu0 0.0
    %254 = vmatpush1.xpose.msra.mxu0 0.0
    %255 = vmatprep.subr.mxu0 0.0
    %256 = vmatpush1.xpose.msra.mxu0 0.0
    %257 = vmatprep.subr.mxu0 0.0
    %258 = vmatpush1.xpose.msra.mxu0 0.0
    %259 = vmatprep.subr.mxu0 0.0
    %260 = vmatpush1.xpose.msra.mxu0 0.0
    %261 = vmatprep.subr.mxu0 0.0
    %262 = vmatpush1.xpose.msra.mxu0 0.0
    %263 = vmatprep.subr.mxu0 0.0
    %264 = vmatpush1.xpose.msra.mxu0 0.0
    %265 = vmatprep.subr.mxu0 0.0
    %266 = vmatpush1.xpose.msra.mxu0 0.0
    %267 = vmatprep.subr.mxu0 0.0
    %268 = vmatpush1.xpose.msra.mxu0 0.0
    %269 = vmatprep.subr.mxu0 0.0
    %270 = vmatpush1.xpose.msra.mxu0 0.0
    %271 = vmatprep.subr.mxu0 0.0
    %272 = vmatpush1.xpose.msra.mxu0 0.0
    %273 = vmatprep.subr.mxu0 0.0
    %274 = vmatpush1.xpose.msra.mxu0 0.0
    %275 = vmatprep.subr.mxu0 0.0
    %276 = vmatpush1.xpose.msra.mxu0 0.0
    %277 = vmatprep.subr.mxu0 0.0
    %278 = vmatpush1.xpose.msra.mxu0 0.0
    %279 = vmatprep.subr.mxu0 0.0
    %280 = vmatpush1.xpose.msra.mxu0 0.0
    %281 = vmatprep.subr.mxu0 0.0
    %282 = vmatpush1.xpose.msra.mxu0 0.0
    %283 = vmatprep.subr.mxu0 0.0
    %284 = vmatpush1.xpose.msra.mxu0 0.0
    %285 = vmatprep.subr.mxu0 0.0
    %286 = vmatpush1.xpose.msra.mxu0 0.0
    %287 = vmatprep.subr.mxu0 0.0
    %288 = vmatpush1.xpose.msra.mxu0 0.0
    %289 = vmatprep.subr.mxu0 0.0
    %290 = vmatpush1.xpose.msra.mxu0 0.0
    %291 = vmatprep.subr.mxu0 0.0
    %292 = vmatpush1.xpose.msra.mxu0 0.0
    %293 = vmatprep.subr.mxu0 0.0
    %294 = vmatpush1.xpose.msra.mxu0 0.0
    %295 = vmatprep.subr.mxu0 0.0
    %296 = vmatpush1.xpose.msra.mxu0 0.0
    %297 = vmatprep.subr.mxu0 0.0
    %298 = vmatpush1.xpose.msra.mxu0 0.0
    %299 = vmatprep.subr.mxu0 0.0
    %300 = vmatpush1.xpose.msra.mxu0 0.0
    %301 = vmatprep.subr.mxu0 0.0
    %302 = vmatpush1.xpose.msra.mxu0 0.0
    %303 = vmatprep.subr.mxu0 0.0
    %304 = vmatpush1.xpose.msra.mxu0 0.0
    %305 = vmatprep.subr.mxu0 0.0
    %306 = vmatpush1.xpose.msra.mxu0 0.0
    %307 = vmatprep.mubr.f32.mxu0 0.0
    %308 = vmatmul.mubr.f32.gmra.mrb[0].mxu0 %v239
    %v309 = vpop.f32.mrb[0].mxu0
    %v310 = vadd.f32 0.0, %v309
    %v311 = vpop.f32.mrb[0].mxu0
    %312 = vdwg.mxu0
    %313 = vrot.lane.b32.xlu0 %v219, 96
    %v314 = vpop.permute.xlu0 %313
    %v315 = vsel %vm238, %v219, 0
    %v317 = vsel %vm238, %v314, 0
    %319 = vmatprep.subr.mxu0 0.0
    %320 = vmatpush1.xpose.msra.mxu0 %v317
    %321 = vmatprep.subr.mxu0 0.0
    %322 = vmatpush1.xpose.msra.mxu0 0.0
    %323 = vmatprep.subr.mxu0 0.0
    %324 = vmatpush1.xpose.msra.mxu0 0.0
    %325 = vmatprep.subr.mxu0 0.0
    %326 = vmatpush1.xpose.msra.mxu0 0.0
    %327 = vmatprep.subr.mxu0 0.0
    %328 = vmatpush1.xpose.msra.mxu0 0.0
    %329 = vmatprep.subr.mxu0 0.0
    %330 = vmatpush1.xpose.msra.mxu0 0.0
    %331 = vmatprep.subr.mxu0 0.0
    %332 = vmatpush1.xpose.msra.mxu0 0.0
    %333 = vmatprep.subr.mxu0 0.0
    %334 = vmatpush1.xpose.msra.mxu0 0.0
    %335 = vmatprep.subr.mxu0 0.0
    %336 = vmatpush1.xpose.msra.mxu0 0.0
    %337 = vmatprep.subr.mxu0 0.0
    %338 = vmatpush1.xpose.msra.mxu0 0.0
    %339 = vmatprep.subr.mxu0 0.0
    %340 = vmatpush1.xpose.msra.mxu0 0.0
    %341 = vmatprep.subr.mxu0 0.0
    %342 = vmatpush1.xpose.msra.mxu0 0.0
    %343 = vmatprep.subr.mxu0 0.0
    %344 = vmatpush1.xpose.msra.mxu0 0.0
    %345 = vmatprep.subr.mxu0 0.0
    %346 = vmatpush1.xpose.msra.mxu0 0.0
    %347 = vmatprep.subr.mxu0 0.0
    %348 = vmatpush1.xpose.msra.mxu0 0.0
    %349 = vmatprep.subr.mxu0 0.0
    %350 = vmatpush1.xpose.msra.mxu0 0.0
    %351 = vmatprep.subr.mxu0 0.0
    %352 = vmatpush1.xpose.msra.mxu0 0.0
    %353 = vmatprep.subr.mxu0 0.0
    %354 = vmatpush1.xpose.msra.mxu0 0.0
    %355 = vmatprep.subr.mxu0 0.0
    %356 = vmatpush1.xpose.msra.mxu0 0.0
    %357 = vmatprep.subr.mxu0 0.0
    %358 = vmatpush1.xpose.msra.mxu0 0.0
    %359 = vmatprep.subr.mxu0 0.0
    %360 = vmatpush1.xpose.msra.mxu0 0.0
    %361 = vmatprep.subr.mxu0 0.0
    %362 = vmatpush1.xpose.msra.mxu0 0.0
    %363 = vmatprep.subr.mxu0 0.0
    %364 = vmatpush1.xpose.msra.mxu0 0.0
    %365 = vmatprep.subr.mxu0 0.0
    %366 = vmatpush1.xpose.msra.mxu0 0.0
    %367 = vmatprep.subr.mxu0 0.0
    %368 = vmatpush1.xpose.msra.mxu0 0.0
    %369 = vmatprep.subr.mxu0 0.0
    %370 = vmatpush1.xpose.msra.mxu0 0.0
    %371 = vmatprep.subr.mxu0 0.0
    %372 = vmatpush1.xpose.msra.mxu0 0.0
    %373 = vmatprep.subr.mxu0 0.0
    %374 = vmatpush1.xpose.msra.mxu0 0.0
    %375 = vmatprep.subr.mxu0 0.0
    %376 = vmatpush1.xpose.msra.mxu0 0.0
    %377 = vmatprep.subr.mxu0 0.0
    %378 = vmatpush1.xpose.msra.mxu0 0.0
    %379 = vmatprep.subr.mxu0 0.0
    %380 = vmatpush1.xpose.msra.mxu0 0.0
    %381 = vmatprep.subr.mxu0 0.0
    %382 = vmatpush1.xpose.msra.mxu0 0.0
    %383 = vmatprep.mubr.f32.mxu0 0.0
    %384 = vmatmul.mubr.f32.gmra.mrb[0].mxu0 %v315
    %v385 = vpop.f32.mrb[0].mxu0
    %v386 = vadd.f32 0.0, %v385
    %v387 = vpop.f32.mrb[0].mxu0
    %388 = vdwg.mxu0
    %389 = vrot.lane.b32.xlu0 %v225, 96
    %v390 = vpop.permute.xlu0 %389
    %v391 = vsel %vm238, %v225, 0
    %v393 = vsel %vm238, %v390, 0
    %395 = vmatprep.subr.mxu0 0.0
    %396 = vmatpush1.xpose.msra.mxu0 %v393
    %397 = vmatprep.subr.mxu0 0.0
    %398 = vmatpush1.xpose.msra.mxu0 0.0
    %399 = vmatprep.subr.mxu0 0.0
    %400 = vmatpush1.xpose.msra.mxu0 0.0
    %401 = vmatprep.subr.mxu0 0.0
    %402 = vmatpush1.xpose.msra.mxu0 0.0
    %403 = vmatprep.subr.mxu0 0.0
    %404 = vmatpush1.xpose.msra.mxu0 0.0
    %405 = vmatprep.subr.mxu0 0.0
    %406 = vmatpush1.xpose.msra.mxu0 0.0
    %407 = vmatprep.subr.mxu0 0.0
    %408 = vmatpush1.xpose.msra.mxu0 0.0
    %409 = vmatprep.subr.mxu0 0.0
    %410 = vmatpush1.xpose.msra.mxu0 0.0
    %411 = vmatprep.subr.mxu0 0.0
    %412 = vmatpush1.xpose.msra.mxu0 0.0
    %413 = vmatprep.subr.mxu0 0.0
    %414 = vmatpush1.xpose.msra.mxu0 0.0
    %415 = vmatprep.subr.mxu0 0.0
    %416 = vmatpush1.xpose.msra.mxu0 0.0
    %417 = vmatprep.subr.mxu0 0.0
    %418 = vmatpush1.xpose.msra.mxu0 0.0
    %419 = vmatprep.subr.mxu0 0.0
    %420 = vmatpush1.xpose.msra.mxu0 0.0
    %421 = vmatprep.subr.mxu0 0.0
    %422 = vmatpush1.xpose.msra.mxu0 0.0
    %423 = vmatprep.subr.mxu0 0.0
    %424 = vmatpush1.xpose.msra.mxu0 0.0
    %425 = vmatprep.subr.mxu0 0.0
    %426 = vmatpush1.xpose.msra.mxu0 0.0
    %427 = vmatprep.subr.mxu0 0.0
    %428 = vmatpush1.xpose.msra.mxu0 0.0
    %429 = vmatprep.subr.mxu0 0.0
    %430 = vmatpush1.xpose.msra.mxu0 0.0
    %431 = vmatprep.subr.mxu0 0.0
    %432 = vmatpush1.xpose.msra.mxu0 0.0
    %433 = vmatprep.subr.mxu0 0.0
    %434 = vmatpush1.xpose.msra.mxu0 0.0
    %435 = vmatprep.subr.mxu0 0.0
    %436 = vmatpush1.xpose.msra.mxu0 0.0
    %437 = vmatprep.subr.mxu0 0.0
    %438 = vmatpush1.xpose.msra.mxu0 0.0
    %439 = vmatprep.subr.mxu0 0.0
    %440 = vmatpush1.xpose.msra.mxu0 0.0
    %441 = vmatprep.subr.mxu0 0.0
    %442 = vmatpush1.xpose.msra.mxu0 0.0
    %443 = vmatprep.subr.mxu0 0.0
    %444 = vmatpush1.xpose.msra.mxu0 0.0
    %445 = vmatprep.subr.mxu0 0.0
    %446 = vmatpush1.xpose.msra.mxu0 0.0
    %447 = vmatprep.subr.mxu0 0.0
    %448 = vmatpush1.xpose.msra.mxu0 0.0
    %449 = vmatprep.subr.mxu0 0.0
    %450 = vmatpush1.xpose.msra.mxu0 0.0
    %451 = vmatprep.subr.mxu0 0.0
    %452 = vmatpush1.xpose.msra.mxu0 0.0
    %453 = vmatprep.subr.mxu0 0.0
    %454 = vmatpush1.xpose.msra.mxu0 0.0
    %455 = vmatprep.subr.mxu0 0.0
    %456 = vmatpush1.xpose.msra.mxu0 0.0
    %457 = vmatprep.subr.mxu0 0.0
    %458 = vmatpush1.xpose.msra.mxu0 0.0
    %459 = vmatprep.mubr.f32.mxu0 0.0
    %460 = vmatmul.mubr.f32.gmra.mrb[0].mxu0 %v391
    %v461 = vpop.f32.mrb[0].mxu0
    %v462 = vadd.f32 0.0, %v461
    %v463 = vpop.f32.mrb[0].mxu0
    %464 = vdwg.mxu0
    %465 = vrot.lane.b32.xlu0 %v227, 96
    %v466 = vpop.permute.xlu0 %465
    %v467 = vsel %vm238, %v227, 0
    %v469 = vsel %vm238, %v466, 0
    %471 = vmatprep.subr.mxu0 0.0
    %472 = vmatpush1.xpose.msra.mxu0 %v469
    %473 = vmatprep.subr.mxu0 0.0
    %474 = vmatpush1.xpose.msra.mxu0 0.0
    %475 = vmatprep.subr.mxu0 0.0
    %476 = vmatpush1.xpose.msra.mxu0 0.0
    %477 = vmatprep.subr.mxu0 0.0
    %478 = vmatpush1.xpose.msra.mxu0 0.0
    %479 = vmatprep.subr.mxu0 0.0
    %480 = vmatpush1.xpose.msra.mxu0 0.0
    %481 = vmatprep.subr.mxu0 0.0
    %482 = vmatpush1.xpose.msra.mxu0 0.0
    %483 = vmatprep.subr.mxu0 0.0
    %484 = vmatpush1.xpose.msra.mxu0 0.0
    %485 = vmatprep.subr.mxu0 0.0
    %486 = vmatpush1.xpose.msra.mxu0 0.0
    %487 = vmatprep.subr.mxu0 0.0
    %488 = vmatpush1.xpose.msra.mxu0 0.0
    %489 = vmatprep.subr.mxu0 0.0
    %490 = vmatpush1.xpose.msra.mxu0 0.0
    %491 = vmatprep.subr.mxu0 0.0
    %492 = vmatpush1.xpose.msra.mxu0 0.0
    %493 = vmatprep.subr.mxu0 0.0
    %494 = vmatpush1.xpose.msra.mxu0 0.0
    %495 = vmatprep.subr.mxu0 0.0
    %496 = vmatpush1.xpose.msra.mxu0 0.0
    %497 = vmatprep.subr.mxu0 0.0
    %498 = vmatpush1.xpose.msra.mxu0 0.0
    %499 = vmatprep.subr.mxu0 0.0
    %500 = vmatpush1.xpose.msra.mxu0 0.0
    %501 = vmatprep.subr.mxu0 0.0
    %502 = vmatpush1.xpose.msra.mxu0 0.0
    %503 = vmatprep.subr.mxu0 0.0
    %504 = vmatpush1.xpose.msra.mxu0 0.0
    %505 = vmatprep.subr.mxu0 0.0
    %506 = vmatpush1.xpose.msra.mxu0 0.0
    %507 = vmatprep.subr.mxu0 0.0
    %508 = vmatpush1.xpose.msra.mxu0 0.0
    %509 = vmatprep.subr.mxu0 0.0
    %510 = vmatpush1.xpose.msra.mxu0 0.0
    %511 = vmatprep.subr.mxu0 0.0
    %512 = vmatpush1.xpose.msra.mxu0 0.0
    %513 = vmatprep.subr.mxu0 0.0
    %514 = vmatpush1.xpose.msra.mxu0 0.0
    %515 = vmatprep.subr.mxu0 0.0
    %516 = vmatpush1.xpose.msra.mxu0 0.0
    %517 = vmatprep.subr.mxu0 0.0
    %518 = vmatpush1.xpose.msra.mxu0 0.0
    %519 = vmatprep.subr.mxu0 0.0
    %520 = vmatpush1.xpose.msra.mxu0 0.0
    %521 = vmatprep.subr.mxu0 0.0
    %522 = vmatpush1.xpose.msra.mxu0 0.0
    %523 = vmatprep.subr.mxu0 0.0
    %524 = vmatpush1.xpose.msra.mxu0 0.0
    %525 = vmatprep.subr.mxu0 0.0
    %526 = vmatpush1.xpose.msra.mxu0 0.0
    %527 = vmatprep.subr.mxu0 0.0
    %528 = vmatpush1.xpose.msra.mxu0 0.0
    %529 = vmatprep.subr.mxu0 0.0
    %530 = vmatpush1.xpose.msra.mxu0 0.0
    %531 = vmatprep.subr.mxu0 0.0
    %532 = vmatpush1.xpose.msra.mxu0 0.0
    %533 = vmatprep.subr.mxu0 0.0
    %534 = vmatpush1.xpose.msra.mxu0 0.0
    %535 = vmatprep.mubr.f32.mxu0 0.0
    %536 = vmatmul.mubr.f32.gmra.mrb[0].mxu0 %v467
    %v537 = vpop.f32.mrb[0].mxu0
    %v538 = vadd.f32 0.0, %v537
    %v539 = vpop.f32.mrb[0].mxu0
    %540 = vdwg.mxu0
    %541 = vrot.lane.b32.xlu0 %v229, 96
    %v542 = vpop.permute.xlu0 %541
    %v543 = vsel %vm238, %v229, 0
    %v545 = vsel %vm238, %v542, 0
    %547 = vmatprep.subr.mxu0 0.0
    %548 = vmatpush1.xpose.msra.mxu0 %v545
    %549 = vmatprep.subr.mxu0 0.0
    %550 = vmatpush1.xpose.msra.mxu0 0.0
    %551 = vmatprep.subr.mxu0 0.0
    %552 = vmatpush1.xpose.msra.mxu0 0.0
    %553 = vmatprep.subr.mxu0 0.0
    %554 = vmatpush1.xpose.msra.mxu0 0.0
    %555 = vmatprep.subr.mxu0 0.0
    %556 = vmatpush1.xpose.msra.mxu0 0.0
    %557 = vmatprep.subr.mxu0 0.0
    %558 = vmatpush1.xpose.msra.mxu0 0.0
    %559 = vmatprep.subr.mxu0 0.0
    %560 = vmatpush1.xpose.msra.mxu0 0.0
    %561 = vmatprep.subr.mxu0 0.0
    %562 = vmatpush1.xpose.msra.mxu0 0.0
    %563 = vmatprep.subr.mxu0 0.0
    %564 = vmatpush1.xpose.msra.mxu0 0.0
    %565 = vmatprep.subr.mxu0 0.0
    %566 = vmatpush1.xpose.msra.mxu0 0.0
    %567 = vmatprep.subr.mxu0 0.0
    %568 = vmatpush1.xpose.msra.mxu0 0.0
    %569 = vmatprep.subr.mxu0 0.0
    %570 = vmatpush1.xpose.msra.mxu0 0.0
    %571 = vmatprep.subr.mxu0 0.0
    %572 = vmatpush1.xpose.msra.mxu0 0.0
    %573 = vmatprep.subr.mxu0 0.0
    %574 = vmatpush1.xpose.msra.mxu0 0.0
    %575 = vmatprep.subr.mxu0 0.0
    %576 = vmatpush1.xpose.msra.mxu0 0.0
    %577 = vmatprep.subr.mxu0 0.0
    %578 = vmatpush1.xpose.msra.mxu0 0.0
    %579 = vmatprep.subr.mxu0 0.0
    %580 = vmatpush1.xpose.msra.mxu0 0.0
    %581 = vmatprep.subr.mxu0 0.0
    %582 = vmatpush1.xpose.msra.mxu0 0.0
    %583 = vmatprep.subr.mxu0 0.0
    %584 = vmatpush1.xpose.msra.mxu0 0.0
    %585 = vmatprep.subr.mxu0 0.0
    %586 = vmatpush1.xpose.msra.mxu0 0.0
    %587 = vmatprep.subr.mxu0 0.0
    %588 = vmatpush1.xpose.msra.mxu0 0.0
    %589 = vmatprep.subr.mxu0 0.0
    %590 = vmatpush1.xpose.msra.mxu0 0.0
    %591 = vmatprep.subr.mxu0 0.0
    %592 = vmatpush1.xpose.msra.mxu0 0.0
    %593 = vmatprep.subr.mxu0 0.0
    %594 = vmatpush1.xpose.msra.mxu0 0.0
    %595 = vmatprep.subr.mxu0 0.0
    %596 = vmatpush1.xpose.msra.mxu0 0.0
    %597 = vmatprep.subr.mxu0 0.0
    %598 = vmatpush1.xpose.msra.mxu0 0.0
    %599 = vmatprep.subr.mxu0 0.0
    %600 = vmatpush1.xpose.msra.mxu0 0.0
    %601 = vmatprep.subr.mxu0 0.0
    %602 = vmatpush1.xpose.msra.mxu0 0.0
    %603 = vmatprep.subr.mxu0 0.0
    %604 = vmatpush1.xpose.msra.mxu0 0.0
    %605 = vmatprep.subr.mxu0 0.0
    %606 = vmatpush1.xpose.msra.mxu0 0.0
    %607 = vmatprep.subr.mxu0 0.0
    %608 = vmatpush1.xpose.msra.mxu0 0.0
    %609 = vmatprep.subr.mxu0 0.0
    %610 = vmatpush1.xpose.msra.mxu0 0.0
    %611 = vmatprep.mubr.f32.mxu0 0.0
    %612 = vmatmul.mubr.f32.gmra.mrb[0].mxu0 %v543
    %v613 = vpop.f32.mrb[0].mxu0
    %v614 = vadd.f32 0.0, %v613
    %v615 = vpop.f32.mrb[0].mxu0
    %616 = vdwg.mxu0
    %617 = vrot.lane.b32.xlu0 %v231, 96
    %v618 = vpop.permute.xlu0 %617
    %v619 = vsel %vm238, %v231, 0
    %v621 = vsel %vm238, %v618, 0
    %623 = vmatprep.subr.mxu0 0.0
    %624 = vmatpush1.xpose.msra.mxu0 %v621
    %625 = vmatprep.subr.mxu0 0.0
    %626 = vmatpush1.xpose.msra.mxu0 0.0
    %627 = vmatprep.subr.mxu0 0.0
    %628 = vmatpush1.xpose.msra.mxu0 0.0
    %629 = vmatprep.subr.mxu0 0.0
    %630 = vmatpush1.xpose.msra.mxu0 0.0
    %631 = vmatprep.subr.mxu0 0.0
    %632 = vmatpush1.xpose.msra.mxu0 0.0
    %633 = vmatprep.subr.mxu0 0.0
    %634 = vmatpush1.xpose.msra.mxu0 0.0
    %635 = vmatprep.subr.mxu0 0.0
    %636 = vmatpush1.xpose.msra.mxu0 0.0
    %637 = vmatprep.subr.mxu0 0.0
    %638 = vmatpush1.xpose.msra.mxu0 0.0
    %639 = vmatprep.subr.mxu0 0.0
    %640 = vmatpush1.xpose.msra.mxu0 0.0
    %641 = vmatprep.subr.mxu0 0.0
    %642 = vmatpush1.xpose.msra.mxu0 0.0
    %643 = vmatprep.subr.mxu0 0.0
    %644 = vmatpush1.xpose.msra.mxu0 0.0
    %645 = vmatprep.subr.mxu0 0.0
    %646 = vmatpush1.xpose.msra.mxu0 0.0
    %647 = vmatprep.subr.mxu0 0.0
    %648 = vmatpush1.xpose.msra.mxu0 0.0
    %649 = vmatprep.subr.mxu0 0.0
    %650 = vmatpush1.xpose.msra.mxu0 0.0
    %651 = vmatprep.subr.mxu0 0.0
    %652 = vmatpush1.xpose.msra.mxu0 0.0
    %653 = vmatprep.subr.mxu0 0.0
    %654 = vmatpush1.xpose.msra.mxu0 0.0
    %655 = vmatprep.subr.mxu0 0.0
    %656 = vmatpush1.xpose.msra.mxu0 0.0
    %657 = vmatprep.subr.mxu0 0.0
    %658 = vmatpush1.xpose.msra.mxu0 0.0
    %659 = vmatprep.subr.mxu0 0.0
    %660 = vmatpush1.xpose.msra.mxu0 0.0
    %661 = vmatprep.subr.mxu0 0.0
    %662 = vmatpush1.xpose.msra.mxu0 0.0
    %663 = vmatprep.subr.mxu0 0.0
    %664 = vmatpush1.xpose.msra.mxu0 0.0
    %665 = vmatprep.subr.mxu0 0.0
    %666 = vmatpush1.xpose.msra.mxu0 0.0
    %667 = vmatprep.subr.mxu0 0.0
    %668 = vmatpush1.xpose.msra.mxu0 0.0
    %669 = vmatprep.subr.mxu0 0.0
    %670 = vmatpush1.xpose.msra.mxu0 0.0
    %671 = vmatprep.subr.mxu0 0.0
    %672 = vmatpush1.xpose.msra.mxu0 0.0
    %673 = vmatprep.subr.mxu0 0.0
    %674 = vmatpush1.xpose.msra.mxu0 0.0
    %675 = vmatprep.subr.mxu0 0.0
    %676 = vmatpush1.xpose.msra.mxu0 0.0
    %677 = vmatprep.subr.mxu0 0.0
    %678 = vmatpush1.xpose.msra.mxu0 0.0
    %679 = vmatprep.subr.mxu0 0.0
    %680 = vmatpush1.xpose.msra.mxu0 0.0
    %681 = vmatprep.subr.mxu0 0.0
    %682 = vmatpush1.xpose.msra.mxu0 0.0
    %683 = vmatprep.subr.mxu0 0.0
    %684 = vmatpush1.xpose.msra.mxu0 0.0
    %685 = vmatprep.subr.mxu0 0.0
    %686 = vmatpush1.xpose.msra.mxu0 0.0
    %687 = vmatprep.mubr.f32.mxu0 0.0
    %688 = vmatmul.mubr.f32.gmra.mrb[0].mxu0 %v619
    %v689 = vpop.f32.mrb[0].mxu0
    %v690 = vadd.f32 0.0, %v689
    %v691 = vpop.f32.mrb[0].mxu0
    %692 = vdwg.mxu0
    %693 = vrot.lane.b32.xlu0 %v233, 96
    %v694 = vpop.permute.xlu0 %693
    %v695 = vsel %vm238, %v233, 0
    %v697 = vsel %vm238, %v694, 0
    %699 = vmatprep.subr.mxu0 0.0
    %700 = vmatpush1.xpose.msra.mxu0 %v697
    %701 = vmatprep.subr.mxu0 0.0
    %702 = vmatpush1.xpose.msra.mxu0 0.0
    %703 = vmatprep.subr.mxu0 0.0
    %704 = vmatpush1.xpose.msra.mxu0 0.0
    %705 = vmatprep.subr.mxu0 0.0
    %706 = vmatpush1.xpose.msra.mxu0 0.0
    %707 = vmatprep.subr.mxu0 0.0
    %708 = vmatpush1.xpose.msra.mxu0 0.0
    %709 = vmatprep.subr.mxu0 0.0
    %710 = vmatpush1.xpose.msra.mxu0 0.0
    %711 = vmatprep.subr.mxu0 0.0
    %712 = vmatpush1.xpose.msra.mxu0 0.0
    %713 = vmatprep.subr.mxu0 0.0
    %714 = vmatpush1.xpose.msra.mxu0 0.0
    %715 = vmatprep.subr.mxu0 0.0
    %716 = vmatpush1.xpose.msra.mxu0 0.0
    %717 = vmatprep.subr.mxu0 0.0
    %718 = vmatpush1.xpose.msra.mxu0 0.0
    %719 = vmatprep.subr.mxu0 0.0
    %720 = vmatpush1.xpose.msra.mxu0 0.0
    %721 = vmatprep.subr.mxu0 0.0
    %722 = vmatpush1.xpose.msra.mxu0 0.0
    %723 = vmatprep.subr.mxu0 0.0
    %724 = vmatpush1.xpose.msra.mxu0 0.0
    %725 = vmatprep.subr.mxu0 0.0
    %726 = vmatpush1.xpose.msra.mxu0 0.0
    %727 = vmatprep.subr.mxu0 0.0
    %728 = vmatpush1.xpose.msra.mxu0 0.0
    %729 = vmatprep.subr.mxu0 0.0
    %730 = vmatpush1.xpose.msra.mxu0 0.0
    %731 = vmatprep.subr.mxu0 0.0
    %732 = vmatpush1.xpose.msra.mxu0 0.0
    %733 = vmatprep.subr.mxu0 0.0
    %734 = vmatpush1.xpose.msra.mxu0 0.0
    %735 = vmatprep.subr.mxu0 0.0
    %736 = vmatpush1.xpose.msra.mxu0 0.0
    %737 = vmatprep.subr.mxu0 0.0
    %738 = vmatpush1.xpose.msra.mxu0 0.0
    %739 = vmatprep.subr.mxu0 0.0
    %740 = vmatpush1.xpose.msra.mxu0 0.0
    %741 = vmatprep.subr.mxu0 0.0
    %742 = vmatpush1.xpose.msra.mxu0 0.0
    %743 = vmatprep.subr.mxu0 0.0
    %744 = vmatpush1.xpose.msra.mxu0 0.0
    %745 = vmatprep.subr.mxu0 0.0
    %746 = vmatpush1.xpose.msra.mxu0 0.0
    %747 = vmatprep.subr.mxu0 0.0
    %748 = vmatpush1.xpose.msra.mxu0 0.0
    %749 = vmatprep.subr.mxu0 0.0
    %750 = vmatpush1.xpose.msra.mxu0 0.0
    %751 = vmatprep.subr.mxu0 0.0
    %752 = vmatpush1.xpose.msra.mxu0 0.0
    %753 = vmatprep.subr.mxu0 0.0
    %754 = vmatpush1.xpose.msra.mxu0 0.0
    %755 = vmatprep.subr.mxu0 0.0
    %756 = vmatpush1.xpose.msra.mxu0 0.0
    %757 = vmatprep.subr.mxu0 0.0
    %758 = vmatpush1.xpose.msra.mxu0 0.0
    %759 = vmatprep.subr.mxu0 0.0
    %760 = vmatpush1.xpose.msra.mxu0 0.0
    %761 = vmatprep.subr.mxu0 0.0
    %762 = vmatpush1.xpose.msra.mxu0 0.0
    %763 = vmatprep.mubr.f32.mxu0 0.0
    %764 = vmatmul.mubr.f32.gmra.mrb[0].mxu0 %v695
    %v765 = vpop.f32.mrb[0].mxu0
    %v766 = vadd.f32 0.0, %v765
    %v767 = vpop.f32.mrb[0].mxu0
    %768 = vdwg.mxu0
    %769 = vrot.lane.b32.xlu0 %v235, 96
    %v770 = vpop.permute.xlu0 %769
    %v771 = vsel %vm238, %v235, 0
    %v773 = vsel %vm238, %v770, 0
    %775 = vmatprep.subr.mxu0 0.0
    %776 = vmatpush1.xpose.msra.mxu0 %v773
    %777 = vmatprep.subr.mxu0 0.0
    %778 = vmatpush1.xpose.msra.mxu0 0.0
    %779 = vmatprep.subr.mxu0 0.0
    %780 = vmatpush1.xpose.msra.mxu0 0.0
    %781 = vmatprep.subr.mxu0 0.0
    %782 = vmatpush1.xpose.msra.mxu0 0.0
    %783 = vmatprep.subr.mxu0 0.0
    %784 = vmatpush1.xpose.msra.mxu0 0.0
    %785 = vmatprep.subr.mxu0 0.0
    %786 = vmatpush1.xpose.msra.mxu0 0.0
    %787 = vmatprep.subr.mxu0 0.0
    %788 = vmatpush1.xpose.msra.mxu0 0.0
    %789 = vmatprep.subr.mxu0 0.0
    %790 = vmatpush1.xpose.msra.mxu0 0.0
    %791 = vmatprep.subr.mxu0 0.0
    %792 = vmatpush1.xpose.msra.mxu0 0.0
    %793 = vmatprep.subr.mxu0 0.0
    %794 = vmatpush1.xpose.msra.mxu0 0.0
    %795 = vmatprep.subr.mxu0 0.0
    %796 = vmatpush1.xpose.msra.mxu0 0.0
    %797 = vmatprep.subr.mxu0 0.0
    %798 = vmatpush1.xpose.msra.mxu0 0.0
    %799 = vmatprep.subr.mxu0 0.0
    %800 = vmatpush1.xpose.msra.mxu0 0.0
    %801 = vmatprep.subr.mxu0 0.0
    %802 = vmatpush1.xpose.msra.mxu0 0.0
    %803 = vmatprep.subr.mxu0 0.0
    %804 = vmatpush1.xpose.msra.mxu0 0.0
    %805 = vmatprep.subr.mxu0 0.0
    %806 = vmatpush1.xpose.msra.mxu0 0.0
    %807 = vmatprep.subr.mxu0 0.0
    %808 = vmatpush1.xpose.msra.mxu0 0.0
    %809 = vmatprep.subr.mxu0 0.0
    %810 = vmatpush1.xpose.msra.mxu0 0.0
    %811 = vmatprep.subr.mxu0 0.0
    %812 = vmatpush1.xpose.msra.mxu0 0.0
    %813 = vmatprep.subr.mxu0 0.0
    %814 = vmatpush1.xpose.msra.mxu0 0.0
    %815 = vmatprep.subr.mxu0 0.0
    %816 = vmatpush1.xpose.msra.mxu0 0.0
    %817 = vmatprep.subr.mxu0 0.0
    %818 = vmatpush1.xpose.msra.mxu0 0.0
    %819 = vmatprep.subr.mxu0 0.0
    %820 = vmatpush1.xpose.msra.mxu0 0.0
    %821 = vmatprep.subr.mxu0 0.0
    %822 = vmatpush1.xpose.msra.mxu0 0.0
    %823 = vmatprep.subr.mxu0 0.0
    %824 = vmatpush1.xpose.msra.mxu0 0.0
    %825 = vmatprep.subr.mxu0 0.0
    %826 = vmatpush1.xpose.msra.mxu0 0.0
    %827 = vmatprep.subr.mxu0 0.0
    %828 = vmatpush1.xpose.msra.mxu0 0.0
    %829 = vmatprep.subr.mxu0 0.0
    %830 = vmatpush1.xpose.msra.mxu0 0.0
    %831 = vmatprep.subr.mxu0 0.0
    %832 = vmatpush1.xpose.msra.mxu0 0.0
    %833 = vmatprep.subr.mxu0 0.0
    %834 = vmatpush1.xpose.msra.mxu0 0.0
    %835 = vmatprep.subr.mxu0 0.0
    %836 = vmatpush1.xpose.msra.mxu0 0.0
    %837 = vmatprep.subr.mxu0 0.0
    %838 = vmatpush1.xpose.msra.mxu0 0.0
    %839 = vmatprep.mubr.f32.mxu0 0.0
    %840 = vmatmul.mubr.f32.gmra.mrb[0].mxu0 %v771
    %v841 = vpop.f32.mrb[0].mxu0
    %v842 = vadd.f32 0.0, %v841
    %v843 = vpop.f32.mrb[0].mxu0
    %844 = vdwg.mxu0
    %v845 = vmul.f32 %v310, 0.35355338
    %v846 = vmul.f32 %v386, 0.35355338
    %v847 = vmul.f32 %v462, 0.35355338
    %v848 = vmul.f32 %v538, 0.35355338
    %v849 = vmul.f32 %v614, 0.35355338
    %v850 = vmul.f32 %v690, 0.35355338
    %v851 = vmul.f32 %v766, 0.35355338
    %v852 = vmul.f32 %v842, 0.35355338
    %v853 = vsel %vm238, %v845, -inf
    %854 = vmax.xlane.f32.xlu0 %v853
    %v855 = vpop.xlane.xlu0 %854
    %v856 = vsel %vm238, %v846, -inf
    %857 = vmax.xlane.f32.xlu0 %v856
    %v858 = vpop.xlane.xlu0 %857
    %v859 = vsel %vm238, %v847, -inf
    %860 = vmax.xlane.f32.xlu0 %v859
    %v861 = vpop.xlane.xlu0 %860
    %v862 = vsel %vm238, %v848, -inf
    %863 = vmax.xlane.f32.xlu0 %v862
    %v864 = vpop.xlane.xlu0 %863
    %v865 = vsel %vm238, %v849, -inf
    %866 = vmax.xlane.f32.xlu0 %v865
    %v867 = vpop.xlane.xlu0 %866
    %v868 = vsel %vm238, %v850, -inf
    %869 = vmax.xlane.f32.xlu0 %v868
    %v870 = vpop.xlane.xlu0 %869
    %v871 = vsel %vm238, %v851, -inf
    %872 = vmax.xlane.f32.xlu0 %v871
    %v873 = vpop.xlane.xlu0 %872
    %v874 = vsel %vm238, %v852, -inf
    %875 = vmax.xlane.f32.xlu0 %v874
    %v876 = vpop.xlane.xlu0 %875
    %v877 = vsub.f32 %v845, %v855
    %v878 = vsub.f32 %v846, %v858
    %v879 = vsub.f32 %v847, %v861
    %v880 = vsub.f32 %v848, %v864
    %v881 = vsub.f32 %v849, %v867
    %v882 = vsub.f32 %v850, %v870
    %v883 = vsub.f32 %v851, %v873
    %v884 = vsub.f32 %v852, %v876
    %v885 = vmul.f32 %v877, 1.442695
    %v886 = vpow.pop %v885
    %v887 = vmul.f32 %v878, 1.442695
    %v888 = vpow.pop %v887
    %v889 = vmul.f32 %v879, 1.442695
    %v890 = vpow.pop %v889
    %v891 = vmul.f32 %v880, 1.442695
    %v892 = vpow.pop %v891
    %v893 = vmul.f32 %v881, 1.442695
    %v894 = vpow.pop %v893
    %v895 = vmul.f32 %v882, 1.442695
    %v896 = vpow.pop %v895
    %v897 = vmul.f32 %v883, 1.442695
    %v898 = vpow.pop %v897
    %v899 = vmul.f32 %v884, 1.442695
    %v900 = vpow.pop %v899
    %v901 = vsel %vm238, %v886, 0.0
    %902 = vadd.xlane.f32.xlu0 %v901
    %v903 = vpop.xlane.xlu0 %902
    %v904 = vsel %vm238, %v888, 0.0
    %905 = vadd.xlane.f32.xlu0 %v904
    %v906 = vpop.xlane.xlu0 %905
    %v907 = vsel %vm238, %v890, 0.0
    %908 = vadd.xlane.f32.xlu0 %v907
    %v909 = vpop.xlane.xlu0 %908
    %v910 = vsel %vm238, %v892, 0.0
    %911 = vadd.xlane.f32.xlu0 %v910
    %v912 = vpop.xlane.xlu0 %911
    %v913 = vsel %vm238, %v894, 0.0
    %914 = vadd.xlane.f32.xlu0 %v913
    %v915 = vpop.xlane.xlu0 %914
    %v916 = vsel %vm238, %v896, 0.0
    %917 = vadd.xlane.f32.xlu0 %v916
    %v918 = vpop.xlane.xlu0 %917
    %v919 = vsel %vm238, %v898, 0.0
    %920 = vadd.xlane.f32.xlu0 %v919
    %v921 = vpop.xlane.xlu0 %920
    %v922 = vsel %vm238, %v900, 0.0
    %923 = vadd.xlane.f32.xlu0 %v922
    %v924 = vpop.xlane.xlu0 %923
    %v925 = vrcp.pop %v903
    %v926 = vmul.f32 %v886, %v925
    %v927 = vrcp.pop %v906
    %v928 = vmul.f32 %v888, %v927
    %v929 = vrcp.pop %v909
    %v930 = vmul.f32 %v890, %v929
    %v931 = vrcp.pop %v912
    %v932 = vmul.f32 %v892, %v931
    %v933 = vrcp.pop %v915
    %v934 = vmul.f32 %v894, %v933
    %v935 = vrcp.pop %v918
    %v936 = vmul.f32 %v896, %v935
    %v937 = vrcp.pop %v921
    %v938 = vmul.f32 %v898, %v937
    %v939 = vrcp.pop %v924
    %v940 = vmul.f32 %v900, %v939
    %941 = vrot.lane.b32.xlu0 %v214, 64
    %v942 = vpop.permute.xlu0 %941
    %v945 = vsel %vm238, %v926, 0
    %947 = vmatprep.subr.mxu0 0.0
    %948 = vmatpush1.msra.mxu0 %v942
    %949 = vmatprep.subr.mxu0 0.0
    %950 = vmatpush1.msra.mxu0 0.0
    %951 = vmatprep.subr.mxu0 0.0
    %952 = vmatpush1.msra.mxu0 0.0
    %953 = vmatprep.subr.mxu0 0.0
    %954 = vmatpush1.msra.mxu0 0.0
    %955 = vmatprep.subr.mxu0 0.0
    %956 = vmatpush1.msra.mxu0 0.0
    %957 = vmatprep.subr.mxu0 0.0
    %958 = vmatpush1.msra.mxu0 0.0
    %959 = vmatprep.subr.mxu0 0.0
    %960 = vmatpush1.msra.mxu0 0.0
    %961 = vmatprep.subr.mxu0 0.0
    %962 = vmatpush1.msra.mxu0 0.0
    %963 = vmatprep.subr.mxu0 0.0
    %964 = vmatpush1.msra.mxu0 0.0
    %965 = vmatprep.subr.mxu0 0.0
    %966 = vmatpush1.msra.mxu0 0.0
    %967 = vmatprep.subr.mxu0 0.0
    %968 = vmatpush1.msra.mxu0 0.0
    %969 = vmatprep.subr.mxu0 0.0
    %970 = vmatpush1.msra.mxu0 0.0
    %971 = vmatprep.subr.mxu0 0.0
    %972 = vmatpush1.msra.mxu0 0.0
    %973 = vmatprep.subr.mxu0 0.0
    %974 = vmatpush1.msra.mxu0 0.0
    %975 = vmatprep.subr.mxu0 0.0
    %976 = vmatpush1.msra.mxu0 0.0
    %977 = vmatprep.subr.mxu0 0.0
    %978 = vmatpush1.msra.mxu0 0.0
    %979 = vmatprep.subr.mxu0 0.0
    %980 = vmatpush1.msra.mxu0 0.0
    %981 = vmatprep.subr.mxu0 0.0
    %982 = vmatpush1.msra.mxu0 0.0
    %983 = vmatprep.subr.mxu0 0.0
    %984 = vmatpush1.msra.mxu0 0.0
    %985 = vmatprep.subr.mxu0 0.0
    %986 = vmatpush1.msra.mxu0 0.0
    %987 = vmatprep.subr.mxu0 0.0
    %988 = vmatpush1.msra.mxu0 0.0
    %989 = vmatprep.subr.mxu0 0.0
    %990 = vmatpush1.msra.mxu0 0.0
    %991 = vmatprep.subr.mxu0 0.0
    %992 = vmatpush1.msra.mxu0 0.0
    %993 = vmatprep.subr.mxu0 0.0
    %994 = vmatpush1.msra.mxu0 0.0
    %995 = vmatprep.subr.mxu0 0.0
    %996 = vmatpush1.msra.mxu0 0.0
    %997 = vmatprep.subr.mxu0 0.0
    %998 = vmatpush1.msra.mxu0 0.0
    %999 = vmatprep.subr.mxu0 0.0
    %1000 = vmatpush1.msra.mxu0 0.0
    %1001 = vmatprep.subr.mxu0 0.0
    %1002 = vmatpush1.msra.mxu0 0.0
    %1003 = vmatprep.subr.mxu0 0.0
    %1004 = vmatpush1.msra.mxu0 0.0
    %1005 = vmatprep.subr.mxu0 0.0
    %1006 = vmatpush1.msra.mxu0 0.0
    %1007 = vmatprep.subr.mxu0 0.0
    %1008 = vmatpush1.msra.mxu0 0.0
    %1009 = vmatprep.subr.mxu0 0.0
    %1010 = vmatpush1.msra.mxu0 0.0
    %1011 = vmatprep.mubr.f32.mxu0 0.0
    %1012 = vmatmul.mubr.f32.gmra.mrb[0].mxu0 %v945
    %v1013 = vpop.f32.mrb[0].mxu0
    %v1014 = vadd.f32 0.0, %v1013
    %v1015 = vpop.f32.mrb[0].mxu0
    %1016 = vdwg.mxu0
    %1017 = vrot.lane.b32.xlu0 %v219, 64
    %v1018 = vpop.permute.xlu0 %1017
    %v1021 = vsel %vm238, %v928, 0
    %1023 = vmatprep.subr.mxu0 0.0
    %1024 = vmatpush1.msra.mxu0 %v1018
    %1025 = vmatprep.subr.mxu0 0.0
    %1026 = vmatpush1.msra.mxu0 0.0
    %1027 = vmatprep.subr.mxu0 0.0
    %1028 = vmatpush1.msra.mxu0 0.0
    %1029 = vmatprep.subr.mxu0 0.0
    %1030 = vmatpush1.msra.mxu0 0.0
    %1031 = vmatprep.subr.mxu0 0.0
    %1032 = vmatpush1.msra.mxu0 0.0
    %1033 = vmatprep.subr.mxu0 0.0
    %1034 = vmatpush1.msra.mxu0 0.0
    %1035 = vmatprep.subr.mxu0 0.0
    %1036 = vmatpush1.msra.mxu0 0.0
    %1037 = vmatprep.subr.mxu0 0.0
    %1038 = vmatpush1.msra.mxu0 0.0
    %1039 = vmatprep.subr.mxu0 0.0
    %1040 = vmatpush1.msra.mxu0 0.0
    %1041 = vmatprep.subr.mxu0 0.0
    %1042 = vmatpush1.msra.mxu0 0.0
    %1043 = vmatprep.subr.mxu0 0.0
    %1044 = vmatpush1.msra.mxu0 0.0
    %1045 = vmatprep.subr.mxu0 0.0
    %1046 = vmatpush1.msra.mxu0 0.0
    %1047 = vmatprep.subr.mxu0 0.0
    %1048 = vmatpush1.msra.mxu0 0.0
    %1049 = vmatprep.subr.mxu0 0.0
    %1050 = vmatpush1.msra.mxu0 0.0
    %1051 = vmatprep.subr.mxu0 0.0
    %1052 = vmatpush1.msra.mxu0 0.0
    %1053 = vmatprep.subr.mxu0 0.0
    %1054 = vmatpush1.msra.mxu0 0.0
    %1055 = vmatprep.subr.mxu0 0.0
    %1056 = vmatpush1.msra.mxu0 0.0
    %1057 = vmatprep.subr.mxu0 0.0
    %1058 = vmatpush1.msra.mxu0 0.0
    %1059 = vmatprep.subr.mxu0 0.0
    %1060 = vmatpush1.msra.mxu0 0.0
    %1061 = vmatprep.subr.mxu0 0.0
    %1062 = vmatpush1.msra.mxu0 0.0
    %1063 = vmatprep.subr.mxu0 0.0
    %1064 = vmatpush1.msra.mxu0 0.0
    %1065 = vmatprep.subr.mxu0 0.0
    %1066 = vmatpush1.msra.mxu0 0.0
    %1067 = vmatprep.subr.mxu0 0.0
    %1068 = vmatpush1.msra.mxu0 0.0
    %1069 = vmatprep.subr.mxu0 0.0
    %1070 = vmatpush1.msra.mxu0 0.0
    %1071 = vmatprep.subr.mxu0 0.0
    %1072 = vmatpush1.msra.mxu0 0.0
    %1073 = vmatprep.subr.mxu0 0.0
    %1074 = vmatpush1.msra.mxu0 0.0
    %1075 = vmatprep.subr.mxu0 0.0
    %1076 = vmatpush1.msra.mxu0 0.0
    %1077 = vmatprep.subr.mxu0 0.0
    %1078 = vmatpush1.msra.mxu0 0.0
    %1079 = vmatprep.subr.mxu0 0.0
    %1080 = vmatpush1.msra.mxu0 0.0
    %1081 = vmatprep.subr.mxu0 0.0
    %1082 = vmatpush1.msra.mxu0 0.0
    %1083 = vmatprep.subr.mxu0 0.0
    %1084 = vmatpush1.msra.mxu0 0.0
    %1085 = vmatprep.subr.mxu0 0.0
    %1086 = vmatpush1.msra.mxu0 0.0
    %1087 = vmatprep.mubr.f32.mxu0 0.0
    %1088 = vmatmul.mubr.f32.gmra.mrb[0].mxu0 %v1021
    %v1089 = vpop.f32.mrb[0].mxu0
    %v1090 = vadd.f32 0.0, %v1089
    %v1091 = vpop.f32.mrb[0].mxu0
    %1092 = vdwg.mxu0
    %1093 = vrot.lane.b32.xlu0 %v225, 64
    %v1094 = vpop.permute.xlu0 %1093
    %v1097 = vsel %vm238, %v930, 0
    %1099 = vmatprep.subr.mxu0 0.0
    %1100 = vmatpush1.msra.mxu0 %v1094
    %1101 = vmatprep.subr.mxu0 0.0
    %1102 = vmatpush1.msra.mxu0 0.0
    %1103 = vmatprep.subr.mxu0 0.0
    %1104 = vmatpush1.msra.mxu0 0.0
    %1105 = vmatprep.subr.mxu0 0.0
    %1106 = vmatpush1.msra.mxu0 0.0
    %1107 = vmatprep.subr.mxu0 0.0
    %1108 = vmatpush1.msra.mxu0 0.0
    %1109 = vmatprep.subr.mxu0 0.0
    %1110 = vmatpush1.msra.mxu0 0.0
    %1111 = vmatprep.subr.mxu0 0.0
    %1112 = vmatpush1.msra.mxu0 0.0
    %1113 = vmatprep.subr.mxu0 0.0
    %1114 = vmatpush1.msra.mxu0 0.0
    %1115 = vmatprep.subr.mxu0 0.0
    %1116 = vmatpush1.msra.mxu0 0.0
    %1117 = vmatprep.subr.mxu0 0.0
    %1118 = vmatpush1.msra.mxu0 0.0
    %1119 = vmatprep.subr.mxu0 0.0
    %1120 = vmatpush1.msra.mxu0 0.0
    %1121 = vmatprep.subr.mxu0 0.0
    %1122 = vmatpush1.msra.mxu0 0.0
    %1123 = vmatprep.subr.mxu0 0.0
    %1124 = vmatpush1.msra.mxu0 0.0
    %1125 = vmatprep.subr.mxu0 0.0
    %1126 = vmatpush1.msra.mxu0 0.0
    %1127 = vmatprep.subr.mxu0 0.0
    %1128 = vmatpush1.msra.mxu0 0.0
    %1129 = vmatprep.subr.mxu0 0.0
    %1130 = vmatpush1.msra.mxu0 0.0
    %1131 = vmatprep.subr.mxu0 0.0
    %1132 = vmatpush1.msra.mxu0 0.0
    %1133 = vmatprep.subr.mxu0 0.0
    %1134 = vmatpush1.msra.mxu0 0.0
    %1135 = vmatprep.subr.mxu0 0.0
    %1136 = vmatpush1.msra.mxu0 0.0
    %1137 = vmatprep.subr.mxu0 0.0
    %1138 = vmatpush1.msra.mxu0 0.0
    %1139 = vmatprep.subr.mxu0 0.0
    %1140 = vmatpush1.msra.mxu0 0.0
    %1141 = vmatprep.subr.mxu0 0.0
    %1142 = vmatpush1.msra.mxu0 0.0
    %1143 = vmatprep.subr.mxu0 0.0
    %1144 = vmatpush1.msra.mxu0 0.0
    %1145 = vmatprep.subr.mxu0 0.0
    %1146 = vmatpush1.msra.mxu0 0.0
    %1147 = vmatprep.subr.mxu0 0.0
    %1148 = vmatpush1.msra.mxu0 0.0
    %1149 = vmatprep.subr.mxu0 0.0
    %1150 = vmatpush1.msra.mxu0 0.0
    %1151 = vmatprep.subr.mxu0 0.0
    %1152 = vmatpush1.msra.mxu0 0.0
    %1153 = vmatprep.subr.mxu0 0.0
    %1154 = vmatpush1.msra.mxu0 0.0
    %1155 = vmatprep.subr.mxu0 0.0
    %1156 = vmatpush1.msra.mxu0 0.0
    %1157 = vmatprep.subr.mxu0 0.0
    %1158 = vmatpush1.msra.mxu0 0.0
    %1159 = vmatprep.subr.mxu0 0.0
    %1160 = vmatpush1.msra.mxu0 0.0
    %1161 = vmatprep.subr.mxu0 0.0
    %1162 = vmatpush1.msra.mxu0 0.0
    %1163 = vmatprep.mubr.f32.mxu0 0.0
    %1164 = vmatmul.mubr.f32.gmra.mrb[0].mxu0 %v1097
    %v1165 = vpop.f32.mrb[0].mxu0
    %v1166 = vadd.f32 0.0, %v1165
    %v1167 = vpop.f32.mrb[0].mxu0
    %1168 = vdwg.mxu0
    %1169 = vrot.lane.b32.xlu0 %v227, 64
    %v1170 = vpop.permute.xlu0 %1169
    %v1173 = vsel %vm238, %v932, 0
    %1175 = vmatprep.subr.mxu0 0.0
    %1176 = vmatpush1.msra.mxu0 %v1170
    %1177 = vmatprep.subr.mxu0 0.0
    %1178 = vmatpush1.msra.mxu0 0.0
    %1179 = vmatprep.subr.mxu0 0.0
    %1180 = vmatpush1.msra.mxu0 0.0
    %1181 = vmatprep.subr.mxu0 0.0
    %1182 = vmatpush1.msra.mxu0 0.0
    %1183 = vmatprep.subr.mxu0 0.0
    %1184 = vmatpush1.msra.mxu0 0.0
    %1185 = vmatprep.subr.mxu0 0.0
    %1186 = vmatpush1.msra.mxu0 0.0
    %1187 = vmatprep.subr.mxu0 0.0
    %1188 = vmatpush1.msra.mxu0 0.0
    %1189 = vmatprep.subr.mxu0 0.0
    %1190 = vmatpush1.msra.mxu0 0.0
    %1191 = vmatprep.subr.mxu0 0.0
    %1192 = vmatpush1.msra.mxu0 0.0
    %1193 = vmatprep.subr.mxu0 0.0
    %1194 = vmatpush1.msra.mxu0 0.0
    %1195 = vmatprep.subr.mxu0 0.0
    %1196 = vmatpush1.msra.mxu0 0.0
    %1197 = vmatprep.subr.mxu0 0.0
    %1198 = vmatpush1.msra.mxu0 0.0
    %1199 = vmatprep.subr.mxu0 0.0
    %1200 = vmatpush1.msra.mxu0 0.0
    %1201 = vmatprep.subr.mxu0 0.0
    %1202 = vmatpush1.msra.mxu0 0.0
    %1203 = vmatprep.subr.mxu0 0.0
    %1204 = vmatpush1.msra.mxu0 0.0
    %1205 = vmatprep.subr.mxu0 0.0
    %1206 = vmatpush1.msra.mxu0 0.0
    %1207 = vmatprep.subr.mxu0 0.0
    %1208 = vmatpush1.msra.mxu0 0.0
    %1209 = vmatprep.subr.mxu0 0.0
    %1210 = vmatpush1.msra.mxu0 0.0
    %1211 = vmatprep.subr.mxu0 0.0
    %1212 = vmatpush1.msra.mxu0 0.0
    %1213 = vmatprep.subr.mxu0 0.0
    %1214 = vmatpush1.msra.mxu0 0.0
    %1215 = vmatprep.subr.mxu0 0.0
    %1216 = vmatpush1.msra.mxu0 0.0
    %1217 = vmatprep.subr.mxu0 0.0
    %1218 = vmatpush1.msra.mxu0 0.0
    %1219 = vmatprep.subr.mxu0 0.0
    %1220 = vmatpush1.msra.mxu0 0.0
    %1221 = vmatprep.subr.mxu0 0.0
    %1222 = vmatpush1.msra.mxu0 0.0
    %1223 = vmatprep.subr.mxu0 0.0
    %1224 = vmatpush1.msra.mxu0 0.0
    %1225 = vmatprep.subr.mxu0 0.0
    %1226 = vmatpush1.msra.mxu0 0.0
    %1227 = vmatprep.subr.mxu0 0.0
    %1228 = vmatpush1.msra.mxu0 0.0
    %1229 = vmatprep.subr.mxu0 0.0
    %1230 = vmatpush1.msra.mxu0 0.0
    %1231 = vmatprep.subr.mxu0 0.0
    %1232 = vmatpush1.msra.mxu0 0.0
    %1233 = vmatprep.subr.mxu0 0.0
    %1234 = vmatpush1.msra.mxu0 0.0
    %1235 = vmatprep.subr.mxu0 0.0
    %1236 = vmatpush1.msra.mxu0 0.0
    %1237 = vmatprep.subr.mxu0 0.0
    %1238 = vmatpush1.msra.mxu0 0.0
    %1239 = vmatprep.mubr.f32.mxu0 0.0
    %1240 = vmatmul.mubr.f32.gmra.mrb[0].mxu0 %v1173
    %v1241 = vpop.f32.mrb[0].mxu0
    %v1242 = vadd.f32 0.0, %v1241
    %v1243 = vpop.f32.mrb[0].mxu0
    %1244 = vdwg.mxu0
    %1245 = vrot.lane.b32.xlu0 %v229, 64
    %v1246 = vpop.permute.xlu0 %1245
    %v1249 = vsel %vm238, %v934, 0
    %1251 = vmatprep.subr.mxu0 0.0
    %1252 = vmatpush1.msra.mxu0 %v1246
    %1253 = vmatprep.subr.mxu0 0.0
    %1254 = vmatpush1.msra.mxu0 0.0
    %1255 = vmatprep.subr.mxu0 0.0
    %1256 = vmatpush1.msra.mxu0 0.0
    %1257 = vmatprep.subr.mxu0 0.0
    %1258 = vmatpush1.msra.mxu0 0.0
    %1259 = vmatprep.subr.mxu0 0.0
    %1260 = vmatpush1.msra.mxu0 0.0
    %1261 = vmatprep.subr.mxu0 0.0
    %1262 = vmatpush1.msra.mxu0 0.0
    %1263 = vmatprep.subr.mxu0 0.0
    %1264 = vmatpush1.msra.mxu0 0.0
    %1265 = vmatprep.subr.mxu0 0.0
    %1266 = vmatpush1.msra.mxu0 0.0
    %1267 = vmatprep.subr.mxu0 0.0
    %1268 = vmatpush1.msra.mxu0 0.0
    %1269 = vmatprep.subr.mxu0 0.0
    %1270 = vmatpush1.msra.mxu0 0.0
    %1271 = vmatprep.subr.mxu0 0.0
    %1272 = vmatpush1.msra.mxu0 0.0
    %1273 = vmatprep.subr.mxu0 0.0
    %1274 = vmatpush1.msra.mxu0 0.0
    %1275 = vmatprep.subr.mxu0 0.0
    %1276 = vmatpush1.msra.mxu0 0.0
    %1277 = vmatprep.subr.mxu0 0.0
    %1278 = vmatpush1.msra.mxu0 0.0
    %1279 = vmatprep.subr.mxu0 0.0
    %1280 = vmatpush1.msra.mxu0 0.0
    %1281 = vmatprep.subr.mxu0 0.0
    %1282 = vmatpush1.msra.mxu0 0.0
    %1283 = vmatprep.subr.mxu0 0.0
    %1284 = vmatpush1.msra.mxu0 0.0
    %1285 = vmatprep.subr.mxu0 0.0
    %1286 = vmatpush1.msra.mxu0 0.0
    %1287 = vmatprep.subr.mxu0 0.0
    %1288 = vmatpush1.msra.mxu0 0.0
    %1289 = vmatprep.subr.mxu0 0.0
    %1290 = vmatpush1.msra.mxu0 0.0
    %1291 = vmatprep.subr.mxu0 0.0
    %1292 = vmatpush1.msra.mxu0 0.0
    %1293 = vmatprep.subr.mxu0 0.0
    %1294 = vmatpush1.msra.mxu0 0.0
    %1295 = vmatprep.subr.mxu0 0.0
    %1296 = vmatpush1.msra.mxu0 0.0
    %1297 = vmatprep.subr.mxu0 0.0
    %1298 = vmatpush1.msra.mxu0 0.0
    %1299 = vmatprep.subr.mxu0 0.0
    %1300 = vmatpush1.msra.mxu0 0.0
    %1301 = vmatprep.subr.mxu0 0.0
    %1302 = vmatpush1.msra.mxu0 0.0
    %1303 = vmatprep.subr.mxu0 0.0
    %1304 = vmatpush1.msra.mxu0 0.0
    %1305 = vmatprep.subr.mxu0 0.0
    %1306 = vmatpush1.msra.mxu0 0.0
    %1307 = vmatprep.subr.mxu0 0.0
    %1308 = vmatpush1.msra.mxu0 0.0
    %1309 = vmatprep.subr.mxu0 0.0
    %1310 = vmatpush1.msra.mxu0 0.0
    %1311 = vmatprep.subr.mxu0 0.0
    %1312 = vmatpush1.msra.mxu0 0.0
    %1313 = vmatprep.subr.mxu0 0.0
    %1314 = vmatpush1.msra.mxu0 0.0
    %1315 = vmatprep.mubr.f32.mxu0 0.0
    %1316 = vmatmul.mubr.f32.gmra.mrb[0].mxu0 %v1249
    %v1317 = vpop.f32.mrb[0].mxu0
    %v1318 = vadd.f32 0.0, %v1317
    %v1319 = vpop.f32.mrb[0].mxu0
    %1320 = vdwg.mxu0
    %1321 = vrot.lane.b32.xlu0 %v231, 64
    %v1322 = vpop.permute.xlu0 %1321
    %v1325 = vsel %vm238, %v936, 0
    %1327 = vmatprep.subr.mxu0 0.0
    %1328 = vmatpush1.msra.mxu0 %v1322
    %1329 = vmatprep.subr.mxu0 0.0
    %1330 = vmatpush1.msra.mxu0 0.0
    %1331 = vmatprep.subr.mxu0 0.0
    %1332 = vmatpush1.msra.mxu0 0.0
    %1333 = vmatprep.subr.mxu0 0.0
    %1334 = vmatpush1.msra.mxu0 0.0
    %1335 = vmatprep.subr.mxu0 0.0
    %1336 = vmatpush1.msra.mxu0 0.0
    %1337 = vmatprep.subr.mxu0 0.0
    %1338 = vmatpush1.msra.mxu0 0.0
    %1339 = vmatprep.subr.mxu0 0.0
    %1340 = vmatpush1.msra.mxu0 0.0
    %1341 = vmatprep.subr.mxu0 0.0
    %1342 = vmatpush1.msra.mxu0 0.0
    %1343 = vmatprep.subr.mxu0 0.0
    %1344 = vmatpush1.msra.mxu0 0.0
    %1345 = vmatprep.subr.mxu0 0.0
    %1346 = vmatpush1.msra.mxu0 0.0
    %1347 = vmatprep.subr.mxu0 0.0
    %1348 = vmatpush1.msra.mxu0 0.0
    %1349 = vmatprep.subr.mxu0 0.0
    %1350 = vmatpush1.msra.mxu0 0.0
    %1351 = vmatprep.subr.mxu0 0.0
    %1352 = vmatpush1.msra.mxu0 0.0
    %1353 = vmatprep.subr.mxu0 0.0
    %1354 = vmatpush1.msra.mxu0 0.0
    %1355 = vmatprep.subr.mxu0 0.0
    %1356 = vmatpush1.msra.mxu0 0.0
    %1357 = vmatprep.subr.mxu0 0.0
    %1358 = vmatpush1.msra.mxu0 0.0
    %1359 = vmatprep.subr.mxu0 0.0
    %1360 = vmatpush1.msra.mxu0 0.0
    %1361 = vmatprep.subr.mxu0 0.0
    %1362 = vmatpush1.msra.mxu0 0.0
    %1363 = vmatprep.subr.mxu0 0.0
    %1364 = vmatpush1.msra.mxu0 0.0
    %1365 = vmatprep.subr.mxu0 0.0
    %1366 = vmatpush1.msra.mxu0 0.0
    %1367 = vmatprep.subr.mxu0 0.0
    %1368 = vmatpush1.msra.mxu0 0.0
    %1369 = vmatprep.subr.mxu0 0.0
    %1370 = vmatpush1.msra.mxu0 0.0
    %1371 = vmatprep.subr.mxu0 0.0
    %1372 = vmatpush1.msra.mxu0 0.0
    %1373 = vmatprep.subr.mxu0 0.0
    %1374 = vmatpush1.msra.mxu0 0.0
    %1375 = vmatprep.subr.mxu0 0.0
    %1376 = vmatpush1.msra.mxu0 0.0
    %1377 = vmatprep.subr.mxu0 0.0
    %1378 = vmatpush1.msra.mxu0 0.0
    %1379 = vmatprep.subr.mxu0 0.0
    %1380 = vmatpush1.msra.mxu0 0.0
    %1381 = vmatprep.subr.mxu0 0.0
    %1382 = vmatpush1.msra.mxu0 0.0
    %1383 = vmatprep.subr.mxu0 0.0
    %1384 = vmatpush1.msra.mxu0 0.0
    %1385 = vmatprep.subr.mxu0 0.0
    %1386 = vmatpush1.msra.mxu0 0.0
    %1387 = vmatprep.subr.mxu0 0.0
    %1388 = vmatpush1.msra.mxu0 0.0
    %1389 = vmatprep.subr.mxu0 0.0
    %1390 = vmatpush1.msra.mxu0 0.0
    %1391 = vmatprep.mubr.f32.mxu0 0.0
    %1392 = vmatmul.mubr.f32.gmra.mrb[0].mxu0 %v1325
    %v1393 = vpop.f32.mrb[0].mxu0
    %v1394 = vadd.f32 0.0, %v1393
    %v1395 = vpop.f32.mrb[0].mxu0
    %1396 = vdwg.mxu0
    %1397 = vrot.lane.b32.xlu0 %v233, 64
    %v1398 = vpop.permute.xlu0 %1397
    %v1401 = vsel %vm238, %v938, 0
    %1403 = vmatprep.subr.mxu0 0.0
    %1404 = vmatpush1.msra.mxu0 %v1398
    %1405 = vmatprep.subr.mxu0 0.0
    %1406 = vmatpush1.msra.mxu0 0.0
    %1407 = vmatprep.subr.mxu0 0.0
    %1408 = vmatpush1.msra.mxu0 0.0
    %1409 = vmatprep.subr.mxu0 0.0
    %1410 = vmatpush1.msra.mxu0 0.0
    %1411 = vmatprep.subr.mxu0 0.0
    %1412 = vmatpush1.msra.mxu0 0.0
    %1413 = vmatprep.subr.mxu0 0.0
    %1414 = vmatpush1.msra.mxu0 0.0
    %1415 = vmatprep.subr.mxu0 0.0
    %1416 = vmatpush1.msra.mxu0 0.0
    %1417 = vmatprep.subr.mxu0 0.0
    %1418 = vmatpush1.msra.mxu0 0.0
    %1419 = vmatprep.subr.mxu0 0.0
    %1420 = vmatpush1.msra.mxu0 0.0
    %1421 = vmatprep.subr.mxu0 0.0
    %1422 = vmatpush1.msra.mxu0 0.0
    %1423 = vmatprep.subr.mxu0 0.0
    %1424 = vmatpush1.msra.mxu0 0.0
    %1425 = vmatprep.subr.mxu0 0.0
    %1426 = vmatpush1.msra.mxu0 0.0
    %1427 = vmatprep.subr.mxu0 0.0
    %1428 = vmatpush1.msra.mxu0 0.0
    %1429 = vmatprep.subr.mxu0 0.0
    %1430 = vmatpush1.msra.mxu0 0.0
    %1431 = vmatprep.subr.mxu0 0.0
    %1432 = vmatpush1.msra.mxu0 0.0
    %1433 = vmatprep.subr.mxu0 0.0
    %1434 = vmatpush1.msra.mxu0 0.0
    %1435 = vmatprep.subr.mxu0 0.0
    %1436 = vmatpush1.msra.mxu0 0.0
    %1437 = vmatprep.subr.mxu0 0.0
    %1438 = vmatpush1.msra.mxu0 0.0
    %1439 = vmatprep.subr.mxu0 0.0
    %1440 = vmatpush1.msra.mxu0 0.0
    %1441 = vmatprep.subr.mxu0 0.0
    %1442 = vmatpush1.msra.mxu0 0.0
    %1443 = vmatprep.subr.mxu0 0.0
    %1444 = vmatpush1.msra.mxu0 0.0
    %1445 = vmatprep.subr.mxu0 0.0
    %1446 = vmatpush1.msra.mxu0 0.0
    %1447 = vmatprep.subr.mxu0 0.0
    %1448 = vmatpush1.msra.mxu0 0.0
    %1449 = vmatprep.subr.mxu0 0.0
    %1450 = vmatpush1.msra.mxu0 0.0
    %1451 = vmatprep.subr.mxu0 0.0
    %1452 = vmatpush1.msra.mxu0 0.0
    %1453 = vmatprep.subr.mxu0 0.0
    %1454 = vmatpush1.msra.mxu0 0.0
    %1455 = vmatprep.subr.mxu0 0.0
    %1456 = vmatpush1.msra.mxu0 0.0
    %1457 = vmatprep.subr.mxu0 0.0
    %1458 = vmatpush1.msra.mxu0 0.0
    %1459 = vmatprep.subr.mxu0 0.0
    %1460 = vmatpush1.msra.mxu0 0.0
    %1461 = vmatprep.subr.mxu0 0.0
    %1462 = vmatpush1.msra.mxu0 0.0
    %1463 = vmatprep.subr.mxu0 0.0
    %1464 = vmatpush1.msra.mxu0 0.0
    %1465 = vmatprep.subr.mxu0 0.0
    %1466 = vmatpush1.msra.mxu0 0.0
    %1467 = vmatprep.mubr.f32.mxu0 0.0
    %1468 = vmatmul.mubr.f32.gmra.mrb[0].mxu0 %v1401
    %v1469 = vpop.f32.mrb[0].mxu0
    %v1470 = vadd.f32 0.0, %v1469
    %v1471 = vpop.f32.mrb[0].mxu0
    %1472 = vdwg.mxu0
    %1473 = vrot.lane.b32.xlu0 %v235, 64
    %v1474 = vpop.permute.xlu0 %1473
    %v1477 = vsel %vm238, %v940, 0
    %1479 = vmatprep.subr.mxu0 0.0
    %1480 = vmatpush1.msra.mxu0 %v1474
    %1481 = vmatprep.subr.mxu0 0.0
    %1482 = vmatpush1.msra.mxu0 0.0
    %1483 = vmatprep.subr.mxu0 0.0
    %1484 = vmatpush1.msra.mxu0 0.0
    %1485 = vmatprep.subr.mxu0 0.0
    %1486 = vmatpush1.msra.mxu0 0.0
    %1487 = vmatprep.subr.mxu0 0.0
    %1488 = vmatpush1.msra.mxu0 0.0
    %1489 = vmatprep.subr.mxu0 0.0
    %1490 = vmatpush1.msra.mxu0 0.0
    %1491 = vmatprep.subr.mxu0 0.0
    %1492 = vmatpush1.msra.mxu0 0.0
    %1493 = vmatprep.subr.mxu0 0.0
    %1494 = vmatpush1.msra.mxu0 0.0
    %1495 = vmatprep.subr.mxu0 0.0
    %1496 = vmatpush1.msra.mxu0 0.0
    %1497 = vmatprep.subr.mxu0 0.0
    %1498 = vmatpush1.msra.mxu0 0.0
    %1499 = vmatprep.subr.mxu0 0.0
    %1500 = vmatpush1.msra.mxu0 0.0
    %1501 = vmatprep.subr.mxu0 0.0
    %1502 = vmatpush1.msra.mxu0 0.0
    %1503 = vmatprep.subr.mxu0 0.0
    %1504 = vmatpush1.msra.mxu0 0.0
    %1505 = vmatprep.subr.mxu0 0.0
    %1506 = vmatpush1.msra.mxu0 0.0
    %1507 = vmatprep.subr.mxu0 0.0
    %1508 = vmatpush1.msra.mxu0 0.0
    %1509 = vmatprep.subr.mxu0 0.0
    %1510 = vmatpush1.msra.mxu0 0.0
    %1511 = vmatprep.subr.mxu0 0.0
    %1512 = vmatpush1.msra.mxu0 0.0
    %1513 = vmatprep.subr.mxu0 0.0
    %1514 = vmatpush1.msra.mxu0 0.0
    %1515 = vmatprep.subr.mxu0 0.0
    %1516 = vmatpush1.msra.mxu0 0.0
    %1517 = vmatprep.subr.mxu0 0.0
    %1518 = vmatpush1.msra.mxu0 0.0
    %1519 = vmatprep.subr.mxu0 0.0
    %1520 = vmatpush1.msra.mxu0 0.0
    %1521 = vmatprep.subr.mxu0 0.0
    %1522 = vmatpush1.msra.mxu0 0.0
    %1523 = vmatprep.subr.mxu0 0.0
    %1524 = vmatpush1.msra.mxu0 0.0
    %1525 = vmatprep.subr.mxu0 0.0
    %1526 = vmatpush1.msra.mxu0 0.0
    %1527 = vmatprep.subr.mxu0 0.0
    %1528 = vmatpush1.msra.mxu0 0.0
    %1529 = vmatprep.subr.mxu0 0.0
    %1530 = vmatpush1.msra.mxu0 0.0
    %1531 = vmatprep.subr.mxu0 0.0
    %1532 = vmatpush1.msra.mxu0 0.0
    %1533 = vmatprep.subr.mxu0 0.0
    %1534 = vmatpush1.msra.mxu0 0.0
    %1535 = vmatprep.subr.mxu0 0.0
    %1536 = vmatpush1.msra.mxu0 0.0
    %1537 = vmatprep.subr.mxu0 0.0
    %1538 = vmatpush1.msra.mxu0 0.0
    %1539 = vmatprep.subr.mxu0 0.0
    %1540 = vmatpush1.msra.mxu0 0.0
    %1541 = vmatprep.subr.mxu0 0.0
    %1542 = vmatpush1.msra.mxu0 0.0
    %1543 = vmatprep.mubr.f32.mxu0 0.0
    %1544 = vmatmul.mubr.f32.gmra.mrb[0].mxu0 %v1477
    %v1545 = vpop.f32.mrb[0].mxu0
    %v1546 = vadd.f32 0.0, %v1545
    %v1547 = vpop.f32.mrb[0].mxu0
    %1548 = vdwg.mxu0
    %1551 = vrot.lane.b32.xlu0 %v1166, 8
    %v1552 = vpop.permute.xlu0 %1551
    %1553 = vrot.lane.b32.xlu0 %v1242, 8
    %v1554 = vpop.permute.xlu0 %1553
    %1559 = vrot.lane.b32.xlu0 %v1318, 16
    %v1560 = vpop.permute.xlu0 %1559
    %1561 = vrot.lane.b32.xlu0 %v1394, 16
    %v1562 = vpop.permute.xlu0 %1561
    %1567 = vrot.lane.b32.xlu0 %v1470, 24
    %v1568 = vpop.permute.xlu0 %1567
    %1569 = vrot.lane.b32.xlu0 %v1546, 24
    %v1570 = vpop.permute.xlu0 %1569
    %v1573 = vsel %vm238, %v1014, %v1552
    %v1574 = vsel %vm238, %v1090, %v1554
    %v1575 = vsel %vm17, %v1573, %v1560
    %v1576 = vsel %vm17, %v1574, %v1562
    %vm1577 = vcmask 195584
    %v1578 = vsel %vm1577, %v1575, %v1568
    %v1579 = vsel %vm1577, %v1576, %v1570
    %v1580 = vld [vmem:[%s1 + $0xb0] sm:$0xff]
    %v1581 = vld [vmem:[%s1 + $0xc0] sm:$0xff]
    %v1582 = vld [vmem:[%s1 + $0xd0] sm:$0xff]
    %v1583 = vld [vmem:[%s1 + $0xe0] sm:$0xff]
    %v1585 = vsel %vm105, %v1578, 0
    %v1588 = vsel %vm105, %v1579, 0
    %1590 = vmatprep.subr.mxu0 0.0
    %1591 = vmatpush1.msra.mxu0 %v1580
    %1592 = vmatprep.subr.mxu0 0.0
    %1593 = vmatpush1.msra.mxu0 %v1581
    %1594 = vmatprep.subr.mxu0 0.0
    %1595 = vmatpush1.msra.mxu0 %v1582
    %1596 = vmatprep.subr.mxu0 0.0
    %1597 = vmatpush1.msra.mxu0 %v1583
    %1598 = vmatprep.subr.mxu0 0.0
    %1599 = vmatpush1.msra.mxu0 0.0
    %1600 = vmatprep.subr.mxu0 0.0
    %1601 = vmatpush1.msra.mxu0 0.0
    %1602 = vmatprep.subr.mxu0 0.0
    %1603 = vmatpush1.msra.mxu0 0.0
    %1604 = vmatprep.subr.mxu0 0.0
    %1605 = vmatpush1.msra.mxu0 0.0
    %1606 = vmatprep.subr.mxu0 0.0
    %1607 = vmatpush1.msra.mxu0 0.0
    %1608 = vmatprep.subr.mxu0 0.0
    %1609 = vmatpush1.msra.mxu0 0.0
    %1610 = vmatprep.subr.mxu0 0.0
    %1611 = vmatpush1.msra.mxu0 0.0
    %1612 = vmatprep.subr.mxu0 0.0
    %1613 = vmatpush1.msra.mxu0 0.0
    %1614 = vmatprep.subr.mxu0 0.0
    %1615 = vmatpush1.msra.mxu0 0.0
    %1616 = vmatprep.subr.mxu0 0.0
    %1617 = vmatpush1.msra.mxu0 0.0
    %1618 = vmatprep.subr.mxu0 0.0
    %1619 = vmatpush1.msra.mxu0 0.0
    %1620 = vmatprep.subr.mxu0 0.0
    %1621 = vmatpush1.msra.mxu0 0.0
    %1622 = vmatprep.subr.mxu0 0.0
    %1623 = vmatpush1.msra.mxu0 0.0
    %1624 = vmatprep.subr.mxu0 0.0
    %1625 = vmatpush1.msra.mxu0 0.0
    %1626 = vmatprep.subr.mxu0 0.0
    %1627 = vmatpush1.msra.mxu0 0.0
    %1628 = vmatprep.subr.mxu0 0.0
    %1629 = vmatpush1.msra.mxu0 0.0
    %1630 = vmatprep.subr.mxu0 0.0
    %1631 = vmatpush1.msra.mxu0 0.0
    %1632 = vmatprep.subr.mxu0 0.0
    %1633 = vmatpush1.msra.mxu0 0.0
    %1634 = vmatprep.subr.mxu0 0.0
    %1635 = vmatpush1.msra.mxu0 0.0
    %1636 = vmatprep.subr.mxu0 0.0
    %1637 = vmatpush1.msra.mxu0 0.0
    %1638 = vmatprep.subr.mxu0 0.0
    %1639 = vmatpush1.msra.mxu0 0.0
    %1640 = vmatprep.subr.mxu0 0.0
    %1641 = vmatpush1.msra.mxu0 0.0
    %1642 = vmatprep.subr.mxu0 0.0
    %1643 = vmatpush1.msra.mxu0 0.0
    %1644 = vmatprep.subr.mxu0 0.0
    %1645 = vmatpush1.msra.mxu0 0.0
    %1646 = vmatprep.subr.mxu0 0.0
    %1647 = vmatpush1.msra.mxu0 0.0
    %1648 = vmatprep.subr.mxu0 0.0
    %1649 = vmatpush1.msra.mxu0 0.0
    %1650 = vmatprep.subr.mxu0 0.0
    %1651 = vmatpush1.msra.mxu0 0.0
    %1652 = vmatprep.subr.mxu0 0.0
    %1653 = vmatpush1.msra.mxu0 0.0
    %1654 = vmatprep.mubr.f32.mxu0 0.0
    %1655 = vmatmul.mubr.f32.gmra.mrb[0].mxu0 %v1585
    %v1656 = vpop.f32.mrb[0].mxu0
    %v1657 = vadd.f32 0.0, %v1656
    %v1658 = vpop.f32.mrb[0].mxu0
    %1659 = vmatprep.mubr.f32.mxu0 0.0
    %1660 = vmatmul.mubr.f32.gmra.mrb[0].mxu0 %v1588
    %v1661 = vpop.f32.mrb[0].mxu0
    %v1662 = vadd.f32 0.0, %v1661
    %v1663 = vpop.f32.mrb[0].mxu0
    %1664 = vdwg.mxu0
    %v1665 = vadd.f32 %v101, %v1657
    %v1666 = vadd.f32 %v102, %v1662
    %v1667 = vld [vmem:[%s1 + $0xf0] ss:$0 sm:$0xff]
    %v1668 = vadd.f32 %v1665, %v1667
    %v1669 = vadd.f32 %v1666, %v1667
    %v1670 = vld [vmem:[%s1 + $0x100] ss:$0 sm:$0xff]
    %v1671 = vld [vmem:[%s1 + $0x110] ss:$0 sm:$0xff]
    %v1672 = vsel %vm105, %v1668, 0.0
    %1673 = vadd.xlane.f32.xlu0 %v1672
    %v1674 = vpop.xlane.xlu0 %1673
    %v1675 = vsel %vm105, %v1669, 0.0
    %1676 = vadd.xlane.f32.xlu0 %v1675
    %v1677 = vpop.xlane.xlu0 %1676
    %v1678 = vmul.f32 %v1674, %v112
    %v1679 = vmul.f32 %v1677, %v112
    %v1680 = vsub.f32 %v1668, %v1678
    %v1681 = vsub.f32 %v1669, %v1679
    %v1682 = vmul.f32 %v1680, %v1680
    %v1683 = vmul.f32 %v1681, %v1681
    %v1684 = vsel %vm105, %v1682, 0.0
    %1685 = vadd.xlane.f32.xlu0 %v1684
    %v1686 = vpop.xlane.xlu0 %1685
    %v1687 = vsel %vm105, %v1683, 0.0
    %1688 = vadd.xlane.f32.xlu0 %v1687
    %v1689 = vpop.xlane.xlu0 %1688
    %v1690 = vmul.f32 %v1686, %v112
    %v1691 = vmul.f32 %v1689, %v112
    %v1692 = vadd.f32 %v1690, 1e-05
    %v1693 = vadd.f32 %v1691, 1e-05
    %v1694 = vrsqrt.pop %v1692
    %v1695 = vrsqrt.pop %v1693
    %v1696 = vmul.f32 %v1680, %v1694
    %v1697 = vmul.f32 %v1681, %v1695
    %v1698 = vmul.f32 %v1696, %v1670
    %v1699 = vmul.f32 %v1697, %v1670
    %v1700 = vadd.f32 %v1698, %v1671
    %v1701 = vadd.f32 %v1699, %v1671
    %v1702 = vld [vmem:[%s1 + $0x120] sm:$0xff]
    %v1703 = vld [vmem:[%s1 + $0x130] sm:$0xff]
    %v1704 = vld [vmem:[%s1 + $0x140] sm:$0xff]
    %v1705 = vld [vmem:[%s1 + $0x150] sm:$0xff]
    %v1706 = vld [vmem:[%s1 + $0x160] ss:$0 sm:$0xff]
    %v1708 = vsel %vm105, %v1700, 0
    %v1711 = vsel %vm105, %v1701, 0
    %1713 = vmatprep.subr.mxu0 0.0
    %1714 = vmatpush1.msra.mxu0 %v1702
    %1715 = vmatprep.subr.mxu0 0.0
    %1716 = vmatpush1.msra.mxu0 %v1703
    %1717 = vmatprep.subr.mxu0 0.0
    %1718 = vmatpush1.msra.mxu0 %v1704
    %1719 = vmatprep.subr.mxu0 0.0
    %1720 = vmatpush1.msra.mxu0 %v1705
    %1721 = vmatprep.subr.mxu0 0.0
    %1722 = vmatpush1.msra.mxu0 0.0
    %1723 = vmatprep.subr.mxu0 0.0
    %1724 = vmatpush1.msra.mxu0 0.0
    %1725 = vmatprep.subr.mxu0 0.0
    %1726 = vmatpush1.msra.mxu0 0.0
    %1727 = vmatprep.subr.mxu0 0.0
    %1728 = vmatpush1.msra.mxu0 0.0
    %1729 = vmatprep.subr.mxu0 0.0
    %1730 = vmatpush1.msra.mxu0 0.0
    %1731 = vmatprep.subr.mxu0 0.0
    %1732 = vmatpush1.msra.mxu0 0.0
    %1733 = vmatprep.subr.mxu0 0.0
    %1734 = vmatpush1.msra.mxu0 0.0
    %1735 = vmatprep.subr.mxu0 0.0
    %1736 = vmatpush1.msra.mxu0 0.0
    %1737 = vmatprep.subr.mxu0 0.0
    %1738 = vmatpush1.msra.mxu0 0.0
    %1739 = vmatprep.subr.mxu0 0.0
    %1740 = vmatpush1.msra.mxu0 0.0
    %1741 = vmatprep.subr.mxu0 0.0
    %1742 = vmatpush1.msra.mxu0 0.0
    %1743 = vmatprep.subr.mxu0 0.0
    %1744 = vmatpush1.msra.mxu0 0.0
    %1745 = vmatprep.subr.mxu0 0.0
    %1746 = vmatpush1.msra.mxu0 0.0
    %1747 = vmatprep.subr.mxu0 0.0
    %1748 = vmatpush1.msra.mxu0 0.0
    %1749 = vmatprep.subr.mxu0 0.0
    %1750 = vmatpush1.msra.mxu0 0.0
    %1751 = vmatprep.subr.mxu0 0.0
    %1752 = vmatpush1.msra.mxu0 0.0
    %1753 = vmatprep.subr.mxu0 0.0
    %1754 = vmatpush1.msra.mxu0 0.0
    %1755 = vmatprep.subr.mxu0 0.0
    %1756 = vmatpush1.msra.mxu0 0.0
    %1757 = vmatprep.subr.mxu0 0.0
    %1758 = vmatpush1.msra.mxu0 0.0
    %1759 = vmatprep.subr.mxu0 0.0
    %1760 = vmatpush1.msra.mxu0 0.0
    %1761 = vmatprep.subr.mxu0 0.0
    %1762 = vmatpush1.msra.mxu0 0.0
    %1763 = vmatprep.subr.mxu0 0.0
    %1764 = vmatpush1.msra.mxu0 0.0
    %1765 = vmatprep.subr.mxu0 0.0
    %1766 = vmatpush1.msra.mxu0 0.0
    %1767 = vmatprep.subr.mxu0 0.0
    %1768 = vmatpush1.msra.mxu0 0.0
    %1769 = vmatprep.subr.mxu0 0.0
    %1770 = vmatpush1.msra.mxu0 0.0
    %1771 = vmatprep.subr.mxu0 0.0
    %1772 = vmatpush1.msra.mxu0 0.0
    %1773 = vmatprep.subr.mxu0 0.0
    %1774 = vmatpush1.msra.mxu0 0.0
    %1775 = vmatprep.subr.mxu0 0.0
    %1776 = vmatpush1.msra.mxu0 0.0
    %1777 = vmatprep.mubr.f32.mxu0 0.0
    %1778 = vmatmul.mubr.f32.gmra.mrb[0].mxu0 %v1708
    %v1779 = vpop.f32.mrb[0].mxu0
    %v1780 = vadd.f32 %v1706, %v1779
    %v1781 = vpop.f32.mrb[0].mxu0
    %1782 = vmatprep.mubr.f32.mxu0 0.0
    %1783 = vmatmul.mubr.f32.gmra.mrb[0].mxu0 %v1711
    %v1784 = vpop.f32.mrb[0].mxu0
    %v1785 = vadd.f32 %v1706, %v1784
    %v1786 = vpop.f32.mrb[0].mxu0
    %1787 = vdwg.mxu0
    %v1788 = vmul.f32 %v1780, 0.5
    %v1789 = vmul.f32 %v1785, 0.5
    %v1790 = vmul.f32 %v1780, 0.044715
    %v1791 = vmul.f32 %v1785, 0.044715
    %v1792 = vmul.f32 %v1790, %v1780
    %v1793 = vmul.f32 %v1791, %v1785
    %v1794 = vmul.f32 %v1792, %v1780
    %v1795 = vmul.f32 %v1793, %v1785
    %v1796 = vadd.f32 %v1780, %v1794
    %v1797 = vadd.f32 %v1785, %v1795
    %v1798 = vmul.f32 %v1796, 0.7978846
    %v1799 = vmul.f32 %v1797, 0.7978846
    %v1800 = vtanh.pop %v1798
    %v1801 = vtanh.pop %v1799
    %v1802 = vadd.f32 %v1800, 1.0
    %v1803 = vadd.f32 %v1801, 1.0
    %v1804 = vmul.f32 %v1788, %v1802
    %v1805 = vmul.f32 %v1789, %v1803
    %v1806 = vld [vmem:[%s1 + $0x170] sm:$0xff]
    %v1807 = vld [vmem:[%s1 + $0x180] sm:$0xff]
    %v1808 = vld [vmem:[%s1 + $0x190] sm:$0xff]
    %v1809 = vld [vmem:[%s1 + $0x1a0] sm:$0xff]
    %v1810 = vld [vmem:[%s1 + $0x1b0] sm:$0xff]
    %v1811 = vld [vmem:[%s1 + $0x1c0] sm:$0xff]
    %v1812 = vld [vmem:[%s1 + $0x1d0] sm:$0xff]
    %v1813 = vld [vmem:[%s1 + $0x1e0] sm:$0xff]
    %vm1814 = vcmask 523264
    %v1816 = vsel %vm1814, %v1804, 0
    %v1819 = vsel %vm1814, %v1805, 0
    %1821 = vmatprep.subr.mxu0 0.0
    %1822 = vmatpush1.msra.mxu0 %v1806
    %1823 = vmatprep.subr.mxu0 0.0
    %1824 = vmatpush1.msra.mxu0 %v1807
    %1825 = vmatprep.subr.mxu0 0.0
    %1826 = vmatpush1.msra.mxu0 %v1808
    %1827 = vmatprep.subr.mxu0 0.0
    %1828 = vmatpush1.msra.mxu0 %v1809
    %1829 = vmatprep.subr.mxu0 0.0
    %1830 = vmatpush1.msra.mxu0 %v1810
    %1831 = vmatprep.subr.mxu0 0.0
    %1832 = vmatpush1.msra.mxu0 %v1811
    %1833 = vmatprep.subr.mxu0 0.0
    %1834 = vmatpush1.msra.mxu0 %v1812
    %1835 = vmatprep.subr.mxu0 0.0
    %1836 = vmatpush1.msra.mxu0 %v1813
    %1837 = vmatprep.subr.mxu0 0.0
    %1838 = vmatpush1.msra.mxu0 0.0
    %1839 = vmatprep.subr.mxu0 0.0
    %1840 = vmatpush1.msra.mxu0 0.0
    %1841 = vmatprep.subr.mxu0 0.0
    %1842 = vmatpush1.msra.mxu0 0.0
    %1843 = vmatprep.subr.mxu0 0.0
    %1844 = vmatpush1.msra.mxu0 0.0
    %1845 = vmatprep.subr.mxu0 0.0
    %1846 = vmatpush1.msra.mxu0 0.0
    %1847 = vmatprep.subr.mxu0 0.0
    %1848 = vmatpush1.msra.mxu0 0.0
    %1849 = vmatprep.subr.mxu0 0.0
    %1850 = vmatpush1.msra.mxu0 0.0
    %1851 = vmatprep.subr.mxu0 0.0
    %1852 = vmatpush1.msra.mxu0 0.0
    %1853 = vmatprep.subr.mxu0 0.0
    %1854 = vmatpush1.msra.mxu0 0.0
    %1855 = vmatprep.subr.mxu0 0.0
    %1856 = vmatpush1.msra.mxu0 0.0
    %1857 = vmatprep.subr.mxu0 0.0
    %1858 = vmatpush1.msra.mxu0 0.0
    %1859 = vmatprep.subr.mxu0 0.0
    %1860 = vmatpush1.msra.mxu0 0.0
    %1861 = vmatprep.subr.mxu0 0.0
    %1862 = vmatpush1.msra.mxu0 0.0
    %1863 = vmatprep.subr.mxu0 0.0
    %1864 = vmatpush1.msra.mxu0 0.0
    %1865 = vmatprep.subr.mxu0 0.0
    %1866 = vmatpush1.msra.mxu0 0.0
    %1867 = vmatprep.subr.mxu0 0.0
    %1868 = vmatpush1.msra.mxu0 0.0
    %1869 = vmatprep.subr.mxu0 0.0
    %1870 = vmatpush1.msra.mxu0 0.0
    %1871 = vmatprep.subr.mxu0 0.0
    %1872 = vmatpush1.msra.mxu0 0.0
    %1873 = vmatprep.subr.mxu0 0.0
    %1874 = vmatpush1.msra.mxu0 0.0
    %1875 = vmatprep.subr.mxu0 0.0
    %1876 = vmatpush1.msra.mxu0 0.0
    %1877 = vmatprep.subr.mxu0 0.0
    %1878 = vmatpush1.msra.mxu0 0.0
    %1879 = vmatprep.subr.mxu0 0.0
    %1880 = vmatpush1.msra.mxu0 0.0
    %1881 = vmatprep.subr.mxu0 0.0
    %1882 = vmatpush1.msra.mxu0 0.0
    %1883 = vmatprep.subr.mxu0 0.0
    %1884 = vmatpush1.msra.mxu0 0.0
    %1885 = vmatprep.mubr.f32.mxu0 0.0
    %1886 = vmatmul.mubr.f32.gmra.mrb[0].mxu0 %v1816
    %v1887 = vpop.f32.mrb[0].mxu0
    %v1888 = vadd.f32 0.0, %v1887
    %v1889 = vpop.f32.mrb[0].mxu0
    %1890 = vmatprep.mubr.f32.mxu0 0.0
    %1891 = vmatmul.mubr.f32.gmra.mrb[0].mxu0 %v1819
    %v1892 = vpop.f32.mrb[0].mxu0
    %v1893 = vadd.f32 0.0, %v1892
    %v1894 = vpop.f32.mrb[0].mxu0
    %1895 = vdwg.mxu0
    %v1896 = vadd.f32 %v1668, %v1888
    %v1897 = vadd.f32 %v1669, %v1893
    %v1898 = vld [vmem:[%s1 + $0x1f0] ss:$0 sm:$0xff]
    %v1899 = vadd.f32 %v1896, %v1898
    %v1900 = vadd.f32 %v1897, %v1898
    %v1901 = vld [vmem:[%s1 + $0x200] ss:$0 sm:$0xff]
    %v1902 = vld [vmem:[%s1 + $0x210] ss:$0 sm:$0xff]
    %v1903 = vsel %vm105, %v1899, 0.0
    %1904 = vadd.xlane.f32.xlu0 %v1903
    %v1905 = vpop.xlane.xlu0 %1904
    %v1906 = vsel %vm105, %v1900, 0.0
    %1907 = vadd.xlane.f32.xlu0 %v1906
    %v1908 = vpop.xlane.xlu0 %1907
    %v1909 = vmul.f32 %v1905, %v112
    %v1910 = vmul.f32 %v1908, %v112
    %v1911 = vsub.f32 %v1899, %v1909
    %v1912 = vsub.f32 %v1900, %v1910
    %v1913 = vmul.f32 %v1911, %v1911
    %v1914 = vmul.f32 %v1912, %v1912
    %v1915 = vsel %vm105, %v1913, 0.0
    %1916 = vadd.xlane.f32.xlu0 %v1915
    %v1917 = vpop.xlane.xlu0 %1916
    %v1918 = vsel %vm105, %v1914, 0.0
    %1919 = vadd.xlane.f32.xlu0 %v1918
    %v1920 = vpop.xlane.xlu0 %1919
    %v1921 = vmul.f32 %v1917, %v112
    %v1922 = vmul.f32 %v1920, %v112
    %v1923 = vadd.f32 %v1921, 1e-05
    %v1924 = vadd.f32 %v1922, 1e-05
    %v1925 = vrsqrt.pop %v1923
    %v1926 = vrsqrt.pop %v1924
    %v1927 = vmul.f32 %v1911, %v1925
    %v1928 = vmul.f32 %v1912, %v1926
    %v1929 = vmul.f32 %v1927, %v1901
    %v1930 = vmul.f32 %v1928, %v1901
    %v1931 = vadd.f32 %v1929, %v1902
    %v1932 = vadd.f32 %v1930, %v1902
    %v1933 = vld [vmem:[%s1 + $0x220] sm:$0xff]
    %v1934 = vld [vmem:[%s1 + $0x230] sm:$0xff]
    %v1935 = vld [vmem:[%s1 + $0x240] sm:$0xff]
    %v1936 = vld [vmem:[%s1 + $0x250] sm:$0xff]
    %v1937 = vld [vmem:[%s1 + $0x260] ss:$0 sm:$0xff]
    %v1939 = vsel %vm105, %v1931, 0
    %v1942 = vsel %vm105, %v1932, 0
    %1944 = vmatprep.subr.mxu0 0.0
    %1945 = vmatpush1.msra.mxu0 %v1933
    %1946 = vmatprep.subr.mxu0 0.0
    %1947 = vmatpush1.msra.mxu0 %v1934
    %1948 = vmatprep.subr.mxu0 0.0
    %1949 = vmatpush1.msra.mxu0 %v1935
    %1950 = vmatprep.subr.mxu0 0.0
    %1951 = vmatpush1.msra.mxu0 %v1936
    %1952 = vmatprep.subr.mxu0 0.0
    %1953 = vmatpush1.msra.mxu0 0.0
    %1954 = vmatprep.subr.mxu0 0.0
    %1955 = vmatpush1.msra.mxu0 0.0
    %1956 = vmatprep.subr.mxu0 0.0
    %1957 = vmatpush1.msra.mxu0 0.0
    %1958 = vmatprep.subr.mxu0 0.0
    %1959 = vmatpush1.msra.mxu0 0.0
    %1960 = vmatprep.subr.mxu0 0.0
    %1961 = vmatpush1.msra.mxu0 0.0
    %1962 = vmatprep.subr.mxu0 0.0
    %1963 = vmatpush1.msra.mxu0 0.0
    %1964 = vmatprep.subr.mxu0 0.0
    %1965 = vmatpush1.msra.mxu0 0.0
    %1966 = vmatprep.subr.mxu0 0.0
    %1967 = vmatpush1.msra.mxu0 0.0
    %1968 = vmatprep.subr.mxu0 0.0
    %1969 = vmatpush1.msra.mxu0 0.0
    %1970 = vmatprep.subr.mxu0 0.0
    %1971 = vmatpush1.msra.mxu0 0.0
    %1972 = vmatprep.subr.mxu0 0.0
    %1973 = vmatpush1.msra.mxu0 0.0
    %1974 = vmatprep.subr.mxu0 0.0
    %1975 = vmatpush1.msra.mxu0 0.0
    %1976 = vmatprep.subr.mxu0 0.0
    %1977 = vmatpush1.msra.mxu0 0.0
    %1978 = vmatprep.subr.mxu0 0.0
    %1979 = vmatpush1.msra.mxu0 0.0
    %1980 = vmatprep.subr.mxu0 0.0
    %1981 = vmatpush1.msra.mxu0 0.0
    %1982 = vmatprep.subr.mxu0 0.0
    %1983 = vmatpush1.msra.mxu0 0.0
    %1984 = vmatprep.subr.mxu0 0.0
    %1985 = vmatpush1.msra.mxu0 0.0
    %1986 = vmatprep.subr.mxu0 0.0
    %1987 = vmatpush1.msra.mxu0 0.0
    %1988 = vmatprep.subr.mxu0 0.0
    %1989 = vmatpush1.msra.mxu0 0.0
    %1990 = vmatprep.subr.mxu0 0.0
    %1991 = vmatpush1.msra.mxu0 0.0
    %1992 = vmatprep.subr.mxu0 0.0
    %1993 = vmatpush1.msra.mxu0 0.0
    %1994 = vmatprep.subr.mxu0 0.0
    %1995 = vmatpush1.msra.mxu0 0.0
    %1996 = vmatprep.subr.mxu0 0.0
    %1997 = vmatpush1.msra.mxu0 0.0
    %1998 = vmatprep.subr.mxu0 0.0
    %1999 = vmatpush1.msra.mxu0 0.0
    %2000 = vmatprep.subr.mxu0 0.0
    %2001 = vmatpush1.msra.mxu0 0.0
    %2002 = vmatprep.subr.mxu0 0.0
    %2003 = vmatpush1.msra.mxu0 0.0
    %2004 = vmatprep.subr.mxu0 0.0
    %2005 = vmatpush1.msra.mxu0 0.0
    %2006 = vmatprep.subr.mxu0 0.0
    %2007 = vmatpush1.msra.mxu0 0.0
    %2008 = vmatprep.mubr.f32.mxu0 0.0
    %2009 = vmatmul.mubr.f32.gmra.mrb[0].mxu0 %v1939
    %v2010 = vpop.f32.mrb[0].mxu0
    %v2011 = vadd.f32 %v1937, %v2010
    %v2012 = vpop.f32.mrb[0].mxu0
    %2013 = vmatprep.mubr.f32.mxu0 0.0
    %2014 = vmatmul.mubr.f32.gmra.mrb[0].mxu0 %v1942
    %v2015 = vpop.f32.mrb[0].mxu0
    %v2016 = vadd.f32 %v1937, %v2015
    %v2017 = vpop.f32.mrb[0].mxu0
    %2018 = vdwg.mxu0
    %v2019 = vld [vmem:[%s1 + $0x270] sm:$0xff]
    %v2020 = vld [vmem:[%s1 + $0x280] sm:$0xff]
    %v2021 = vadd.f32 %v2011, %v2019
    %v2022 = vadd.f32 %v2016, %v2020
    %v2023 = vld [vmem:[%s1 + $0x290] ss:$0 sm:$0xff]
    %v2024 = vld [vmem:[%s1 + $0x2a0] ss:$0 sm:$0xff]
    %vm2025 = vcmask 392192
    %v2026 = vsel %vm2025, %v2021, 0.0
    %2027 = vadd.xlane.f32.xlu0 %v2026
    %v2028 = vpop.xlane.xlu0 %2027
    %v2029 = vsel %vm2025, %v2022, 0.0
    %2030 = vadd.xlane.f32.xlu0 %v2029
    %v2031 = vpop.xlane.xlu0 %2030
    %v2032 = vrcp.pop 48.0
    %v2033 = vmul.f32 %v2028, %v2032
    %v2034 = vmul.f32 %v2031, %v2032
    %v2035 = vsub.f32 %v2021, %v2033
    %v2036 = vsub.f32 %v2022, %v2034
    %v2037 = vmul.f32 %v2035, %v2035
    %v2038 = vmul.f32 %v2036, %v2036
    %v2039 = vsel %vm2025, %v2037, 0.0
    %2040 = vadd.xlane.f32.xlu0 %v2039
    %v2041 = vpop.xlane.xlu0 %2040
    %v2042 = vsel %vm2025, %v2038, 0.0
    %2043 = vadd.xlane.f32.xlu0 %v2042
    %v2044 = vpop.xlane.xlu0 %2043
    %v2045 = vmul.f32 %v2041, %v2032
    %v2046 = vmul.f32 %v2044, %v2032
    %v2047 = vadd.f32 %v2045, 1e-05
    %v2048 = vadd.f32 %v2046, 1e-05
    %v2049 = vrsqrt.pop %v2047
    %v2050 = vrsqrt.pop %v2048
    %v2051 = vmul.f32 %v2035, %v2049
    %v2052 = vmul.f32 %v2036, %v2050
    %v2053 = vmul.f32 %v2051, %v2023
    %v2054 = vmul.f32 %v2052, %v2023
    %v2055 = vadd.f32 %v2053, %v2024
    %v2056 = vadd.f32 %v2054, %v2024
    %v2057 = vld [vmem:[%s1 + $0x2b0] sm:$0xff]
    %v2058 = vld [vmem:[%s1 + $0x2b8] sm:$0xff]
    %v2059 = vld [vmem:[%s1 + $0x2c0] sm:$0xff]
    %v2060 = vld [vmem:[%s1 + $0x2c8] sm:$0xff]
    %v2061 = vld [vmem:[%s1 + $0x2d0] sm:$0xff]
    %v2062 = vld [vmem:[%s1 + $0x2d8] sm:$0xff]
    %v2063 = vld [vmem:[%s1 + $0x2e0] sm:$0xff]
    %v2064 = vld [vmem:[%s1 + $0x2e8] sm:$0xff]
    %v2065 = vld [vmem:[%s1 + $0x2f0] sm:$0xff]
    %v2066 = vld [vmem:[%s1 + $0x2f8] sm:$0xff]
    %v2067 = vld [vmem:[%s1 + $0x300] sm:$0xff]
    %v2068 = vld [vmem:[%s1 + $0x308] sm:$0xff]
    %v2070 = vsel %vm2025, %v2055, 0
    %v2073 = vsel %vm2025, %v2056, 0
    %2075 = vmatprep.subr.mxu0 %v2058
    %2076 = vmatpush1.msra.mxu0 %v2057
    %2077 = vmatprep.subr.mxu0 %v2060
    %2078 = vmatpush1.msra.mxu0 %v2059
    %2079 = vmatprep.subr.mxu0 %v2062
    %2080 = vmatpush1.msra.mxu0 %v2061
    %2081 = vmatprep.subr.mxu0 %v2064
    %2082 = vmatpush1.msra.mxu0 %v2063
    %2083 = vmatprep.subr.mxu0 %v2066
    %2084 = vmatpush1.msra.mxu0 %v2065
    %2085 = vmatprep.subr.mxu0 %v2068
    %2086 = vmatpush1.msra.mxu0 %v2067
    %2087 = vmatprep.subr.mxu0 0.0
    %2088 = vmatpush1.msra.mxu0 0.0
    %2089 = vmatprep.subr.mxu0 0.0
    %2090 = vmatpush1.msra.mxu0 0.0
    %2091 = vmatprep.subr.mxu0 0.0
    %2092 = vmatpush1.msra.mxu0 0.0
    %2093 = vmatprep.subr.mxu0 0.0
    %2094 = vmatpush1.msra.mxu0 0.0
    %2095 = vmatprep.subr.mxu0 0.0
    %2096 = vmatpush1.msra.mxu0 0.0
    %2097 = vmatprep.subr.mxu0 0.0
    %2098 = vmatpush1.msra.mxu0 0.0
    %2099 = vmatprep.subr.mxu0 0.0
    %2100 = vmatpush1.msra.mxu0 0.0
    %2101 = vmatprep.subr.mxu0 0.0
    %2102 = vmatpush1.msra.mxu0 0.0
    %2103 = vmatprep.subr.mxu0 0.0
    %2104 = vmatpush1.msra.mxu0 0.0
    %2105 = vmatprep.subr.mxu0 0.0
    %2106 = vmatpush1.msra.mxu0 0.0
    %2107 = vmatprep.subr.mxu0 0.0
    %2108 = vmatpush1.msra.mxu0 0.0
    %2109 = vmatprep.subr.mxu0 0.0
    %2110 = vmatpush1.msra.mxu0 0.0
    %2111 = vmatprep.subr.mxu0 0.0
    %2112 = vmatpush1.msra.mxu0 0.0
    %2113 = vmatprep.subr.mxu0 0.0
    %2114 = vmatpush1.msra.mxu0 0.0
    %2115 = vmatprep.subr.mxu0 0.0
    %2116 = vmatpush1.msra.mxu0 0.0
    %2117 = vmatprep.subr.mxu0 0.0
    %2118 = vmatpush1.msra.mxu0 0.0
    %2119 = vmatprep.subr.mxu0 0.0
    %2120 = vmatpush1.msra.mxu0 0.0
    %2121 = vmatprep.subr.mxu0 0.0
    %2122 = vmatpush1.msra.mxu0 0.0
    %2123 = vmatprep.subr.mxu0 0.0
    %2124 = vmatpush1.msra.mxu0 0.0
    %2125 = vmatprep.subr.mxu0 0.0
    %2126 = vmatpush1.msra.mxu0 0.0
    %2127 = vmatprep.subr.mxu0 0.0
    %2128 = vmatpush1.msra.mxu0 0.0
    %2129 = vmatprep.subr.mxu0 0.0
    %2130 = vmatpush1.msra.mxu0 0.0
    %2131 = vmatprep.subr.mxu0 0.0
    %2132 = vmatpush1.msra.mxu0 0.0
    %2133 = vmatprep.subr.mxu0 0.0
    %2134 = vmatpush1.msra.mxu0 0.0
    %2135 = vmatprep.subr.mxu0 0.0
    %2136 = vmatpush1.msra.mxu0 0.0
    %2137 = vmatprep.subr.mxu0 0.0
    %2138 = vmatpush1.msra.mxu0 0.0
    %2139 = vmatprep.mubr.f32.mxu0 0.0
    %2140 = vmatmul.mubr.f32.gmra.mrb[0].mxu0 %v2070
    %v2141 = vpop.f32.mrb[0].mxu0
    %v2142 = vadd.f32 0.0, %v2141
    %v2143 = vpop.f32.mrb[0].mxu0
    %v2144 = vadd.f32 0.0, %v2143
    %2145 = vmatprep.mubr.f32.mxu0 0.0
    %2146 = vmatmul.mubr.f32.gmra.mrb[0].mxu0 %v2073
    %v2147 = vpop.f32.mrb[0].mxu0
    %v2148 = vadd.f32 0.0, %v2147
    %v2149 = vpop.f32.mrb[0].mxu0
    %v2150 = vadd.f32 0.0, %v2149
    %2151 = vdwg.mxu0
    %2154 = vrot.lane.b32.xlu0 %v2142, 112
    %v2155 = vpop.permute.xlu0 %2154
    %2156 = vrot.lane.b32.xlu0 %v2148, 112
    %v2157 = vpop.permute.xlu0 %2156
    %2158 = vrot.lane.b32.xlu0 %v2142, 96
    %v2159 = vpop.permute.xlu0 %2158
    %2160 = vrot.lane.b32.xlu0 %v2148, 96
    %v2161 = vpop.permute.xlu0 %2160
    %2162 = vrot.lane.b32.xlu0 %v2142, 80
    %v2163 = vpop.permute.xlu0 %2162
    %2164 = vrot.lane.b32.xlu0 %v2148, 80
    %v2165 = vpop.permute.xlu0 %2164
    %2168 = vrot.lane.b32.xlu0 %v2144, 112
    %v2169 = vpop.permute.xlu0 %2168
    %2170 = vrot.lane.b32.xlu0 %v2150, 112
    %v2171 = vpop.permute.xlu0 %2170
    %2174 = vrot.lane.b32.xlu0 %v2144, 96
    %v2175 = vpop.permute.xlu0 %2174
    %2176 = vrot.lane.b32.xlu0 %v2150, 96
    %v2177 = vpop.permute.xlu0 %2176
    %2180 = vrot.lane.b32.xlu0 %v2144, 80
    %v2181 = vpop.permute.xlu0 %2180
    %2182 = vrot.lane.b32.xlu0 %v2150, 80
    %v2183 = vpop.permute.xlu0 %2182
    %2186 = vrot.lane.b32.xlu0 %v2142, 64
    %v2187 = vpop.permute.xlu0 %2186
    %v2188 = vsel %vm17, %v2142, 0
    %v2190 = vsel %vm17, %v2187, 0
    %2192 = vmatprep.subr.mxu0 0.0
    %2193 = vmatpush1.xpose.msra.mxu0 %v2190
    %2194 = vmatprep.subr.mxu0 0.0
    %2195 = vmatpush1.xpose.msra.mxu0 0.0
    %2196 = vmatprep.subr.mxu0 0.0
    %2197 = vmatpush1.xpose.msra.mxu0 0.0
    %2198 = vmatprep.subr.mxu0 0.0
    %2199 = vmatpush1.xpose.msra.mxu0 0.0
    %2200 = vmatprep.subr.mxu0 0.0
    %2201 = vmatpush1.xpose.msra.mxu0 0.0
    %2202 = vmatprep.subr.mxu0 0.0
    %2203 = vmatpush1.xpose.msra.mxu0 0.0
    %2204 = vmatprep.subr.mxu0 0.0
    %2205 = vmatpush1.xpose.msra.mxu0 0.0
    %2206 = vmatprep.subr.mxu0 0.0
    %2207 = vmatpush1.xpose.msra.mxu0 0.0
    %2208 = vmatprep.subr.mxu0 0.0
    %2209 = vmatpush1.xpose.msra.mxu0 0.0
    %2210 = vmatprep.subr.mxu0 0.0
    %2211 = vmatpush1.xpose.msra.mxu0 0.0
    %2212 = vmatprep.subr.mxu0 0.0
    %2213 = vmatpush1.xpose.msra.mxu0 0.0
    %2214 = vmatprep.subr.mxu0 0.0
    %2215 = vmatpush1.xpose.msra.mxu0 0.0
    %2216 = vmatprep.subr.mxu0 0.0
    %2217 = vmatpush1.xpose.msra.mxu0 0.0
    %2218 = vmatprep.subr.mxu0 0.0
    %2219 = vmatpush1.xpose.msra.mxu0 0.0
    %2220 = vmatprep.subr.mxu0 0.0
    %2221 = vmatpush1.xpose.msra.mxu0 0.0
    %2222 = vmatprep.subr.mxu0 0.0
    %2223 = vmatpush1.xpose.msra.mxu0 0.0
    %2224 = vmatprep.subr.mxu0 0.0
    %2225 = vmatpush1.xpose.msra.mxu0 0.0
    %2226 = vmatprep.subr.mxu0 0.0
    %2227 = vmatpush1.xpose.msra.mxu0 0.0
    %2228 = vmatprep.subr.mxu0 0.0
    %2229 = vmatpush1.xpose.msra.mxu0 0.0
    %2230 = vmatprep.subr.mxu0 0.0
    %2231 = vmatpush1.xpose.msra.mxu0 0.0
    %2232 = vmatprep.subr.mxu0 0.0
    %2233 = vmatpush1.xpose.msra.mxu0 0.0
    %2234 = vmatprep.subr.mxu0 0.0
    %2235 = vmatpush1.xpose.msra.mxu0 0.0
    %2236 = vmatprep.subr.mxu0 0.0
    %2237 = vmatpush1.xpose.msra.mxu0 0.0
    %2238 = vmatprep.subr.mxu0 0.0
    %2239 = vmatpush1.xpose.msra.mxu0 0.0
    %2240 = vmatprep.subr.mxu0 0.0
    %2241 = vmatpush1.xpose.msra.mxu0 0.0
    %2242 = vmatprep.subr.mxu0 0.0
    %2243 = vmatpush1.xpose.msra.mxu0 0.0
    %2244 = vmatprep.subr.mxu0 0.0
    %2245 = vmatpush1.xpose.msra.mxu0 0.0
    %2246 = vmatprep.subr.mxu0 0.0
    %2247 = vmatpush1.xpose.msra.mxu0 0.0
    %2248 = vmatprep.subr.mxu0 0.0
    %2249 = vmatpush1.xpose.msra.mxu0 0.0
    %2250 = vmatprep.subr.mxu0 0.0
    %2251 = vmatpush1.xpose.msra.mxu0 0.0
    %2252 = vmatprep.subr.mxu0 0.0
    %2253 = vmatpush1.xpose.msra.mxu0 0.0
    %2254 = vmatprep.subr.mxu0 0.0
    %2255 = vmatpush1.xpose.msra.mxu0 0.0
    %2256 = vmatprep.mubr.f32.mxu0 0.0
    %2257 = vmatmul.mubr.f32.gmra.mrb[0].mxu0 %v2188
    %v2258 = vpop.f32.mrb[0].mxu0
    %v2259 = vadd.f32 0.0, %v2258
    %v2260 = vpop.f32.mrb[0].mxu0
    %2261 = vdwg.mxu0
    %2262 = vrot.lane.b32.xlu0 %v2148, 64
    %v2263 = vpop.permute.xlu0 %2262
    %v2264 = vsel %vm17, %v2148, 0
    %v2266 = vsel %vm17, %v2263, 0
    %2268 = vmatprep.subr.mxu0 0.0
    %2269 = vmatpush1.xpose.msra.mxu0 %v2266
    %2270 = vmatprep.subr.mxu0 0.0
    %2271 = vmatpush1.xpose.msra.mxu0 0.0
    %2272 = vmatprep.subr.mxu0 0.0
    %2273 = vmatpush1.xpose.msra.mxu0 0.0
    %2274 = vmatprep.subr.mxu0 0.0
    %2275 = vmatpush1.xpose.msra.mxu0 0.0
    %2276 = vmatprep.subr.mxu0 0.0
    %2277 = vmatpush1.xpose.msra.mxu0 0.0
    %2278 = vmatprep.subr.mxu0 0.0
    %2279 = vmatpush1.xpose.msra.mxu0 0.0
    %2280 = vmatprep.subr.mxu0 0.0
    %2281 = vmatpush1.xpose.msra.mxu0 0.0
    %2282 = vmatprep.subr.mxu0 0.0
    %2283 = vmatpush1.xpose.msra.mxu0 0.0
    %2284 = vmatprep.subr.mxu0 0.0
    %2285 = vmatpush1.xpose.msra.mxu0 0.0
    %2286 = vmatprep.subr.mxu0 0.0
    %2287 = vmatpush1.xpose.msra.mxu0 0.0
    %2288 = vmatprep.subr.mxu0 0.0
    %2289 = vmatpush1.xpose.msra.mxu0 0.0
    %2290 = vmatprep.subr.mxu0 0.0
    %2291 = vmatpush1.xpose.msra.mxu0 0.0
    %2292 = vmatprep.subr.mxu0 0.0
    %2293 = vmatpush1.xpose.msra.mxu0 0.0
    %2294 = vmatprep.subr.mxu0 0.0
    %2295 = vmatpush1.xpose.msra.mxu0 0.0
    %2296 = vmatprep.subr.mxu0 0.0
    %2297 = vmatpush1.xpose.msra.mxu0 0.0
    %2298 = vmatprep.subr.mxu0 0.0
    %2299 = vmatpush1.xpose.msra.mxu0 0.0
    %2300 = vmatprep.subr.mxu0 0.0
    %2301 = vmatpush1.xpose.msra.mxu0 0.0
    %2302 = vmatprep.subr.mxu0 0.0
    %2303 = vmatpush1.xpose.msra.mxu0 0.0
    %2304 = vmatprep.subr.mxu0 0.0
    %2305 = vmatpush1.xpose.msra.mxu0 0.0
    %2306 = vmatprep.subr.mxu0 0.0
    %2307 = vmatpush1.xpose.msra.mxu0 0.0
    %2308 = vmatprep.subr.mxu0 0.0
    %2309 = vmatpush1.xpose.msra.mxu0 0.0
    %2310 = vmatprep.subr.mxu0 0.0
    %2311 = vmatpush1.xpose.msra.mxu0 0.0
    %2312 = vmatprep.subr.mxu0 0.0
    %2313 = vmatpush1.xpose.msra.mxu0 0.0
    %2314 = vmatprep.subr.mxu0 0.0
    %2315 = vmatpush1.xpose.msra.mxu0 0.0
    %2316 = vmatprep.subr.mxu0 0.0
    %2317 = vmatpush1.xpose.msra.mxu0 0.0
    %2318 = vmatprep.subr.mxu0 0.0
    %2319 = vmatpush1.xpose.msra.mxu0 0.0
    %2320 = vmatprep.subr.mxu0 0.0
    %2321 = vmatpush1.xpose.msra.mxu0 0.0
    %2322 = vmatprep.subr.mxu0 0.0
    %2323 = vmatpush1.xpose.msra.mxu0 0.0
    %2324 = vmatprep.subr.mxu0 0.0
    %2325 = vmatpush1.xpose.msra.mxu0 0.0
    %2326 = vmatprep.subr.mxu0 0.0
    %2327 = vmatpush1.xpose.msra.mxu0 0.0
    %2328 = vmatprep.subr.mxu0 0.0
    %2329 = vmatpush1.xpose.msra.mxu0 0.0
    %2330 = vmatprep.subr.mxu0 0.0
    %2331 = vmatpush1.xpose.msra.mxu0 0.0
    %2332 = vmatprep.mubr.f32.mxu0 0.0
    %2333 = vmatmul.mubr.f32.gmra.mrb[0].mxu0 %v2264
    %v2334 = vpop.f32.mrb[0].mxu0
    %v2335 = vadd.f32 0.0, %v2334
    %v2336 = vpop.f32.mrb[0].mxu0
    %2337 = vdwg.mxu0
    %2338 = vrot.lane.b32.xlu0 %v2155, 64
    %v2339 = vpop.permute.xlu0 %2338
    %v2340 = vsel %vm17, %v2155, 0
    %v2342 = vsel %vm17, %v2339, 0
    %2344 = vmatprep.subr.mxu0 0.0
    %2345 = vmatpush1.xpose.msra.mxu0 %v2342
    %2346 = vmatprep.subr.mxu0 0.0
    %2347 = vmatpush1.xpose.msra.mxu0 0.0
    %2348 = vmatprep.subr.mxu0 0.0
    %2349 = vmatpush1.xpose.msra.mxu0 0.0
    %2350 = vmatprep.subr.mxu0 0.0
    %2351 = vmatpush1.xpose.msra.mxu0 0.0
    %2352 = vmatprep.subr.mxu0 0.0
    %2353 = vmatpush1.xpose.msra.mxu0 0.0
    %2354 = vmatprep.subr.mxu0 0.0
    %2355 = vmatpush1.xpose.msra.mxu0 0.0
    %2356 = vmatprep.subr.mxu0 0.0
    %2357 = vmatpush1.xpose.msra.mxu0 0.0
    %2358 = vmatprep.subr.mxu0 0.0
    %2359 = vmatpush1.xpose.msra.mxu0 0.0
    %2360 = vmatprep.subr.mxu0 0.0
    %2361 = vmatpush1.xpose.msra.mxu0 0.0
    %2362 = vmatprep.subr.mxu0 0.0
    %2363 = vmatpush1.xpose.msra.mxu0 0.0
    %2364 = vmatprep.subr.mxu0 0.0
    %2365 = vmatpush1.xpose.msra.mxu0 0.0
    %2366 = vmatprep.subr.mxu0 0.0
    %2367 = vmatpush1.xpose.msra.mxu0 0.0
    %2368 = vmatprep.subr.mxu0 0.0
    %2369 = vmatpush1.xpose.msra.mxu0 0.0
    %2370 = vmatprep.subr.mxu0 0.0
    %2371 = vmatpush1.xpose.msra.mxu0 0.0
    %2372 = vmatprep.subr.mxu0 0.0
    %2373 = vmatpush1.xpose.msra.mxu0 0.0
    %2374 = vmatprep.subr.mxu0 0.0
    %2375 = vmatpush1.xpose.msra.mxu0 0.0
    %2376 = vmatprep.subr.mxu0 0.0
    %2377 = vmatpush1.xpose.msra.mxu0 0.0
    %2378 = vmatprep.subr.mxu0 0.0
    %2379 = vmatpush1.xpose.msra.mxu0 0.0
    %2380 = vmatprep.subr.mxu0 0.0
    %2381 = vmatpush1.xpose.msra.mxu0 0.0
    %2382 = vmatprep.subr.mxu0 0.0
    %2383 = vmatpush1.xpose.msra.mxu0 0.0
    %2384 = vmatprep.subr.mxu0 0.0
    %2385 = vmatpush1.xpose.msra.mxu0 0.0
    %2386 = vmatprep.subr.mxu0 0.0
    %2387 = vmatpush1.xpose.msra.mxu0 0.0
    %2388 = vmatprep.subr.mxu0 0.0
    %2389 = vmatpush1.xpose.msra.mxu0 0.0
    %2390 = vmatprep.subr.mxu0 0.0
    %2391 = vmatpush1.xpose.msra.mxu0 0.0
    %2392 = vmatprep.subr.mxu0 0.0
    %2393 = vmatpush1.xpose.msra.mxu0 0.0
    %2394 = vmatprep.subr.mxu0 0.0
    %2395 = vmatpush1.xpose.msra.mxu0 0.0
    %2396 = vmatprep.subr.mxu0 0.0
    %2397 = vmatpush1.xpose.msra.mxu0 0.0
    %2398 = vmatprep.subr.mxu0 0.0
    %2399 = vmatpush1.xpose.msra.mxu0 0.0
    %2400 = vmatprep.subr.mxu0 0.0
    %2401 = vmatpush1.xpose.msra.mxu0 0.0
    %2402 = vmatprep.subr.mxu0 0.0
    %2403 = vmatpush1.xpose.msra.mxu0 0.0
    %2404 = vmatprep.subr.mxu0 0.0
    %2405 = vmatpush1.xpose.msra.mxu0 0.0
    %2406 = vmatprep.subr.mxu0 0.0
    %2407 = vmatpush1.xpose.msra.mxu0 0.0
    %2408 = vmatprep.mubr.f32.mxu0 0.0
    %2409 = vmatmul.mubr.f32.gmra.mrb[0].mxu0 %v2340
    %v2410 = vpop.f32.mrb[0].mxu0
    %v2411 = vadd.f32 0.0, %v2410
    %v2412 = vpop.f32.mrb[0].mxu0
    %2413 = vdwg.mxu0
    %2414 = vrot.lane.b32.xlu0 %v2157, 64
    %v2415 = vpop.permute.xlu0 %2414
    %v2416 = vsel %vm17, %v2157, 0
    %v2418 = vsel %vm17, %v2415, 0
    %2420 = vmatprep.subr.mxu0 0.0
    %2421 = vmatpush1.xpose.msra.mxu0 %v2418
    %2422 = vmatprep.subr.mxu0 0.0
    %2423 = vmatpush1.xpose.msra.mxu0 0.0
    %2424 = vmatprep.subr.mxu0 0.0
    %2425 = vmatpush1.xpose.msra.mxu0 0.0
    %2426 = vmatprep.subr.mxu0 0.0
    %2427 = vmatpush1.xpose.msra.mxu0 0.0
    %2428 = vmatprep.subr.mxu0 0.0
    %2429 = vmatpush1.xpose.msra.mxu0 0.0
    %2430 = vmatprep.subr.mxu0 0.0
    %2431 = vmatpush1.xpose.msra.mxu0 0.0
    %2432 = vmatprep.subr.mxu0 0.0
    %2433 = vmatpush1.xpose.msra.mxu0 0.0
    %2434 = vmatprep.subr.mxu0 0.0
    %2435 = vmatpush1.xpose.msra.mxu0 0.0
    %2436 = vmatprep.subr.mxu0 0.0
    %2437 = vmatpush1.xpose.msra.mxu0 0.0
    %2438 = vmatprep.subr.mxu0 0.0
    %2439 = vmatpush1.xpose.msra.mxu0 0.0
    %2440 = vmatprep.subr.mxu0 0.0
    %2441 = vmatpush1.xpose.msra.mxu0 0.0
    %2442 = vmatprep.subr.mxu0 0.0
    %2443 = vmatpush1.xpose.msra.mxu0 0.0
    %2444 = vmatprep.subr.mxu0 0.0
    %2445 = vmatpush1.xpose.msra.mxu0 0.0
    %2446 = vmatprep.subr.mxu0 0.0
    %2447 = vmatpush1.xpose.msra.mxu0 0.0
    %2448 = vmatprep.subr.mxu0 0.0
    %2449 = vmatpush1.xpose.msra.mxu0 0.0
    %2450 = vmatprep.subr.mxu0 0.0
    %2451 = vmatpush1.xpose.msra.mxu0 0.0
    %2452 = vmatprep.subr.mxu0 0.0
    %2453 = vmatpush1.xpose.msra.mxu0 0.0
    %2454 = vmatprep.subr.mxu0 0.0
    %2455 = vmatpush1.xpose.msra.mxu0 0.0
    %2456 = vmatprep.subr.mxu0 0.0
    %2457 = vmatpush1.xpose.msra.mxu0 0.0
    %2458 = vmatprep.subr.mxu0 0.0
    %2459 = vmatpush1.xpose.msra.mxu0 0.0
    %2460 = vmatprep.subr.mxu0 0.0
    %2461 = vmatpush1.xpose.msra.mxu0 0.0
    %2462 = vmatprep.subr.mxu0 0.0
    %2463 = vmatpush1.xpose.msra.mxu0 0.0
    %2464 = vmatprep.subr.mxu0 0.0
    %2465 = vmatpush1.xpose.msra.mxu0 0.0
    %2466 = vmatprep.subr.mxu0 0.0
    %2467 = vmatpush1.xpose.msra.mxu0 0.0
    %2468 = vmatprep.subr.mxu0 0.0
    %2469 = vmatpush1.xpose.msra.mxu0 0.0
    %2470 = vmatprep.subr.mxu0 0.0
    %2471 = vmatpush1.xpose.msra.mxu0 0.0
    %2472 = vmatprep.subr.mxu0 0.0
    %2473 = vmatpush1.xpose.msra.mxu0 0.0
    %2474 = vmatprep.subr.mxu0 0.0
    %2475 = vmatpush1.xpose.msra.mxu0 0.0
    %2476 = vmatprep.subr.mxu0 0.0
    %2477 = vmatpush1.xpose.msra.mxu0 0.0
    %2478 = vmatprep.subr.mxu0 0.0
    %2479 = vmatpush1.xpose.msra.mxu0 0.0
    %2480 = vmatprep.subr.mxu0 0.0
    %2481 = vmatpush1.xpose.msra.mxu0 0.0
    %2482 = vmatprep.subr.mxu0 0.0
    %2483 = vmatpush1.xpose.msra.mxu0 0.0
    %2484 = vmatprep.mubr.f32.mxu0 0.0
    %2485 = vmatmul.mubr.f32.gmra.mrb[0].mxu0 %v2416
    %v2486 = vpop.f32.mrb[0].mxu0
    %v2487 = vadd.f32 0.0, %v2486
    %v2488 = vpop.f32.mrb[0].mxu0
    %2489 = vdwg.mxu0
    %2490 = vrot.lane.b32.xlu0 %v2159, 64
    %v2491 = vpop.permute.xlu0 %2490
    %v2492 = vsel %vm17, %v2159, 0
    %v2494 = vsel %vm17, %v2491, 0
    %2496 = vmatprep.subr.mxu0 0.0
    %2497 = vmatpush1.xpose.msra.mxu0 %v2494
    %2498 = vmatprep.subr.mxu0 0.0
    %2499 = vmatpush1.xpose.msra.mxu0 0.0
    %2500 = vmatprep.subr.mxu0 0.0
    %2501 = vmatpush1.xpose.msra.mxu0 0.0
    %2502 = vmatprep.subr.mxu0 0.0
    %2503 = vmatpush1.xpose.msra.mxu0 0.0
    %2504 = vmatprep.subr.mxu0 0.0
    %2505 = vmatpush1.xpose.msra.mxu0 0.0
    %2506 = vmatprep.subr.mxu0 0.0
    %2507 = vmatpush1.xpose.msra.mxu0 0.0
    %2508 = vmatprep.subr.mxu0 0.0
    %2509 = vmatpush1.xpose.msra.mxu0 0.0
    %2510 = vmatprep.subr.mxu0 0.0
    %2511 = vmatpush1.xpose.msra.mxu0 0.0
    %2512 = vmatprep.subr.mxu0 0.0
    %2513 = vmatpush1.xpose.msra.mxu0 0.0
    %2514 = vmatprep.subr.mxu0 0.0
    %2515 = vmatpush1.xpose.msra.mxu0 0.0
    %2516 = vmatprep.subr.mxu0 0.0
    %2517 = vmatpush1.xpose.msra.mxu0 0.0
    %2518 = vmatprep.subr.mxu0 0.0
    %2519 = vmatpush1.xpose.msra.mxu0 0.0
    %2520 = vmatprep.subr.mxu0 0.0
    %2521 = vmatpush1.xpose.msra.mxu0 0.0
    %2522 = vmatprep.subr.mxu0 0.0
    %2523 = vmatpush1.xpose.msra.mxu0 0.0
    %2524 = vmatprep.subr.mxu0 0.0
    %2525 = vmatpush1.xpose.msra.mxu0 0.0
    %2526 = vmatprep.subr.mxu0 0.0
    %2527 = vmatpush1.xpose.msra.mxu0 0.0
    %2528 = vmatprep.subr.mxu0 0.0
    %2529 = vmatpush1.xpose.msra.mxu0 0.0
    %2530 = vmatprep.subr.mxu0 0.0
    %2531 = vmatpush1.xpose.msra.mxu0 0.0
    %2532 = vmatprep.subr.mxu0 0.0
    %2533 = vmatpush1.xpose.msra.mxu0 0.0
    %2534 = vmatprep.subr.mxu0 0.0
    %2535 = vmatpush1.xpose.msra.mxu0 0.0
    %2536 = vmatprep.subr.mxu0 0.0
    %2537 = vmatpush1.xpose.msra.mxu0 0.0
    %2538 = vmatprep.subr.mxu0 0.0
    %2539 = vmatpush1.xpose.msra.mxu0 0.0
    %2540 = vmatprep.subr.mxu0 0.0
    %2541 = vmatpush1.xpose.msra.mxu0 0.0
    %2542 = vmatprep.subr.mxu0 0.0
    %2543 = vmatpush1.xpose.msra.mxu0 0.0
    %2544 = vmatprep.subr.mxu0 0.0
    %2545 = vmatpush1.xpose.msra.mxu0 0.0
    %2546 = vmatprep.subr.mxu0 0.0
    %2547 = vmatpush1.xpose.msra.mxu0 0.0
    %2548 = vmatprep.subr.mxu0 0.0
    %2549 = vmatpush1.xpose.msra.mxu0 0.0
    %2550 = vmatprep.subr.mxu0 0.0
    %2551 = vmatpush1.xpose.msra.mxu0 0.0
    %2552 = vmatprep.subr.mxu0 0.0
    %2553 = vmatpush1.xpose.msra.mxu0 0.0
    %2554 = vmatprep.subr.mxu0 0.0
    %2555 = vmatpush1.xpose.msra.mxu0 0.0
    %2556 = vmatprep.subr.mxu0 0.0
    %2557 = vmatpush1.xpose.msra.mxu0 0.0
    %2558 = vmatprep.subr.mxu0 0.0
    %2559 = vmatpush1.xpose.msra.mxu0 0.0
    %2560 = vmatprep.mubr.f32.mxu0 0.0
    %2561 = vmatmul.mubr.f32.gmra.mrb[0].mxu0 %v2492
    %v2562 = vpop.f32.mrb[0].mxu0
    %v2563 = vadd.f32 0.0, %v2562
    %v2564 = vpop.f32.mrb[0].mxu0
    %2565 = vdwg.mxu0
    %2566 = vrot.lane.b32.xlu0 %v2161, 64
    %v2567 = vpop.permute.xlu0 %2566
    %v2568 = vsel %vm17, %v2161, 0
    %v2570 = vsel %vm17, %v2567, 0
    %2572 = vmatprep.subr.mxu0 0.0
    %2573 = vmatpush1.xpose.msra.mxu0 %v2570
    %2574 = vmatprep.subr.mxu0 0.0
    %2575 = vmatpush1.xpose.msra.mxu0 0.0
    %2576 = vmatprep.subr.mxu0 0.0
    %2577 = vmatpush1.xpose.msra.mxu0 0.0
    %2578 = vmatprep.subr.mxu0 0.0
    %2579 = vmatpush1.xpose.msra.mxu0 0.0
    %2580 = vmatprep.subr.mxu0 0.0
    %2581 = vmatpush1.xpose.msra.mxu0 0.0
    %2582 = vmatprep.subr.mxu0 0.0
    %2583 = vmatpush1.xpose.msra.mxu0 0.0
    %2584 = vmatprep.subr.mxu0 0.0
    %2585 = vmatpush1.xpose.msra.mxu0 0.0
    %2586 = vmatprep.subr.mxu0 0.0
    %2587 = vmatpush1.xpose.msra.mxu0 0.0
    %2588 = vmatprep.subr.mxu0 0.0
    %2589 = vmatpush1.xpose.msra.mxu0 0.0
    %2590 = vmatprep.subr.mxu0 0.0
    %2591 = vmatpush1.xpose.msra.mxu0 0.0
    %2592 = vmatprep.subr.mxu0 0.0
    %2593 = vmatpush1.xpose.msra.mxu0 0.0
    %2594 = vmatprep.subr.mxu0 0.0
    %2595 = vmatpush1.xpose.msra.mxu0 0.0
    %2596 = vmatprep.subr.mxu0 0.0
    %2597 = vmatpush1.xpose.msra.mxu0 0.0
    %2598 = vmatprep.subr.mxu0 0.0
    %2599 = vmatpush1.xpose.msra.mxu0 0.0
    %2600 = vmatprep.subr.mxu0 0.0
    %2601 = vmatpush1.xpose.msra.mxu0 0.0
    %2602 = vmatprep.subr.mxu0 0.0
    %2603 = vmatpush1.xpose.msra.mxu0 0.0
    %2604 = vmatprep.subr.mxu0 0.0
    %2605 = vmatpush1.xpose.msra.mxu0 0.0
    %2606 = vmatprep.subr.mxu0 0.0
    %2607 = vmatpush1.xpose.msra.mxu0 0.0
    %2608 = vmatprep.subr.mxu0 0.0
    %2609 = vmatpush1.xpose.msra.mxu0 0.0
    %2610 = vmatprep.subr.mxu0 0.0
    %2611 = vmatpush1.xpose.msra.mxu0 0.0
    %2612 = vmatprep.subr.mxu0 0.0
    %2613 = vmatpush1.xpose.msra.mxu0 0.0
    %2614 = vmatprep.subr.mxu0 0.0
    %2615 = vmatpush1.xpose.msra.mxu0 0.0
    %2616 = vmatprep.subr.mxu0 0.0
    %2617 = vmatpush1.xpose.msra.mxu0 0.0
    %2618 = vmatprep.subr.mxu0 0.0
    %2619 = vmatpush1.xpose.msra.mxu0 0.0
    %2620 = vmatprep.subr.mxu0 0.0
    %2621 = vmatpush1.xpose.msra.mxu0 0.0
    %2622 = vmatprep.subr.mxu0 0.0
    %2623 = vmatpush1.xpose.msra.mxu0 0.0
    %2624 = vmatprep.subr.mxu0 0.0
    %2625 = vmatpush1.xpose.msra.mxu0 0.0
    %2626 = vmatprep.subr.mxu0 0.0
    %2627 = vmatpush1.xpose.msra.mxu0 0.0
    %2628 = vmatprep.subr.mxu0 0.0
    %2629 = vmatpush1.xpose.msra.mxu0 0.0
    %2630 = vmatprep.subr.mxu0 0.0
    %2631 = vmatpush1.xpose.msra.mxu0 0.0
    %2632 = vmatprep.subr.mxu0 0.0
    %2633 = vmatpush1.xpose.msra.mxu0 0.0
    %2634 = vmatprep.subr.mxu0 0.0
    %2635 = vmatpush1.xpose.msra.mxu0 0.0
    %2636 = vmatprep.mubr.f32.mxu0 0.0
    %2637 = vmatmul.mubr.f32.gmra.mrb[0].mxu0 %v2568
    %v2638 = vpop.f32.mrb[0].mxu0
    %v2639 = vadd.f32 0.0, %v2638
    %v2640 = vpop.f32.mrb[0].mxu0
    %2641 = vdwg.mxu0
    %2642 = vrot.lane.b32.xlu0 %v2163, 64
    %v2643 = vpop.permute.xlu0 %2642
    %v2644 = vsel %vm17, %v2163, 0
    %v2646 = vsel %vm17, %v2643, 0
    %2648 = vmatprep.subr.mxu0 0.0
    %2649 = vmatpush1.xpose.msra.mxu0 %v2646
    %2650 = vmatprep.subr.mxu0 0.0
    %2651 = vmatpush1.xpose.msra.mxu0 0.0
    %2652 = vmatprep.subr.mxu0 0.0
    %2653 = vmatpush1.xpose.msra.mxu0 0.0
    %2654 = vmatprep.subr.mxu0 0.0
    %2655 = vmatpush1.xpose.msra.mxu0 0.0
    %2656 = vmatprep.subr.mxu0 0.0
    %2657 = vmatpush1.xpose.msra.mxu0 0.0
    %2658 = vmatprep.subr.mxu0 0.0
    %2659 = vmatpush1.xpose.msra.mxu0 0.0
    %2660 = vmatprep.subr.mxu0 0.0
    %2661 = vmatpush1.xpose.msra.mxu0 0.0
    %2662 = vmatprep.subr.mxu0 0.0
    %2663 = vmatpush1.xpose.msra.mxu0 0.0
    %2664 = vmatprep.subr.mxu0 0.0
    %2665 = vmatpush1.xpose.msra.mxu0 0.0
    %2666 = vmatprep.subr.mxu0 0.0
    %2667 = vmatpush1.xpose.msra.mxu0 0.0
    %2668 = vmatprep.subr.mxu0 0.0
    %2669 = vmatpush1.xpose.msra.mxu0 0.0
    %2670 = vmatprep.subr.mxu0 0.0
    %2671 = vmatpush1.xpose.msra.mxu0 0.0
    %2672 = vmatprep.subr.mxu0 0.0
    %2673 = vmatpush1.xpose.msra.mxu0 0.0
    %2674 = vmatprep.subr.mxu0 0.0
    %2675 = vmatpush1.xpose.msra.mxu0 0.0
    %2676 = vmatprep.subr.mxu0 0.0
    %2677 = vmatpush1.xpose.msra.mxu0 0.0
    %2678 = vmatprep.subr.mxu0 0.0
    %2679 = vmatpush1.xpose.msra.mxu0 0.0
    %2680 = vmatprep.subr.mxu0 0.0
    %2681 = vmatpush1.xpose.msra.mxu0 0.0
    %2682 = vmatprep.subr.mxu0 0.0
    %2683 = vmatpush1.xpose.msra.mxu0 0.0
    %2684 = vmatprep.subr.mxu0 0.0
    %2685 = vmatpush1.xpose.msra.mxu0 0.0
    %2686 = vmatprep.subr.mxu0 0.0
    %2687 = vmatpush1.xpose.msra.mxu0 0.0
    %2688 = vmatprep.subr.mxu0 0.0
    %2689 = vmatpush1.xpose.msra.mxu0 0.0
    %2690 = vmatprep.subr.mxu0 0.0
    %2691 = vmatpush1.xpose.msra.mxu0 0.0
    %2692 = vmatprep.subr.mxu0 0.0
    %2693 = vmatpush1.xpose.msra.mxu0 0.0
    %2694 = vmatprep.subr.mxu0 0.0
    %2695 = vmatpush1.xpose.msra.mxu0 0.0
    %2696 = vmatprep.subr.mxu0 0.0
    %2697 = vmatpush1.xpose.msra.mxu0 0.0
    %2698 = vmatprep.subr.mxu0 0.0
    %2699 = vmatpush1.xpose.msra.mxu0 0.0
    %2700 = vmatprep.subr.mxu0 0.0
    %2701 = vmatpush1.xpose.msra.mxu0 0.0
    %2702 = vmatprep.subr.mxu0 0.0
    %2703 = vmatpush1.xpose.msra.mxu0 0.0
    %2704 = vmatprep.subr.mxu0 0.0
    %2705 = vmatpush1.xpose.msra.mxu0 0.0
    %2706 = vmatprep.subr.mxu0 0.0
    %2707 = vmatpush1.xpose.msra.mxu0 0.0
    %2708 = vmatprep.subr.mxu0 0.0
    %2709 = vmatpush1.xpose.msra.mxu0 0.0
    %2710 = vmatprep.subr.mxu0 0.0
    %2711 = vmatpush1.xpose.msra.mxu0 0.0
    %2712 = vmatprep.mubr.f32.mxu0 0.0
    %2713 = vmatmul.mubr.f32.gmra.mrb[0].mxu0 %v2644
    %v2714 = vpop.f32.mrb[0].mxu0
    %v2715 = vadd.f32 0.0, %v2714
    %v2716 = vpop.f32.mrb[0].mxu0
    %2717 = vdwg.mxu0
    %2718 = vrot.lane.b32.xlu0 %v2165, 64
    %v2719 = vpop.permute.xlu0 %2718
    %v2720 = vsel %vm17, %v2165, 0
    %v2722 = vsel %vm17, %v2719, 0
    %2724 = vmatprep.subr.mxu0 0.0
    %2725 = vmatpush1.xpose.msra.mxu0 %v2722
    %2726 = vmatprep.subr.mxu0 0.0
    %2727 = vmatpush1.xpose.msra.mxu0 0.0
    %2728 = vmatprep.subr.mxu0 0.0
    %2729 = vmatpush1.xpose.msra.mxu0 0.0
    %2730 = vmatprep.subr.mxu0 0.0
    %2731 = vmatpush1.xpose.msra.mxu0 0.0
    %2732 = vmatprep.subr.mxu0 0.0
    %2733 = vmatpush1.xpose.msra.mxu0 0.0
    %2734 = vmatprep.subr.mxu0 0.0
    %2735 = vmatpush1.xpose.msra.mxu0 0.0
    %2736 = vmatprep.subr.mxu0 0.0
    %2737 = vmatpush1.xpose.msra.mxu0 0.0
    %2738 = vmatprep.subr.mxu0 0.0
    %2739 = vmatpush1.xpose.msra.mxu0 0.0
    %2740 = vmatprep.subr.mxu0 0.0
    %2741 = vmatpush1.xpose.msra.mxu0 0.0
    %2742 = vmatprep.subr.mxu0 0.0
    %2743 = vmatpush1.xpose.msra.mxu0 0.0
    %2744 = vmatprep.subr.mxu0 0.0
    %2745 = vmatpush1.xpose.msra.mxu0 0.0
    %2746 = vmatprep.subr.mxu0 0.0
    %2747 = vmatpush1.xpose.msra.mxu0 0.0
    %2748 = vmatprep.subr.mxu0 0.0
    %2749 = vmatpush1.xpose.msra.mxu0 0.0
    %2750 = vmatprep.subr.mxu0 0.0
    %2751 = vmatpush1.xpose.msra.mxu0 0.0
    %2752 = vmatprep.subr.mxu0 0.0
    %2753 = vmatpush1.xpose.msra.mxu0 0.0
    %2754 = vmatprep.subr.mxu0 0.0
    %2755 = vmatpush1.xpose.msra.mxu0 0.0
    %2756 = vmatprep.subr.mxu0 0.0
    %2757 = vmatpush1.xpose.msra.mxu0 0.0
    %2758 = vmatprep.subr.mxu0 0.0
    %2759 = vmatpush1.xpose.msra.mxu0 0.0
    %2760 = vmatprep.subr.mxu0 0.0
    %2761 = vmatpush1.xpose.msra.mxu0 0.0
    %2762 = vmatprep.subr.mxu0 0.0
    %2763 = vmatpush1.xpose.msra.mxu0 0.0
    %2764 = vmatprep.subr.mxu0 0.0
    %2765 = vmatpush1.xpose.msra.mxu0 0.0
    %2766 = vmatprep.subr.mxu0 0.0
    %2767 = vmatpush1.xpose.msra.mxu0 0.0
    %2768 = vmatprep.subr.mxu0 0.0
    %2769 = vmatpush1.xpose.msra.mxu0 0.0
    %2770 = vmatprep.subr.mxu0 0.0
    %2771 = vmatpush1.xpose.msra.mxu0 0.0
    %2772 = vmatprep.subr.mxu0 0.0
    %2773 = vmatpush1.xpose.msra.mxu0 0.0
    %2774 = vmatprep.subr.mxu0 0.0
    %2775 = vmatpush1.xpose.msra.mxu0 0.0
    %2776 = vmatprep.subr.mxu0 0.0
    %2777 = vmatpush1.xpose.msra.mxu0 0.0
    %2778 = vmatprep.subr.mxu0 0.0
    %2779 = vmatpush1.xpose.msra.mxu0 0.0
    %2780 = vmatprep.subr.mxu0 0.0
    %2781 = vmatpush1.xpose.msra.mxu0 0.0
    %2782 = vmatprep.subr.mxu0 0.0
    %2783 = vmatpush1.xpose.msra.mxu0 0.0
    %2784 = vmatprep.subr.mxu0 0.0
    %2785 = vmatpush1.xpose.msra.mxu0 0.0
    %2786 = vmatprep.subr.mxu0 0.0
    %2787 = vmatpush1.xpose.msra.mxu0 0.0
    %2788 = vmatprep.mubr.f32.mxu0 0.0
    %2789 = vmatmul.mubr.f32.gmra.mrb[0].mxu0 %v2720
    %v2790 = vpop.f32.mrb[0].mxu0
    %v2791 = vadd.f32 0.0, %v2790
    %v2792 = vpop.f32.mrb[0].mxu0
    %2793 = vdwg.mxu0
    %v2794 = vmul.f32 %v2259, 0.25
    %v2795 = vmul.f32 %v2335, 0.25
    %v2796 = vmul.f32 %v2411, 0.25
    %v2797 = vmul.f32 %v2487, 0.25
    %v2798 = vmul.f32 %v2563, 0.25
    %v2799 = vmul.f32 %v2639, 0.25
    %v2800 = vmul.f32 %v2715, 0.25
    %v2801 = vmul.f32 %v2791, 0.25
    %v2802 = vsel %vm238, %v2794, -inf
    %2803 = vmax.xlane.f32.xlu0 %v2802
    %v2804 = vpop.xlane.xlu0 %2803
    %v2805 = vsel %vm238, %v2795, -inf
    %2806 = vmax.xlane.f32.xlu0 %v2805
    %v2807 = vpop.xlane.xlu0 %2806
    %v2808 = vsel %vm238, %v2796, -inf
    %2809 = vmax.xlane.f32.xlu0 %v2808
    %v2810 = vpop.xlane.xlu0 %2809
    %v2811 = vsel %vm238, %v2797, -inf
    %2812 = vmax.xlane.f32.xlu0 %v2811
    %v2813 = vpop.xlane.xlu0 %2812
    %v2814 = vsel %vm238, %v2798, -inf
    %2815 = vmax.xlane.f32.xlu0 %v2814
    %v2816 = vpop.xlane.xlu0 %2815
    %v2817 = vsel %vm238, %v2799, -inf
    %2818 = vmax.xlane.f32.xlu0 %v2817
    %v2819 = vpop.xlane.xlu0 %2818
    %v2820 = vsel %vm238, %v2800, -inf
    %2821 = vmax.xlane.f32.xlu0 %v2820
    %v2822 = vpop.xlane.xlu0 %2821
    %v2823 = vsel %vm238, %v2801, -inf
    %2824 = vmax.xlane.f32.xlu0 %v2823
    %v2825 = vpop.xlane.xlu0 %2824
    %v2826 = vsub.f32 %v2794, %v2804
    %v2827 = vsub.f32 %v2795, %v2807
    %v2828 = vsub.f32 %v2796, %v2810
    %v2829 = vsub.f32 %v2797, %v2813
    %v2830 = vsub.f32 %v2798, %v2816
    %v2831 = vsub.f32 %v2799, %v2819
    %v2832 = vsub.f32 %v2800, %v2822
    %v2833 = vsub.f32 %v2801, %v2825
    %v2834 = vmul.f32 %v2826, 1.442695
    %v2835 = vpow.pop %v2834
    %v2836 = vmul.f32 %v2827, 1.442695
    %v2837 = vpow.pop %v2836
    %v2838 = vmul.f32 %v2828, 1.442695
    %v2839 = vpow.pop %v2838
    %v2840 = vmul.f32 %v2829, 1.442695
    %v2841 = vpow.pop %v2840
    %v2842 = vmul.f32 %v2830, 1.442695
    %v2843 = vpow.pop %v2842
    %v2844 = vmul.f32 %v2831, 1.442695
    %v2845 = vpow.pop %v2844
    %v2846 = vmul.f32 %v2832, 1.442695
    %v2847 = vpow.pop %v2846
    %v2848 = vmul.f32 %v2833, 1.442695
    %v2849 = vpow.pop %v2848
    %v2850 = vsel %vm238, %v2835, 0.0
    %2851 = vadd.xlane.f32.xlu0 %v2850
    %v2852 = vpop.xlane.xlu0 %2851
    %v2853 = vsel %vm238, %v2837, 0.0
    %2854 = vadd.xlane.f32.xlu0 %v2853
    %v2855 = vpop.xlane.xlu0 %2854
    %v2856 = vsel %vm238, %v2839, 0.0
    %2857 = vadd.xlane.f32.xlu0 %v2856
    %v2858 = vpop.xlane.xlu0 %2857
    %v2859 = vsel %vm238, %v2841, 0.0
    %2860 = vadd.xlane.f32.xlu0 %v2859
    %v2861 = vpop.xlane.xlu0 %2860
    %v2862 = vsel %vm238, %v2843, 0.0
    %2863 = vadd.xlane.f32.xlu0 %v2862
    %v2864 = vpop.xlane.xlu0 %2863
    %v2865 = vsel %vm238, %v2845, 0.0
    %2866 = vadd.xlane.f32.xlu0 %v2865
    %v2867 = vpop.xlane.xlu0 %2866
    %v2868 = vsel %vm238, %v2847, 0.0
    %2869 = vadd.xlane.f32.xlu0 %v2868
    %v2870 = vpop.xlane.xlu0 %2869
    %v2871 = vsel %vm238, %v2849, 0.0
    %2872 = vadd.xlane.f32.xlu0 %v2871
    %v2873 = vpop.xlane.xlu0 %2872
    %v2874 = vrcp.pop %v2852
    %v2875 = vmul.f32 %v2835, %v2874
    %v2876 = vrcp.pop %v2855
    %v2877 = vmul.f32 %v2837, %v2876
    %v2878 = vrcp.pop %v2858
    %v2879 = vmul.f32 %v2839, %v2878
    %v2880 = vrcp.pop %v2861
    %v2881 = vmul.f32 %v2841, %v2880
    %v2882 = vrcp.pop %v2864
    %v2883 = vmul.f32 %v2843, %v2882
    %v2884 = vrcp.pop %v2867
    %v2885 = vmul.f32 %v2845, %v2884
    %v2886 = vrcp.pop %v2870
    %v2887 = vmul.f32 %v2847, %v2886
    %v2888 = vrcp.pop %v2873
    %v2889 = vmul.f32 %v2849, %v2888
    %v2891 = vsel %vm238, %v2875, 0
    %2893 = vmatprep.subr.mxu0 0.0
    %2894 = vmatpush1.msra.mxu0 %v2144
    %2895 = vmatprep.subr.mxu0 0.0
    %2896 = vmatpush1.msra.mxu0 0.0
    %2897 = vmatprep.subr.mxu0 0.0
    %2898 = vmatpush1.msra.mxu0 0.0
    %2899 = vmatprep.subr.mxu0 0.0
    %2900 = vmatpush1.msra.mxu0 0.0
    %2901 = vmatprep.subr.mxu0 0.0
    %2902 = vmatpush1.msra.mxu0 0.0
    %2903 = vmatprep.subr.mxu0 0.0
    %2904 = vmatpush1.msra.mxu0 0.0
    %2905 = vmatprep.subr.mxu0 0.0
    %2906 = vmatpush1.msra.mxu0 0.0
    %2907 = vmatprep.subr.mxu0 0.0
    %2908 = vmatpush1.msra.mxu0 0.0
    %2909 = vmatprep.subr.mxu0 0.0
    %2910 = vmatpush1.msra.mxu0 0.0
    %2911 = vmatprep.subr.mxu0 0.0
    %2912 = vmatpush1.msra.mxu0 0.0
    %2913 = vmatprep.subr.mxu0 0.0
    %2914 = vmatpush1.msra.mxu0 0.0
    %2915 = vmatprep.subr.mxu0 0.0
    %2916 = vmatpush1.msra.mxu0 0.0
    %2917 = vmatprep.subr.mxu0 0.0
    %2918 = vmatpush1.msra.mxu0 0.0
    %2919 = vmatprep.subr.mxu0 0.0
    %2920 = vmatpush1.msra.mxu0 0.0
    %2921 = vmatprep.subr.mxu0 0.0
    %2922 = vmatpush1.msra.mxu0 0.0
    %2923 = vmatprep.subr.mxu0 0.0
    %2924 = vmatpush1.msra.mxu0 0.0
    %2925 = vmatprep.subr.mxu0 0.0
    %2926 = vmatpush1.msra.mxu0 0.0
    %2927 = vmatprep.subr.mxu0 0.0
    %2928 = vmatpush1.msra.mxu0 0.0
    %2929 = vmatprep.subr.mxu0 0.0
    %2930 = vmatpush1.msra.mxu0 0.0
    %2931 = vmatprep.subr.mxu0 0.0
    %2932 = vmatpush1.msra.mxu0 0.0
    %2933 = vmatprep.subr.mxu0 0.0
    %2934 = vmatpush1.msra.mxu0 0.0
    %2935 = vmatprep.subr.mxu0 0.0
    %2936 = vmatpush1.msra.mxu0 0.0
    %2937 = vmatprep.subr.mxu0 0.0
    %2938 = vmatpush1.msra.mxu0 0.0
    %2939 = vmatprep.subr.mxu0 0.0
    %2940 = vmatpush1.msra.mxu0 0.0
    %2941 = vmatprep.subr.mxu0 0.0
    %2942 = vmatpush1.msra.mxu0 0.0
    %2943 = vmatprep.subr.mxu0 0.0
    %2944 = vmatpush1.msra.mxu0 0.0
    %2945 = vmatprep.subr.mxu0 0.0
    %2946 = vmatpush1.msra.mxu0 0.0
    %2947 = vmatprep.subr.mxu0 0.0
    %2948 = vmatpush1.msra.mxu0 0.0
    %2949 = vmatprep.subr.mxu0 0.0
    %2950 = vmatpush1.msra.mxu0 0.0
    %2951 = vmatprep.subr.mxu0 0.0
    %2952 = vmatpush1.msra.mxu0 0.0
    %2953 = vmatprep.subr.mxu0 0.0
    %2954 = vmatpush1.msra.mxu0 0.0
    %2955 = vmatprep.subr.mxu0 0.0
    %2956 = vmatpush1.msra.mxu0 0.0
    %2957 = vmatprep.mubr.f32.mxu0 0.0
    %2958 = vmatmul.mubr.f32.gmra.mrb[0].mxu0 %v2891
    %v2959 = vpop.f32.mrb[0].mxu0
    %v2960 = vadd.f32 0.0, %v2959
    %v2961 = vpop.f32.mrb[0].mxu0
    %2962 = vdwg.mxu0
    %v2964 = vsel %vm238, %v2877, 0
    %2966 = vmatprep.subr.mxu0 0.0
    %2967 = vmatpush1.msra.mxu0 %v2150
    %2968 = vmatprep.subr.mxu0 0.0
    %2969 = vmatpush1.msra.mxu0 0.0
    %2970 = vmatprep.subr.mxu0 0.0
    %2971 = vmatpush1.msra.mxu0 0.0
    %2972 = vmatprep.subr.mxu0 0.0
    %2973 = vmatpush1.msra.mxu0 0.0
    %2974 = vmatprep.subr.mxu0 0.0
    %2975 = vmatpush1.msra.mxu0 0.0
    %2976 = vmatprep.subr.mxu0 0.0
    %2977 = vmatpush1.msra.mxu0 0.0
    %2978 = vmatprep.subr.mxu0 0.0
    %2979 = vmatpush1.msra.mxu0 0.0
    %2980 = vmatprep.subr.mxu0 0.0
    %2981 = vmatpush1.msra.mxu0 0.0
    %2982 = vmatprep.subr.mxu0 0.0
    %2983 = vmatpush1.msra.mxu0 0.0
    %2984 = vmatprep.subr.mxu0 0.0
    %2985 = vmatpush1.msra.mxu0 0.0
    %2986 = vmatprep.subr.mxu0 0.0
    %2987 = vmatpush1.msra.mxu0 0.0
    %2988 = vmatprep.subr.mxu0 0.0
    %2989 = vmatpush1.msra.mxu0 0.0
    %2990 = vmatprep.subr.mxu0 0.0
    %2991 = vmatpush1.msra.mxu0 0.0
    %2992 = vmatprep.subr.mxu0 0.0
    %2993 = vmatpush1.msra.mxu0 0.0
    %2994 = vmatprep.subr.mxu0 0.0
    %2995 = vmatpush1.msra.mxu0 0.0
    %2996 = vmatprep.subr.mxu0 0.0
    %2997 = vmatpush1.msra.mxu0 0.0
    %2998 = vmatprep.subr.mxu0 0.0
    %2999 = vmatpush1.msra.mxu0 0.0
    %3000 = vmatprep.subr.mxu0 0.0
    %3001 = vmatpush1.msra.mxu0 0.0
    %3002 = vmatprep.subr.mxu0 0.0
    %3003 = vmatpush1.msra.mxu0 0.0
    %3004 = vmatprep.subr.mxu0 0.0
    %3005 = vmatpush1.msra.mxu0 0.0
    %3006 = vmatprep.subr.mxu0 0.0
    %3007 = vmatpush1.msra.mxu0 0.0
    %3008 = vmatprep.subr.mxu0 0.0
    %3009 = vmatpush1.msra.mxu0 0.0
    %3010 = vmatprep.subr.mxu0 0.0
    %3011 = vmatpush1.msra.mxu0 0.0
    %3012 = vmatprep.subr.mxu0 0.0
    %3013 = vmatpush1.msra.mxu0 0.0
    %3014 = vmatprep.subr.mxu0 0.0
    %3015 = vmatpush1.msra.mxu0 0.0
    %3016 = vmatprep.subr.mxu0 0.0
    %3017 = vmatpush1.msra.mxu0 0.0
    %3018 = vmatprep.subr.mxu0 0.0
    %3019 = vmatpush1.msra.mxu0 0.0
    %3020 = vmatprep.subr.mxu0 0.0
    %3021 = vmatpush1.msra.mxu0 0.0
    %3022 = vmatprep.subr.mxu0 0.0
    %3023 = vmatpush1.msra.mxu0 0.0
    %3024 = vmatprep.subr.mxu0 0.0
    %3025 = vmatpush1.msra.mxu0 0.0
    %3026 = vmatprep.subr.mxu0 0.0
    %3027 = vmatpush1.msra.mxu0 0.0
    %3028 = vmatprep.subr.mxu0 0.0
    %3029 = vmatpush1.msra.mxu0 0.0
    %3030 = vmatprep.mubr.f32.mxu0 0.0
    %3031 = vmatmul.mubr.f32.gmra.mrb[0].mxu0 %v2964
    %v3032 = vpop.f32.mrb[0].mxu0
    %v3033 = vadd.f32 0.0, %v3032
    %v3034 = vpop.f32.mrb[0].mxu0
    %3035 = vdwg.mxu0
    %v3037 = vsel %vm238, %v2879, 0
    %3039 = vmatprep.subr.mxu0 0.0
    %3040 = vmatpush1.msra.mxu0 %v2169
    %3041 = vmatprep.subr.mxu0 0.0
    %3042 = vmatpush1.msra.mxu0 0.0
    %3043 = vmatprep.subr.mxu0 0.0
    %3044 = vmatpush1.msra.mxu0 0.0
    %3045 = vmatprep.subr.mxu0 0.0
    %3046 = vmatpush1.msra.mxu0 0.0
    %3047 = vmatprep.subr.mxu0 0.0
    %3048 = vmatpush1.msra.mxu0 0.0
    %3049 = vmatprep.subr.mxu0 0.0
    %3050 = vmatpush1.msra.mxu0 0.0
    %3051 = vmatprep.subr.mxu0 0.0
    %3052 = vmatpush1.msra.mxu0 0.0
    %3053 = vmatprep.subr.mxu0 0.0
    %3054 = vmatpush1.msra.mxu0 0.0
    %3055 = vmatprep.subr.mxu0 0.0
    %3056 = vmatpush1.msra.mxu0 0.0
    %3057 = vmatprep.subr.mxu0 0.0
    %3058 = vmatpush1.msra.mxu0 0.0
    %3059 = vmatprep.subr.mxu0 0.0
    %3060 = vmatpush1.msra.mxu0 0.0
    %3061 = vmatprep.subr.mxu0 0.0
    %3062 = vmatpush1.msra.mxu0 0.0
    %3063 = vmatprep.subr.mxu0 0.0
    %3064 = vmatpush1.msra.mxu0 0.0
    %3065 = vmatprep.subr.mxu0 0.0
    %3066 = vmatpush1.msra.mxu0 0.0
    %3067 = vmatprep.subr.mxu0 0.0
    %3068 = vmatpush1.msra.mxu0 0.0
    %3069 = vmatprep.subr.mxu0 0.0
    %3070 = vmatpush1.msra.mxu0 0.0
    %3071 = vmatprep.subr.mxu0 0.0
    %3072 = vmatpush1.msra.mxu0 0.0
    %3073 = vmatprep.subr.mxu0 0.0
    %3074 = vmatpush1.msra.mxu0 0.0
    %3075 = vmatprep.subr.mxu0 0.0
    %3076 = vmatpush1.msra.mxu0 0.0
    %3077 = vmatprep.subr.mxu0 0.0
    %3078 = vmatpush1.msra.mxu0 0.0
    %3079 = vmatprep.subr.mxu0 0.0
    %3080 = vmatpush1.msra.mxu0 0.0
    %3081 = vmatprep.subr.mxu0 0.0
    %3082 = vmatpush1.msra.mxu0 0.0
    %3083 = vmatprep.subr.mxu0 0.0
    %3084 = vmatpush1.msra.mxu0 0.0
    %3085 = vmatprep.subr.mxu0 0.0
    %3086 = vmatpush1.msra.mxu0 0.0
    %3087 = vmatprep.subr.mxu0 0.0
    %3088 = vmatpush1.msra.mxu0 0.0
    %3089 = vmatprep.subr.mxu0 0.0
    %3090 = vmatpush1.msra.mxu0 0.0
    %3091 = vmatprep.subr.mxu0 0.0
    %3092 = vmatpush1.msra.mxu0 0.0
    %3093 = vmatprep.subr.mxu0 0.0
    %3094 = vmatpush1.msra.mxu0 0.0
    %3095 = vmatprep.subr.mxu0 0.0
    %3096 = vmatpush1.msra.mxu0 0.0
    %3097 = vmatprep.subr.mxu0 0.0
    %3098 = vmatpush1.msra.mxu0 0.0
    %3099 = vmatprep.subr.mxu0 0.0
    %3100 = vmatpush1.msra.mxu0 0.0
    %3101 = vmatprep.subr.mxu0 0.0
    %3102 = vmatpush1.msra.mxu0 0.0
    %3103 = vmatprep.mubr.f32.mxu0 0.0
    %3104 = vmatmul.mubr.f32.gmra.mrb[0].mxu0 %v3037
    %v3105 = vpop.f32.mrb[0].mxu0
    %v3106 = vadd.f32 0.0, %v3105
    %v3107 = vpop.f32.mrb[0].mxu0
    %3108 = vdwg.mxu0
    %v3110 = vsel %vm238, %v2881, 0
    %3112 = vmatprep.subr.mxu0 0.0
    %3113 = vmatpush1.msra.mxu0 %v2171
    %3114 = vmatprep.subr.mxu0 0.0
    %3115 = vmatpush1.msra.mxu0 0.0
    %3116 = vmatprep.subr.mxu0 0.0
    %3117 = vmatpush1.msra.mxu0 0.0
    %3118 = vmatprep.subr.mxu0 0.0
    %3119 = vmatpush1.msra.mxu0 0.0
    %3120 = vmatprep.subr.mxu0 0.0
    %3121 = vmatpush1.msra.mxu0 0.0
    %3122 = vmatprep.subr.mxu0 0.0
    %3123 = vmatpush1.msra.mxu0 0.0
    %3124 = vmatprep.subr.mxu0 0.0
    %3125 = vmatpush1.msra.mxu0 0.0
    %3126 = vmatprep.subr.mxu0 0.0
    %3127 = vmatpush1.msra.mxu0 0.0
    %3128 = vmatprep.subr.mxu0 0.0
    %3129 = vmatpush1.msra.mxu0 0.0
    %3130 = vmatprep.subr.mxu0 0.0
    %3131 = vmatpush1.msra.mxu0 0.0
    %3132 = vmatprep.subr.mxu0 0.0
    %3133 = vmatpush1.msra.mxu0 0.0
    %3134 = vmatprep.subr.mxu0 0.0
    %3135 = vmatpush1.msra.mxu0 0.0
    %3136 = vmatprep.subr.mxu0 0.0
    %3137 = vmatpush1.msra.mxu0 0.0
    %3138 = vmatprep.subr.mxu0 0.0
    %3139 = vmatpush1.msra.mxu0 0.0
    %3140 = vmatprep.subr.mxu0 0.0
    %3141 = vmatpush1.msra.mxu0 0.0
    %3142 = vmatprep.subr.mxu0 0.0
    %3143 = vmatpush1.msra.mxu0 0.0
    %3144 = vmatprep.subr.mxu0 0.0
    %3145 = vmatpush1.msra.mxu0 0.0
    %3146 = vmatprep.subr.mxu0 0.0
    %3147 = vmatpush1.msra.mxu0 0.0
    %3148 = vmatprep.subr.mxu0 0.0
    %3149 = vmatpush1.msra.mxu0 0.0
    %3150 = vmatprep.subr.mxu0 0.0
    %3151 = vmatpush1.msra.mxu0 0.0
    %3152 = vmatprep.subr.mxu0 0.0
    %3153 = vmatpush1.msra.mxu0 0.0
    %3154 = vmatprep.subr.mxu0 0.0
    %3155 = vmatpush1.msra.mxu0 0.0
    %3156 = vmatprep.subr.mxu0 0.0
    %3157 = vmatpush1.msra.mxu0 0.0
    %3158 = vmatprep.subr.mxu0 0.0
    %3159 = vmatpush1.msra.mxu0 0.0
    %3160 = vmatprep.subr.mxu0 0.0
    %3161 = vmatpush1.msra.mxu0 0.0
    %3162 = vmatprep.subr.mxu0 0.0
    %3163 = vmatpush1.msra.mxu0 0.0
    %3164 = vmatprep.subr.mxu0 0.0
    %3165 = vmatpush1.msra.mxu0 0.0
    %3166 = vmatprep.subr.mxu0 0.0
    %3167 = vmatpush1.msra.mxu0 0.0
    %3168 = vmatprep.subr.mxu0 0.0
    %3169 = vmatpush1.msra.mxu0 0.0
    %3170 = vmatprep.subr.mxu0 0.0
    %3171 = vmatpush1.msra.mxu0 0.0
    %3172 = vmatprep.subr.mxu0 0.0
    %3173 = vmatpush1.msra.mxu0 0.0
    %3174 = vmatprep.subr.mxu0 0.0
    %3175 = vmatpush1.msra.mxu0 0.0
    %3176 = vmatprep.mubr.f32.mxu0 0.0
    %3177 = vmatmul.mubr.f32.gmra.mrb[0].mxu0 %v3110
    %v3178 = vpop.f32.mrb[0].mxu0
    %v3179 = vadd.f32 0.0, %v3178
    %v3180 = vpop.f32.mrb[0].mxu0
    %3181 = vdwg.mxu0
    %v3183 = vsel %vm238, %v2883, 0
    %3185 = vmatprep.subr.mxu0 0.0
    %3186 = vmatpush1.msra.mxu0 %v2175
    %3187 = vmatprep.subr.mxu0 0.0
    %3188 = vmatpush1.msra.mxu0 0.0
    %3189 = vmatprep.subr.mxu0 0.0
    %3190 = vmatpush1.msra.mxu0 0.0
    %3191 = vmatprep.subr.mxu0 0.0
    %3192 = vmatpush1.msra.mxu0 0.0
    %3193 = vmatprep.subr.mxu0 0.0
    %3194 = vmatpush1.msra.mxu0 0.0
    %3195 = vmatprep.subr.mxu0 0.0
    %3196 = vmatpush1.msra.mxu0 0.0
    %3197 = vmatprep.subr.mxu0 0.0
    %3198 = vmatpush1.msra.mxu0 0.0
    %3199 = vmatprep.subr.mxu0 0.0
    %3200 = vmatpush1.msra.mxu0 0.0
    %3201 = vmatprep.subr.mxu0 0.0
    %3202 = vmatpush1.msra.mxu0 0.0
    %3203 = vmatprep.subr.mxu0 0.0
    %3204 = vmatpush1.msra.mxu0 0.0
    %3205 = vmatprep.subr.mxu0 0.0
    %3206 = vmatpush1.msra.mxu0 0.0
    %3207 = vmatprep.subr.mxu0 0.0
    %3208 = vmatpush1.msra.mxu0 0.0
    %3209 = vmatprep.subr.mxu0 0.0
    %3210 = vmatpush1.msra.mxu0 0.0
    %3211 = vmatprep.subr.mxu0 0.0
    %3212 = vmatpush1.msra.mxu0 0.0
    %3213 = vmatprep.subr.mxu0 0.0
    %3214 = vmatpush1.msra.mxu0 0.0
    %3215 = vmatprep.subr.mxu0 0.0
    %3216 = vmatpush1.msra.mxu0 0.0
    %3217 = vmatprep.subr.mxu0 0.0
    %3218 = vmatpush1.msra.mxu0 0.0
    %3219 = vmatprep.subr.mxu0 0.0
    %3220 = vmatpush1.msra.mxu0 0.0
    %3221 = vmatprep.subr.mxu0 0.0
    %3222 = vmatpush1.msra.mxu0 0.0
    %3223 = vmatprep.subr.mxu0 0.0
    %3224 = vmatpush1.msra.mxu0 0.0
    %3225 = vmatprep.subr.mxu0 0.0
    %3226 = vmatpush1.msra.mxu0 0.0
    %3227 = vmatprep.subr.mxu0 0.0
    %3228 = vmatpush1.msra.mxu0 0.0
    %3229 = vmatprep.subr.mxu0 0.0
    %3230 = vmatpush1.msra.mxu0 0.0
    %3231 = vmatprep.subr.mxu0 0.0
    %3232 = vmatpush1.msra.mxu0 0.0
    %3233 = vmatprep.subr.mxu0 0.0
    %3234 = vmatpush1.msra.mxu0 0.0
    %3235 = vmatprep.subr.mxu0 0.0
    %3236 = vmatpush1.msra.mxu0 0.0
    %3237 = vmatprep.subr.mxu0 0.0
    %3238 = vmatpush1.msra.mxu0 0.0
    %3239 = vmatprep.subr.mxu0 0.0
    %3240 = vmatpush1.msra.mxu0 0.0
    %3241 = vmatprep.subr.mxu0 0.0
    %3242 = vmatpush1.msra.mxu0 0.0
    %3243 = vmatprep.subr.mxu0 0.0
    %3244 = vmatpush1.msra.mxu0 0.0
    %3245 = vmatprep.subr.mxu0 0.0
    %3246 = vmatpush1.msra.mxu0 0.0
    %3247 = vmatprep.subr.mxu0 0.0
    %3248 = vmatpush1.msra.mxu0 0.0
    %3249 = vmatprep.mubr.f32.mxu0 0.0
    %3250 = vmatmul.mubr.f32.gmra.mrb[0].mxu0 %v3183
    %v3251 = vpop.f32.mrb[0].mxu0
    %v3252 = vadd.f32 0.0, %v3251
    %v3253 = vpop.f32.mrb[0].mxu0
    %3254 = vdwg.mxu0
    %v3256 = vsel %vm238, %v2885, 0
    %3258 = vmatprep.subr.mxu0 0.0
    %3259 = vmatpush1.msra.mxu0 %v2177
    %3260 = vmatprep.subr.mxu0 0.0
    %3261 = vmatpush1.msra.mxu0 0.0
    %3262 = vmatprep.subr.mxu0 0.0
    %3263 = vmatpush1.msra.mxu0 0.0
    %3264 = vmatprep.subr.mxu0 0.0
    %3265 = vmatpush1.msra.mxu0 0.0
    %3266 = vmatprep.subr.mxu0 0.0
    %3267 = vmatpush1.msra.mxu0 0.0
    %3268 = vmatprep.subr.mxu0 0.0
    %3269 = vmatpush1.msra.mxu0 0.0
    %3270 = vmatprep.subr.mxu0 0.0
    %3271 = vmatpush1.msra.mxu0 0.0
    %3272 = vmatprep.subr.mxu0 0.0
    %3273 = vmatpush1.msra.mxu0 0.0
    %3274 = vmatprep.subr.mxu0 0.0
    %3275 = vmatpush1.msra.mxu0 0.0
    %3276 = vmatprep.subr.mxu0 0.0
    %3277 = vmatpush1.msra.mxu0 0.0
    %3278 = vmatprep.subr.mxu0 0.0
    %3279 = vmatpush1.msra.mxu0 0.0
    %3280 = vmatprep.subr.mxu0 0.0
    %3281 = vmatpush1.msra.mxu0 0.0
    %3282 = vmatprep.subr.mxu0 0.0
    %3283 = vmatpush1.msra.mxu0 0.0
    %3284 = vmatprep.subr.mxu0 0.0
    %3285 = vmatpush1.msra.mxu0 0.0
    %3286 = vmatprep.subr.mxu0 0.0
    %3287 = vmatpush1.msra.mxu0 0.0
    %3288 = vmatprep.subr.mxu0 0.0
    %3289 = vmatpush1.msra.mxu0 0.0
    %3290 = vmatprep.subr.mxu0 0.0
    %3291 = vmatpush1.msra.mxu0 0.0
    %3292 = vmatprep.subr.mxu0 0.0
    %3293 = vmatpush1.msra.mxu0 0.0
    %3294 = vmatprep.subr.mxu0 0.0
    %3295 = vmatpush1.msra.mxu0 0.0
    %3296 = vmatprep.subr.mxu0 0.0
    %3297 = vmatpush1.msra.mxu0 0.0
    %3298 = vmatprep.subr.mxu0 0.0
    %3299 = vmatpush1.msra.mxu0 0.0
    %3300 = vmatprep.subr.mxu0 0.0
    %3301 = vmatpush1.msra.mxu0 0.0
    %3302 = vmatprep.subr.mxu0 0.0
    %3303 = vmatpush1.msra.mxu0 0.0
    %3304 = vmatprep.subr.mxu0 0.0
    %3305 = vmatpush1.msra.mxu0 0.0
    %3306 = vmatprep.subr.mxu0 0.0
    %3307 = vmatpush1.msra.mxu0 0.0
    %3308 = vmatprep.subr.mxu0 0.0
    %3309 = vmatpush1.msra.mxu0 0.0
    %3310 = vmatprep.subr.mxu0 0.0
    %3311 = vmatpush1.msra.mxu0 0.0
    %3312 = vmatprep.subr.mxu0 0.0
    %3313 = vmatpush1.msra.mxu0 0.0
    %3314 = vmatprep.subr.mxu0 0.0
    %3315 = vmatpush1.msra.mxu0 0.0
    %3316 = vmatprep.subr.mxu0 0.0
    %3317 = vmatpush1.msra.mxu0 0.0
    %3318 = vmatprep.subr.mxu0 0.0
    %3319 = vmatpush1.msra.mxu0 0.0
    %3320 = vmatprep.subr.mxu0 0.0
    %3321 = vmatpush1.msra.mxu0 0.0
    %3322 = vmatprep.mubr.f32.mxu0 0.0
    %3323 = vmatmul.mubr.f32.gmra.mrb[0].mxu0 %v3256
    %v3324 = vpop.f32.mrb[0].mxu0
    %v3325 = vadd.f32 0.0, %v3324
    %v3326 = vpop.f32.mrb[0].mxu0
    %3327 = vdwg.mxu0
    %v3329 = vsel %vm238, %v2887, 0
    %3331 = vmatprep.subr.mxu0 0.0
    %3332 = vmatpush1.msra.mxu0 %v2181
    %3333 = vmatprep.subr.mxu0 0.0
    %3334 = vmatpush1.msra.mxu0 0.0
    %3335 = vmatprep.subr.mxu0 0.0
    %3336 = vmatpush1.msra.mxu0 0.0
    %3337 = vmatprep.subr.mxu0 0.0
    %3338 = vmatpush1.msra.mxu0 0.0
    %3339 = vmatprep.subr.mxu0 0.0
    %3340 = vmatpush1.msra.mxu0 0.0
    %3341 = vmatprep.subr.mxu0 0.0
    %3342 = vmatpush1.msra.mxu0 0.0
    %3343 = vmatprep.subr.mxu0 0.0
    %3344 = vmatpush1.msra.mxu0 0.0
    %3345 = vmatprep.subr.mxu0 0.0
    %3346 = vmatpush1.msra.mxu0 0.0
    %3347 = vmatprep.subr.mxu0 0.0
    %3348 = vmatpush1.msra.mxu0 0.0
    %3349 = vmatprep.subr.mxu0 0.0
    %3350 = vmatpush1.msra.mxu0 0.0
    %3351 = vmatprep.subr.mxu0 0.0
    %3352 = vmatpush1.msra.mxu0 0.0
    %3353 = vmatprep.subr.mxu0 0.0
    %3354 = vmatpush1.msra.mxu0 0.0
    %3355 = vmatprep.subr.mxu0 0.0
    %3356 = vmatpush1.msra.mxu0 0.0
    %3357 = vmatprep.subr.mxu0 0.0
    %3358 = vmatpush1.msra.mxu0 0.0
    %3359 = vmatprep.subr.mxu0 0.0
    %3360 = vmatpush1.msra.mxu0 0.0
    %3361 = vmatprep.subr.mxu0 0.0
    %3362 = vmatpush1.msra.mxu0 0.0
    %3363 = vmatprep.subr.mxu0 0.0
    %3364 = vmatpush1.msra.mxu0 0.0
    %3365 = vmatprep.subr.mxu0 0.0
    %3366 = vmatpush1.msra.mxu0 0.0
    %3367 = vmatprep.subr.mxu0 0.0
    %3368 = vmatpush1.msra.mxu0 0.0
    %3369 = vmatprep.subr.mxu0 0.0
    %3370 = vmatpush1.msra.mxu0 0.0
    %3371 = vmatprep.subr.mxu0 0.0
    %3372 = vmatpush1.msra.mxu0 0.0
    %3373 = vmatprep.subr.mxu0 0.0
    %3374 = vmatpush1.msra.mxu0 0.0
    %3375 = vmatprep.subr.mxu0 0.0
    %3376 = vmatpush1.msra.mxu0 0.0
    %3377 = vmatprep.subr.mxu0 0.0
    %3378 = vmatpush1.msra.mxu0 0.0
    %3379 = vmatprep.subr.mxu0 0.0
    %3380 = vmatpush1.msra.mxu0 0.0
    %3381 = vmatprep.subr.mxu0 0.0
    %3382 = vmatpush1.msra.mxu0 0.0
    %3383 = vmatprep.subr.mxu0 0.0
    %3384 = vmatpush1.msra.mxu0 0.0
    %3385 = vmatprep.subr.mxu0 0.0
    %3386 = vmatpush1.msra.mxu0 0.0
    %3387 = vmatprep.subr.mxu0 0.0
    %3388 = vmatpush1.msra.mxu0 0.0
    %3389 = vmatprep.subr.mxu0 0.0
    %3390 = vmatpush1.msra.mxu0 0.0
    %3391 = vmatprep.subr.mxu0 0.0
    %3392 = vmatpush1.msra.mxu0 0.0
    %3393 = vmatprep.subr.mxu0 0.0
    %3394 = vmatpush1.msra.mxu0 0.0
    %3395 = vmatprep.mubr.f32.mxu0 0.0
    %3396 = vmatmul.mubr.f32.gmra.mrb[0].mxu0 %v3329
    %v3397 = vpop.f32.mrb[0].mxu0
    %v3398 = vadd.f32 0.0, %v3397
    %v3399 = vpop.f32.mrb[0].mxu0
    %3400 = vdwg.mxu0
    %v3402 = vsel %vm238, %v2889, 0
    %3404 = vmatprep.subr.mxu0 0.0
    %3405 = vmatpush1.msra.mxu0 %v2183
    %3406 = vmatprep.subr.mxu0 0.0
    %3407 = vmatpush1.msra.mxu0 0.0
    %3408 = vmatprep.subr.mxu0 0.0
    %3409 = vmatpush1.msra.mxu0 0.0
    %3410 = vmatprep.subr.mxu0 0.0
    %3411 = vmatpush1.msra.mxu0 0.0
    %3412 = vmatprep.subr.mxu0 0.0
    %3413 = vmatpush1.msra.mxu0 0.0
    %3414 = vmatprep.subr.mxu0 0.0
    %3415 = vmatpush1.msra.mxu0 0.0
    %3416 = vmatprep.subr.mxu0 0.0
    %3417 = vmatpush1.msra.mxu0 0.0
    %3418 = vmatprep.subr.mxu0 0.0
    %3419 = vmatpush1.msra.mxu0 0.0
    %3420 = vmatprep.subr.mxu0 0.0
    %3421 = vmatpush1.msra.mxu0 0.0
    %3422 = vmatprep.subr.mxu0 0.0
    %3423 = vmatpush1.msra.mxu0 0.0
    %3424 = vmatprep.subr.mxu0 0.0
    %3425 = vmatpush1.msra.mxu0 0.0
    %3426 = vmatprep.subr.mxu0 0.0
    %3427 = vmatpush1.msra.mxu0 0.0
    %3428 = vmatprep.subr.mxu0 0.0
    %3429 = vmatpush1.msra.mxu0 0.0
    %3430 = vmatprep.subr.mxu0 0.0
    %3431 = vmatpush1.msra.mxu0 0.0
    %3432 = vmatprep.subr.mxu0 0.0
    %3433 = vmatpush1.msra.mxu0 0.0
    %3434 = vmatprep.subr.mxu0 0.0
    %3435 = vmatpush1.msra.mxu0 0.0
    %3436 = vmatprep.subr.mxu0 0.0
    %3437 = vmatpush1.msra.mxu0 0.0
    %3438 = vmatprep.subr.mxu0 0.0
    %3439 = vmatpush1.msra.mxu0 0.0
    %3440 = vmatprep.subr.mxu0 0.0
    %3441 = vmatpush1.msra.mxu0 0.0
    %3442 = vmatprep.subr.mxu0 0.0
    %3443 = vmatpush1.msra.mxu0 0.0
    %3444 = vmatprep.subr.mxu0 0.0
    %3445 = vmatpush1.msra.mxu0 0.0
    %3446 = vmatprep.subr.mxu0 0.0
    %3447 = vmatpush1.msra.mxu0 0.0
    %3448 = vmatprep.subr.mxu0 0.0
    %3449 = vmatpush1.msra.mxu0 0.0
    %3450 = vmatprep.subr.mxu0 0.0
    %3451 = vmatpush1.msra.mxu0 0.0
    %3452 = vmatprep.subr.mxu0 0.0
    %3453 = vmatpush1.msra.mxu0 0.0
    %3454 = vmatprep.subr.mxu0 0.0
    %3455 = vmatpush1.msra.mxu0 0.0
    %3456 = vmatprep.subr.mxu0 0.0
    %3457 = vmatpush1.msra.mxu0 0.0
    %3458 = vmatprep.subr.mxu0 0.0
    %3459 = vmatpush1.msra.mxu0 0.0
    %3460 = vmatprep.subr.mxu0 0.0
    %3461 = vmatpush1.msra.mxu0 0.0
    %3462 = vmatprep.subr.mxu0 0.0
    %3463 = vmatpush1.msra.mxu0 0.0
    %3464 = vmatprep.subr.mxu0 0.0
    %3465 = vmatpush1.msra.mxu0 0.0
    %3466 = vmatprep.subr.mxu0 0.0
    %3467 = vmatpush1.msra.mxu0 0.0
    %3468 = vmatprep.mubr.f32.mxu0 0.0
    %3469 = vmatmul.mubr.f32.gmra.mrb[0].mxu0 %v3402
    %v3470 = vpop.f32.mrb[0].mxu0
    %v3471 = vadd.f32 0.0, %v3470
    %v3472 = vpop.f32.mrb[0].mxu0
    %3473 = vdwg.mxu0
    %3476 = vrot.lane.b32.xlu0 %v3106, 16
    %v3477 = vpop.permute.xlu0 %3476
    %3478 = vrot.lane.b32.xlu0 %v3179, 16
    %v3479 = vpop.permute.xlu0 %3478
    %3484 = vrot.lane.b32.xlu0 %v3252, 32
    %v3485 = vpop.permute.xlu0 %3484
    %3486 = vrot.lane.b32.xlu0 %v3325, 32
    %v3487 = vpop.permute.xlu0 %3486
    %3492 = vrot.lane.b32.xlu0 %v3398, 48
    %v3493 = vpop.permute.xlu0 %3492
    %3494 = vrot.lane.b32.xlu0 %v3471, 48
    %v3495 = vpop.permute.xlu0 %3494
    %v3498 = vsel %vm17, %v2960, %v3477
    %v3499 = vsel %vm17, %v3033, %v3479
    %v3500 = vsel %vm105, %v3498, %v3485
    %v3501 = vsel %vm105, %v3499, %v3487
    %v3502 = vsel %vm2025, %v3500, %v3493
    %v3503 = vsel %vm2025, %v3501, %v3495
    %v3504 = vld [vmem:[%s1 + $0x310] sm:$0xff]
    %v3505 = vld [vmem:[%s1 + $0x320] sm:$0xff]
    %v3506 = vld [vmem:[%s1 + $0x330] sm:$0xff]
    %v3507 = vld [vmem:[%s1 + $0x340] sm:$0xff]
    %v3508 = vld [vmem:[%s1 + $0x350] sm:$0xff]
    %v3509 = vld [vmem:[%s1 + $0x360] sm:$0xff]
    %v3510 = vld [vmem:[%s1 + $0x370] sm:$0xff]
    %v3511 = vld [vmem:[%s1 + $0x380] sm:$0xff]
    %v3513 = vsel %vm1814, %v3502, 0
    %v3516 = vsel %vm1814, %v3503, 0
    %3518 = vmatprep.subr.mxu0 0.0
    %3519 = vmatpush1.msra.mxu0 %v3504
    %3520 = vmatprep.subr.mxu0 0.0
    %3521 = vmatpush1.msra.mxu0 %v3505
    %3522 = vmatprep.subr.mxu0 0.0
    %3523 = vmatpush1.msra.mxu0 %v3506
    %3524 = vmatprep.subr.mxu0 0.0
    %3525 = vmatpush1.msra.mxu0 %v3507
    %3526 = vmatprep.subr.mxu0 0.0
    %3527 = vmatpush1.msra.mxu0 %v3508
    %3528 = vmatprep.subr.mxu0 0.0
    %3529 = vmatpush1.msra.mxu0 %v3509
    %3530 = vmatprep.subr.mxu0 0.0
    %3531 = vmatpush1.msra.mxu0 %v3510
    %3532 = vmatprep.subr.mxu0 0.0
    %3533 = vmatpush1.msra.mxu0 %v3511
    %3534 = vmatprep.subr.mxu0 0.0
    %3535 = vmatpush1.msra.mxu0 0.0
    %3536 = vmatprep.subr.mxu0 0.0
    %3537 = vmatpush1.msra.mxu0 0.0
    %3538 = vmatprep.subr.mxu0 0.0
    %3539 = vmatpush1.msra.mxu0 0.0
    %3540 = vmatprep.subr.mxu0 0.0
    %3541 = vmatpush1.msra.mxu0 0.0
    %3542 = vmatprep.subr.mxu0 0.0
    %3543 = vmatpush1.msra.mxu0 0.0
    %3544 = vmatprep.subr.mxu0 0.0
    %3545 = vmatpush1.msra.mxu0 0.0
    %3546 = vmatprep.subr.mxu0 0.0
    %3547 = vmatpush1.msra.mxu0 0.0
    %3548 = vmatprep.subr.mxu0 0.0
    %3549 = vmatpush1.msra.mxu0 0.0
    %3550 = vmatprep.subr.mxu0 0.0
    %3551 = vmatpush1.msra.mxu0 0.0
    %3552 = vmatprep.subr.mxu0 0.0
    %3553 = vmatpush1.msra.mxu0 0.0
    %3554 = vmatprep.subr.mxu0 0.0
    %3555 = vmatpush1.msra.mxu0 0.0
    %3556 = vmatprep.subr.mxu0 0.0
    %3557 = vmatpush1.msra.mxu0 0.0
    %3558 = vmatprep.subr.mxu0 0.0
    %3559 = vmatpush1.msra.mxu0 0.0
    %3560 = vmatprep.subr.mxu0 0.0
    %3561 = vmatpush1.msra.mxu0 0.0
    %3562 = vmatprep.subr.mxu0 0.0
    %3563 = vmatpush1.msra.mxu0 0.0
    %3564 = vmatprep.subr.mxu0 0.0
    %3565 = vmatpush1.msra.mxu0 0.0
    %3566 = vmatprep.subr.mxu0 0.0
    %3567 = vmatpush1.msra.mxu0 0.0
    %3568 = vmatprep.subr.mxu0 0.0
    %3569 = vmatpush1.msra.mxu0 0.0
    %3570 = vmatprep.subr.mxu0 0.0
    %3571 = vmatpush1.msra.mxu0 0.0
    %3572 = vmatprep.subr.mxu0 0.0
    %3573 = vmatpush1.msra.mxu0 0.0
    %3574 = vmatprep.subr.mxu0 0.0
    %3575 = vmatpush1.msra.mxu0 0.0
    %3576 = vmatprep.subr.mxu0 0.0
    %3577 = vmatpush1.msra.mxu0 0.0
    %3578 = vmatprep.subr.mxu0 0.0
    %3579 = vmatpush1.msra.mxu0 0.0
    %3580 = vmatprep.subr.mxu0 0.0
    %3581 = vmatpush1.msra.mxu0 0.0
    %3582 = vmatprep.mubr.f32.mxu0 0.0
    %3583 = vmatmul.mubr.f32.gmra.mrb[0].mxu0 %v3513
    %v3584 = vpop.f32.mrb[0].mxu0
    %v3585 = vadd.f32 0.0, %v3584
    %v3586 = vpop.f32.mrb[0].mxu0
    %3587 = vmatprep.mubr.f32.mxu0 0.0
    %3588 = vmatmul.mubr.f32.gmra.mrb[0].mxu0 %v3516
    %v3589 = vpop.f32.mrb[0].mxu0
    %v3590 = vadd.f32 0.0, %v3589
    %v3591 = vpop.f32.mrb[0].mxu0
    %3592 = vdwg.mxu0
    %v3593 = vadd.f32 %v2021, %v3585
    %v3594 = vadd.f32 %v2022, %v3590
    %v3595 = vld [vmem:[%s1 + $0x390] ss:$0 sm:$0xff]
    %v3596 = vadd.f32 %v3593, %v3595
    %v3597 = vadd.f32 %v3594, %v3595
    %v3598 = vld [vmem:[%s1 + $0x3a0] ss:$0 sm:$0xff]
    %v3599 = vld [vmem:[%s1 + $0x3b0] ss:$0 sm:$0xff]
    %v3600 = vsel %vm2025, %v3596, 0.0
    %3601 = vadd.xlane.f32.xlu0 %v3600
    %v3602 = vpop.xlane.xlu0 %3601
    %v3603 = vsel %vm2025, %v3597, 0.0
    %3604 = vadd.xlane.f32.xlu0 %v3603
    %v3605 = vpop.xlane.xlu0 %3604
    %v3606 = vmul.f32 %v3602, %v2032
    %v3607 = vmul.f32 %v3605, %v2032
    %v3608 = vsub.f32 %v3596, %v3606
    %v3609 = vsub.f32 %v3597, %v3607
    %v3610 = vmul.f32 %v3608, %v3608
    %v3611 = vmul.f32 %v3609, %v3609
    %v3612 = vsel %vm2025, %v3610, 0.0
    %3613 = vadd.xlane.f32.xlu0 %v3612
    %v3614 = vpop.xlane.xlu0 %3613
    %v3615 = vsel %vm2025, %v3611, 0.0
    %3616 = vadd.xlane.f32.xlu0 %v3615
    %v3617 = vpop.xlane.xlu0 %3616
    %v3618 = vmul.f32 %v3614, %v2032
    %v3619 = vmul.f32 %v3617, %v2032
    %v3620 = vadd.f32 %v3618, 1e-05
    %v3621 = vadd.f32 %v3619, 1e-05
    %v3622 = vrsqrt.pop %v3620
    %v3623 = vrsqrt.pop %v3621
    %v3624 = vmul.f32 %v3608, %v3622
    %v3625 = vmul.f32 %v3609, %v3623
    %v3626 = vmul.f32 %v3624, %v3598
    %v3627 = vmul.f32 %v3625, %v3598
    %v3628 = vadd.f32 %v3626, %v3599
    %v3629 = vadd.f32 %v3627, %v3599
    %v3630 = vld [vmem:[%s1 + $0x3c0] sm:$0xff]
    %v3631 = vld [vmem:[%s1 + $0x3c8] sm:$0xff]
    %v3632 = vld [vmem:[%s1 + $0x3d0] sm:$0xff]
    %v3633 = vld [vmem:[%s1 + $0x3d8] sm:$0xff]
    %v3634 = vld [vmem:[%s1 + $0x3e0] sm:$0xff]
    %v3635 = vld [vmem:[%s1 + $0x3e8] sm:$0xff]
    %v3636 = vld [vmem:[%s1 + $0x3f0] sm:$0xff]
    %v3637 = vld [vmem:[%s1 + $0x3f8] sm:$0xff]
    %v3638 = vld [vmem:[%s1 + $0x400] sm:$0xff]
    %v3639 = vld [vmem:[%s1 + $0x408] sm:$0xff]
    %v3640 = vld [vmem:[%s1 + $0x410] sm:$0xff]
    %v3641 = vld [vmem:[%s1 + $0x418] sm:$0xff]
    %s3642 = scalar_lea.vmem %s1, 1056
    %v3643 = vld [vmem:[%s3642] ss:$8 sm:$0x3]
    %v3645 = vlaneseq
    %v3646 = vshrl.u32 %v3645, 7
    %v3647 = vsub.s32 0, %v3646
    %v3648 = vrot.slane %v3643, %v3647
    %v3649 = vlaneseq
    %v3650 = vshrl.u32 %v3649, 7
    %v3651 = vsub.s32 1, %v3650
    %v3652 = vrot.slane %v3643, %v3651
    %v3656 = vsel %vm2025, %v3628, 0
    %v3659 = vsel %vm2025, %v3629, 0
    %3661 = vmatprep.subr.mxu0 %v3631
    %3662 = vmatpush1.msra.mxu0 %v3630
    %3663 = vmatprep.subr.mxu0 %v3633
    %3664 = vmatpush1.msra.mxu0 %v3632
    %3665 = vmatprep.subr.mxu0 %v3635
    %3666 = vmatpush1.msra.mxu0 %v3634
    %3667 = vmatprep.subr.mxu0 %v3637
    %3668 = vmatpush1.msra.mxu0 %v3636
    %3669 = vmatprep.subr.mxu0 %v3639
    %3670 = vmatpush1.msra.mxu0 %v3638
    %3671 = vmatprep.subr.mxu0 %v3641
    %3672 = vmatpush1.msra.mxu0 %v3640
    %3673 = vmatprep.subr.mxu0 0.0
    %3674 = vmatpush1.msra.mxu0 0.0
    %3675 = vmatprep.subr.mxu0 0.0
    %3676 = vmatpush1.msra.mxu0 0.0
    %3677 = vmatprep.subr.mxu0 0.0
    %3678 = vmatpush1.msra.mxu0 0.0
    %3679 = vmatprep.subr.mxu0 0.0
    %3680 = vmatpush1.msra.mxu0 0.0
    %3681 = vmatprep.subr.mxu0 0.0
    %3682 = vmatpush1.msra.mxu0 0.0
    %3683 = vmatprep.subr.mxu0 0.0
    %3684 = vmatpush1.msra.mxu0 0.0
    %3685 = vmatprep.subr.mxu0 0.0
    %3686 = vmatpush1.msra.mxu0 0.0
    %3687 = vmatprep.subr.mxu0 0.0
    %3688 = vmatpush1.msra.mxu0 0.0
    %3689 = vmatprep.subr.mxu0 0.0
    %3690 = vmatpush1.msra.mxu0 0.0
    %3691 = vmatprep.subr.mxu0 0.0
    %3692 = vmatpush1.msra.mxu0 0.0
    %3693 = vmatprep.subr.mxu0 0.0
    %3694 = vmatpush1.msra.mxu0 0.0
    %3695 = vmatprep.subr.mxu0 0.0
    %3696 = vmatpush1.msra.mxu0 0.0
    %3697 = vmatprep.subr.mxu0 0.0
    %3698 = vmatpush1.msra.mxu0 0.0
    %3699 = vmatprep.subr.mxu0 0.0
    %3700 = vmatpush1.msra.mxu0 0.0
    %3701 = vmatprep.subr.mxu0 0.0
    %3702 = vmatpush1.msra.mxu0 0.0
    %3703 = vmatprep.subr.mxu0 0.0
    %3704 = vmatpush1.msra.mxu0 0.0
    %3705 = vmatprep.subr.mxu0 0.0
    %3706 = vmatpush1.msra.mxu0 0.0
    %3707 = vmatprep.subr.mxu0 0.0
    %3708 = vmatpush1.msra.mxu0 0.0
    %3709 = vmatprep.subr.mxu0 0.0
    %3710 = vmatpush1.msra.mxu0 0.0
    %3711 = vmatprep.subr.mxu0 0.0
    %3712 = vmatpush1.msra.mxu0 0.0
    %3713 = vmatprep.subr.mxu0 0.0
    %3714 = vmatpush1.msra.mxu0 0.0
    %3715 = vmatprep.subr.mxu0 0.0
    %3716 = vmatpush1.msra.mxu0 0.0
    %3717 = vmatprep.subr.mxu0 0.0
    %3718 = vmatpush1.msra.mxu0 0.0
    %3719 = vmatprep.subr.mxu0 0.0
    %3720 = vmatpush1.msra.mxu0 0.0
    %3721 = vmatprep.subr.mxu0 0.0
    %3722 = vmatpush1.msra.mxu0 0.0
    %3723 = vmatprep.subr.mxu0 0.0
    %3724 = vmatpush1.msra.mxu0 0.0
    %3725 = vmatprep.mubr.f32.mxu0 0.0
    %3726 = vmatmul.mubr.f32.gmra.mrb[0].mxu0 %v3656
    %v3727 = vpop.f32.mrb[0].mxu0
    %v3728 = vadd.f32 %v3648, %v3727
    %v3729 = vpop.f32.mrb[0].mxu0
    %v3730 = vadd.f32 %v3652, %v3729
    %3731 = vmatprep.mubr.f32.mxu0 0.0
    %3732 = vmatmul.mubr.f32.gmra.mrb[0].mxu0 %v3659
    %v3733 = vpop.f32.mrb[0].mxu0
    %v3734 = vadd.f32 %v3648, %v3733
    %v3735 = vpop.f32.mrb[0].mxu0
    %v3736 = vadd.f32 %v3652, %v3735
    %3737 = vdwg.mxu0
    %v3738 = vmul.f32 %v3728, 0.5
    %v3739 = vmul.f32 %v3730, 0.5
    %v3740 = vmul.f32 %v3734, 0.5
    %v3741 = vmul.f32 %v3736, 0.5
    %v3742 = vmul.f32 %v3728, 0.044715
    %v3743 = vmul.f32 %v3730, 0.044715
    %v3744 = vmul.f32 %v3734, 0.044715
    %v3745 = vmul.f32 %v3736, 0.044715
    %v3746 = vmul.f32 %v3742, %v3728
    %v3747 = vmul.f32 %v3743, %v3730
    %v3748 = vmul.f32 %v3744, %v3734
    %v3749 = vmul.f32 %v3745, %v3736
    %v3750 = vmul.f32 %v3746, %v3728
    %v3751 = vmul.f32 %v3747, %v3730
    %v3752 = vmul.f32 %v3748, %v3734
    %v3753 = vmul.f32 %v3749, %v3736
    %v3754 = vadd.f32 %v3728, %v3750
    %v3755 = vadd.f32 %v3730, %v3751
    %v3756 = vadd.f32 %v3734, %v3752
    %v3757 = vadd.f32 %v3736, %v3753
    %v3758 = vmul.f32 %v3754, 0.7978846
    %v3759 = vmul.f32 %v3755, 0.7978846
    %v3760 = vmul.f32 %v3756, 0.7978846
    %v3761 = vmul.f32 %v3757, 0.7978846
    %v3762 = vtanh.pop %v3758
    %v3763 = vtanh.pop %v3759
    %v3764 = vtanh.pop %v3760
    %v3765 = vtanh.pop %v3761
    %v3766 = vadd.f32 %v3762, 1.0
    %v3767 = vadd.f32 %v3763, 1.0
    %v3768 = vadd.f32 %v3764, 1.0
    %v3769 = vadd.f32 %v3765, 1.0
    %v3770 = vmul.f32 %v3738, %v3766
    %v3771 = vmul.f32 %v3739, %v3767
    %v3772 = vmul.f32 %v3740, %v3768
    %v3773 = vmul.f32 %v3741, %v3769
    %v3774 = vld [vmem:[%s1 + $0x430] sm:$0xff]
    %v3775 = vld [vmem:[%s1 + $0x440] sm:$0xff]
    %v3776 = vld [vmem:[%s1 + $0x450] sm:$0xff]
    %v3777 = vld [vmem:[%s1 + $0x460] sm:$0xff]
    %v3778 = vld [vmem:[%s1 + $0x470] sm:$0xff]
    %v3779 = vld [vmem:[%s1 + $0x480] sm:$0xff]
    %v3780 = vld [vmem:[%s1 + $0x490] sm:$0xff]
    %v3781 = vld [vmem:[%s1 + $0x4a0] sm:$0xff]
    %v3782 = vld [vmem:[%s1 + $0x4b0] sm:$0xff]
    %v3783 = vld [vmem:[%s1 + $0x4c0] sm:$0xff]
    %v3784 = vld [vmem:[%s1 + $0x4d0] sm:$0xff]
    %v3785 = vld [vmem:[%s1 + $0x4e0] sm:$0xff]
    %v3786 = vld [vmem:[%s1 + $0x4f0] sm:$0xff]
    %v3787 = vld [vmem:[%s1 + $0x500] sm:$0xff]
    %v3788 = vld [vmem:[%s1 + $0x510] sm:$0xff]
    %v3789 = vld [vmem:[%s1 + $0x520] sm:$0xff]
    %v3790 = vld [vmem:[%s1 + $0x530] sm:$0xff]
    %v3791 = vld [vmem:[%s1 + $0x540] sm:$0xff]
    %v3792 = vld [vmem:[%s1 + $0x550] sm:$0xff]
    %v3793 = vld [vmem:[%s1 + $0x560] sm:$0xff]
    %v3794 = vld [vmem:[%s1 + $0x570] sm:$0xff]
    %v3795 = vld [vmem:[%s1 + $0x580] sm:$0xff]
    %v3796 = vld [vmem:[%s1 + $0x590] sm:$0xff]
    %v3797 = vld [vmem:[%s1 + $0x5a0] sm:$0xff]
    %v3799 = vsel %vm1814, %v3771, 0
    %v3802 = vsel %vm1814, %v3773, 0
    %3804 = vmatprep.subr.mxu0 0.0
    %3805 = vmatpush1.msra.mxu0 %v3774
    %3806 = vmatprep.subr.mxu0 0.0
    %3807 = vmatpush1.msra.mxu0 %v3775
    %3808 = vmatprep.subr.mxu0 0.0
    %3809 = vmatpush1.msra.mxu0 %v3776
    %3810 = vmatprep.subr.mxu0 0.0
    %3811 = vmatpush1.msra.mxu0 %v3777
    %3812 = vmatprep.subr.mxu0 0.0
    %3813 = vmatpush1.msra.mxu0 %v3778
    %3814 = vmatprep.subr.mxu0 0.0
    %3815 = vmatpush1.msra.mxu0 %v3779
    %3816 = vmatprep.subr.mxu0 0.0
    %3817 = vmatpush1.msra.mxu0 %v3780
    %3818 = vmatprep.subr.mxu0 0.0
    %3819 = vmatpush1.msra.mxu0 %v3781
    %3820 = vmatprep.subr.mxu0 0.0
    %3821 = vmatpush1.msra.mxu0 %v3782
    %3822 = vmatprep.subr.mxu0 0.0
    %3823 = vmatpush1.msra.mxu0 %v3783
    %3824 = vmatprep.subr.mxu0 0.0
    %3825 = vmatpush1.msra.mxu0 %v3784
    %3826 = vmatprep.subr.mxu0 0.0
    %3827 = vmatpush1.msra.mxu0 %v3785
    %3828 = vmatprep.subr.mxu0 0.0
    %3829 = vmatpush1.msra.mxu0 %v3786
    %3830 = vmatprep.subr.mxu0 0.0
    %3831 = vmatpush1.msra.mxu0 %v3787
    %3832 = vmatprep.subr.mxu0 0.0
    %3833 = vmatpush1.msra.mxu0 %v3788
    %3834 = vmatprep.subr.mxu0 0.0
    %3835 = vmatpush1.msra.mxu0 %v3789
    %3836 = vmatprep.subr.mxu0 0.0
    %3837 = vmatpush1.msra.mxu0 %v3790
    %3838 = vmatprep.subr.mxu0 0.0
    %3839 = vmatpush1.msra.mxu0 %v3791
    %3840 = vmatprep.subr.mxu0 0.0
    %3841 = vmatpush1.msra.mxu0 %v3792
    %3842 = vmatprep.subr.mxu0 0.0
    %3843 = vmatpush1.msra.mxu0 %v3793
    %3844 = vmatprep.subr.mxu0 0.0
    %3845 = vmatpush1.msra.mxu0 %v3794
    %3846 = vmatprep.subr.mxu0 0.0
    %3847 = vmatpush1.msra.mxu0 %v3795
    %3848 = vmatprep.subr.mxu0 0.0
    %3849 = vmatpush1.msra.mxu0 %v3796
    %3850 = vmatprep.subr.mxu0 0.0
    %3851 = vmatpush1.msra.mxu0 %v3797
    %3852 = vmatprep.subr.mxu0 0.0
    %3853 = vmatpush1.msra.mxu0 0.0
    %3854 = vmatprep.subr.mxu0 0.0
    %3855 = vmatpush1.msra.mxu0 0.0
    %3856 = vmatprep.subr.mxu0 0.0
    %3857 = vmatpush1.msra.mxu0 0.0
    %3858 = vmatprep.subr.mxu0 0.0
    %3859 = vmatpush1.msra.mxu0 0.0
    %3860 = vmatprep.subr.mxu0 0.0
    %3861 = vmatpush1.msra.mxu0 0.0
    %3862 = vmatprep.subr.mxu0 0.0
    %3863 = vmatpush1.msra.mxu0 0.0
    %3864 = vmatprep.subr.mxu0 0.0
    %3865 = vmatpush1.msra.mxu0 0.0
    %3866 = vmatprep.subr.mxu0 0.0
    %3867 = vmatpush1.msra.mxu0 0.0
    %3868 = vmatprep.mubr.f32.mxu0 %v3799
    %3869 = vmatmul.mubr.f32.gmra.mrb[0].mxu0 %v3770
    %v3870 = vpop.f32.mrb[0].mxu0
    %v3871 = vadd.f32 0.0, %v3870
    %v3872 = vpop.f32.mrb[0].mxu0
    %3873 = vmatprep.mubr.f32.mxu0 %v3802
    %3874 = vmatmul.mubr.f32.gmra.mrb[0].mxu0 %v3772
    %v3875 = vpop.f32.mrb[0].mxu0
    %v3876 = vadd.f32 0.0, %v3875
    %v3877 = vpop.f32.mrb[0].mxu0
    %3878 = vdwg.mxu0
    %v3879 = vadd.f32 %v3596, %v3871
    %v3880 = vadd.f32 %v3597, %v3876
    %v3881 = vld [vmem:[%s1 + $0x5b0] ss:$0 sm:$0xff]
    %v3882 = vadd.f32 %v3879, %v3881
    %v3883 = vadd.f32 %v3880, %v3881
    %v3884 = vld [vmem:[%s1 + $0x5c0] ss:$0 sm:$0xff]
    %v3885 = vld [vmem:[%s1 + $0x5d0] ss:$0 sm:$0xff]
    %v3886 = vsel %vm2025, %v3882, 0.0
    %3887 = vadd.xlane.f32.xlu0 %v3886
    %v3888 = vpop.xlane.xlu0 %3887
    %v3889 = vsel %vm2025, %v3883, 0.0
    %3890 = vadd.xlane.f32.xlu0 %v3889
    %v3891 = vpop.xlane.xlu0 %3890
    %v3892 = vmul.f32 %v3888, %v2032
    %v3893 = vmul.f32 %v3891, %v2032
    %v3894 = vsub.f32 %v3882, %v3892
    %v3895 = vsub.f32 %v3883, %v3893
    %v3896 = vmul.f32 %v3894, %v3894
    %v3897 = vmul.f32 %v3895, %v3895
    %v3898 = vsel %vm2025, %v3896, 0.0
    %3899 = vadd.xlane.f32.xlu0 %v3898
    %v3900 = vpop.xlane.xlu0 %3899
    %v3901 = vsel %vm2025, %v3897, 0.0
    %3902 = vadd.xlane.f32.xlu0 %v3901
    %v3903 = vpop.xlane.xlu0 %3902
    %v3904 = vmul.f32 %v3900, %v2032
    %v3905 = vmul.f32 %v3903, %v2032
    %v3906 = vadd.f32 %v3904, 1e-05
    %v3907 = vadd.f32 %v3905, 1e-05
    %v3908 = vrsqrt.pop %v3906
    %v3909 = vrsqrt.pop %v3907
    %v3910 = vmul.f32 %v3894, %v3908
    %v3911 = vmul.f32 %v3895, %v3909
    %v3912 = vmul.f32 %v3910, %v3884
    %v3913 = vmul.f32 %v3911, %v3884
    %v3914 = vadd.f32 %v3912, %v3885
    %v3915 = vadd.f32 %v3913, %v3885
    %v3916 = vsel %vm2025, %v3914, 0.0
    %v3917 = vrot.slane %v3916, 4
    %v3918 = vadd.f32 %v3916, %v3917
    %v3919 = vrot.slane %v3918, 2
    %v3920 = vadd.f32 %v3918, %v3919
    %v3921 = vrot.slane %v3920, 1
    %v3922 = vadd.f32 %v3920, %v3921
    %v3923 = vsel %vm2025, %v3915, 0.0
    %v3924 = vrot.slane %v3923, 4
    %v3925 = vadd.f32 %v3923, %v3924
    %v3926 = vrot.slane %v3925, 2
    %v3927 = vadd.f32 %v3925, %v3926
    %v3928 = vrot.slane %v3927, 1
    %v3929 = vadd.f32 %v3927, %v3928
    %v3930 = vrcp.pop 8.0
    %v3931 = vmul.f32 %v3922, %v3930
    %v3932 = vmul.f32 %v3929, %v3930
    %v3933 = vld [vmem:[%s1 + $0x5e0] sm:$0xff]
    %v3934 = vld [vmem:[%s1 + $0x5f0] sm:$0xff]
    %v3935 = vld [vmem:[%s1 + $0x600] sm:$0xff]
    %v3936 = vld [vmem:[%s1 + $0x610] sm:$0xff]
    %v3937 = vld [vmem:[%s1 + $0x620] sm:$0xff]
    %v3938 = vld [vmem:[%s1 + $0x630] sm:$0xff]
    %v3939 = vld [vmem:[%s1 + $0x640] ss:$0 sm:$0xff]
    %vm3942 = vcmask 1041409
    %v3943 = vsel %vm3942, %v3932, %v3931
    %v3944 = vsel %vm2025, %v3943, 0
    %3946 = vmatprep.subr.mxu0 0.0
    %3947 = vmatpush1.msra.mxu0 %v3933
    %3948 = vmatprep.subr.mxu0 0.0
    %3949 = vmatpush1.msra.mxu0 %v3934
    %3950 = vmatprep.subr.mxu0 0.0
    %3951 = vmatpush1.msra.mxu0 %v3935
    %3952 = vmatprep.subr.mxu0 0.0
    %3953 = vmatpush1.msra.mxu0 %v3936
    %3954 = vmatprep.subr.mxu0 0.0
    %3955 = vmatpush1.msra.mxu0 %v3937
    %3956 = vmatprep.subr.mxu0 0.0
    %3957 = vmatpush1.msra.mxu0 %v3938
    %3958 = vmatprep.subr.mxu0 0.0
    %3959 = vmatpush1.msra.mxu0 0.0
    %3960 = vmatprep.subr.mxu0 0.0
    %3961 = vmatpush1.msra.mxu0 0.0
    %3962 = vmatprep.subr.mxu0 0.0
    %3963 = vmatpush1.msra.mxu0 0.0
    %3964 = vmatprep.subr.mxu0 0.0
    %3965 = vmatpush1.msra.mxu0 0.0
    %3966 = vmatprep.subr.mxu0 0.0
    %3967 = vmatpush1.msra.mxu0 0.0
    %3968 = vmatprep.subr.mxu0 0.0
    %3969 = vmatpush1.msra.mxu0 0.0
    %3970 = vmatprep.subr.mxu0 0.0
    %3971 = vmatpush1.msra.mxu0 0.0
    %3972 = vmatprep.subr.mxu0 0.0
    %3973 = vmatpush1.msra.mxu0 0.0
    %3974 = vmatprep.subr.mxu0 0.0
    %3975 = vmatpush1.msra.mxu0 0.0
    %3976 = vmatprep.subr.mxu0 0.0
    %3977 = vmatpush1.msra.mxu0 0.0
    %3978 = vmatprep.subr.mxu0 0.0
    %3979 = vmatpush1.msra.mxu0 0.0
    %3980 = vmatprep.subr.mxu0 0.0
    %3981 = vmatpush1.msra.mxu0 0.0
    %3982 = vmatprep.subr.mxu0 0.0
    %3983 = vmatpush1.msra.mxu0 0.0
    %3984 = vmatprep.subr.mxu0 0.0
    %3985 = vmatpush1.msra.mxu0 0.0
    %3986 = vmatprep.subr.mxu0 0.0
    %3987 = vmatpush1.msra.mxu0 0.0
    %3988 = vmatprep.subr.mxu0 0.0
    %3989 = vmatpush1.msra.mxu0 0.0
    %3990 = vmatprep.subr.mxu0 0.0
    %3991 = vmatpush1.msra.mxu0 0.0
    %3992 = vmatprep.subr.mxu0 0.0
    %3993 = vmatpush1.msra.mxu0 0.0
    %3994 = vmatprep.subr.mxu0 0.0
    %3995 = vmatpush1.msra.mxu0 0.0
    %3996 = vmatprep.subr.mxu0 0.0
    %3997 = vmatpush1.msra.mxu0 0.0
    %3998 = vmatprep.subr.mxu0 0.0
    %3999 = vmatpush1.msra.mxu0 0.0
    %4000 = vmatprep.subr.mxu0 0.0
    %4001 = vmatpush1.msra.mxu0 0.0
    %4002 = vmatprep.subr.mxu0 0.0
    %4003 = vmatpush1.msra.mxu0 0.0
    %4004 = vmatprep.subr.mxu0 0.0
    %4005 = vmatpush1.msra.mxu0 0.0
    %4006 = vmatprep.subr.mxu0 0.0
    %4007 = vmatpush1.msra.mxu0 0.0
    %4008 = vmatprep.subr.mxu0 0.0
    %4009 = vmatpush1.msra.mxu0 0.0
    %4010 = vmatprep.mubr.f32.mxu0 0.0
    %4011 = vmatmul.mubr.f32.gmra.mrb[0].mxu0 %v3944
    %v4012 = vpop.f32.mrb[0].mxu0
    %v4013 = vadd.f32 %v3939, %v4012
    %v4014 = vpop.f32.mrb[0].mxu0
    %4015 = vdwg.mxu0
    %vm4016 = vcmask 189440
    %4017 = vst.msk [vmem:[#allocation2] sm:$0x3] %vm4016, %v4013
    // Predicated region
    $region10: #{net_forward.1} parent=1 // pred_check
      _
    $region11: #{net_forward.1} parent=1 // pred_check_branch
      %4019 = sbr.rel (0) target = $region13
    $region12: #{net_forward.1} parent=1 // pred_region
      %s4021 = ssub.s32 32, 32
      %4022 = vsyncadd [#allocation3], %s4021
      %s4024 = sshll.u32 [#allocation2], 4
      %s4025 = int_to_ptr.vmem [resolvable:$true] %s4024
      %4027 = dma.vmem_to_hbm [thread:$0]  %s4025, 32, %s2, [#allocation3]
    $region13: #{net_forward.1} parent=1 // pred_fallthru
      _
    // Predicated region
    $region14: #{net_forward.1} parent=1 // pred_check
      _
    $region15: #{net_forward.1} parent=1 // pred_check_branch
      %4029 = sbr.rel (0) target = $region17
    $region16: #{net_forward.1} parent=1 // pred_region
      %4030 = dma.done [#allocation3], 32
    $region17: #{net_forward.1} parent=1 // pred_fallthru
      _
    %4031 = vsyncpa [#allocation3], 1

</llo_original>
